<compile_context>
chip_gen: v7x
topology: tpu7x:2x2x1
jax: 0.10.0
libtpu: 0.0.40
codegen_flags: <defaults>
</compile_context>

<pallas_src>
import functools

import jax
import jax.numpy as jnp
from jax.experimental import pallas as pl
from jax.experimental.pallas import tpu as pltpu


def _round_up(n, m):
    return ((n + m - 1) // m) * m


def _pad_gates(w, rows_to, H, H_pad):
    """(rows, 4H) -> (rows_to, 4*H_pad): zero-pad rows and each gate block's
    columns separately so the [i|f|g|o] packing is preserved per 128-lane tile."""
    rows = w.shape[0]
    w4 = w.reshape(rows, 4, H)
    w4 = jnp.pad(w4, ((0, rows_to - rows), (0, 0), (0, H_pad - H)))
    return w4.reshape(rows_to, 4 * H_pad)


def _vmem_limit_bytes(T, B_pad, D_pad, H_pad, C_pad):
    bf, f4 = 2, 4
    # streamed per-layer weights: double-buffered by the BlockSpec pipeline
    streamed = 2 * ((D_pad + H_pad) * 4 * H_pad * bf + 4 * H_pad * f4)
    resident = (T * B_pad * D_pad * bf            # x (layer-0 input, resident)
                + H_pad * C_pad * bf + C_pad * f4  # fc head
                + T * B_pad * H_pad * bf           # hidden-sequence scratch
                + T * B_pad * 4 * H_pad * bf)      # gx scratch
    out = 2 * B_pad * C_pad * f4                   # double-buffered output block
    total = streamed + resident + out
    # 2x headroom for compiler temporaries; clamp to [4 MiB, 64 MiB] (v7x phys).
    return int(min(max(2 * total, 4 << 20), 64 << 20))


def _make_fused_lstm_kernel(T, B_pad, H_pad):
    """One grid step == one LSTM layer.  Ref layout:
       (x, w_ih, w_hh, b, fc_w, fc_b, out, seq_scratch, gx_scratch)."""

    def kernel(x_ref, w_ih_ref, w_hh_ref, b_ref, fc_w_ref, fc_b_ref,
               out_ref, seq_ref, gx_ref):
        layer = pl.program_id(0)

        w_ih = w_ih_ref[0]        # (D_pad, 4*H_pad) bf16  (streamed per layer)
        w_hh = w_hh_ref[0]        # (H_pad, 4*H_pad) bf16  (streamed per layer)
        b = b_ref[0]              # (1, 4*H_pad)     f32   (= b_ih + b_hh)

        # Hoisted input projection for the whole sequence: ONE big MXU matmul
        # per layer; staged as bf16 in VMEM (halves the largest transient),
        # f32 bias added at use time inside the recurrence.
        @pl.when(layer == 0)
        def _():
            gx_ref[...] = jnp.dot(
                x_ref[...], w_ih,
                preferred_element_type=jnp.float32).astype(jnp.bfloat16)

        @pl.when(layer > 0)
        def _():
            # Previous layer's hidden sequence (already on-chip); padded w_ih
            # rows beyond H_pad are zero, so only the first H_pad rows matter.
            gx_ref[...] = jnp.dot(
                seq_ref[...], w_ih[:H_pad, :],
                preferred_element_type=jnp.float32).astype(jnp.bfloat16)

        def step(t, carry):
            h, c = carry                                   # f32 (B_pad, H_pad)
            row = pl.multiple_of(t * B_pad, B_pad)
            g = (gx_ref[pl.ds(row, B_pad), :].astype(jnp.float32) + b
                 + jnp.dot(h.astype(jnp.bfloat16), w_hh,
                           preferred_element_type=jnp.float32))
            # H_pad is a multiple of 128 -> whole-vreg lane slices per gate.
            i_g = jax.nn.sigmoid(g[:, 0 * H_pad:1 * H_pad])
            f_g = jax.nn.sigmoid(g[:, 1 * H_pad:2 * H_pad])
            g_g = jnp.tanh(g[:, 2 * H_pad:3 * H_pad])
            o_g = jax.nn.sigmoid(g[:, 3 * H_pad:4 * H_pad])
            c = f_g * c + i_g * g_g
            h = o_g * jnp.tanh(c)
            # Stage next layer's input in VMEM (bounded live range, no concat).
            seq_ref[pl.ds(row, B_pad), :] = h.astype(jnp.bfloat16)
            return h, c

        h, _ = jax.lax.fori_loop(
            0, T, step,
            (jnp.zeros((B_pad, H_pad), jnp.float32),
             jnp.zeros((B_pad, H_pad), jnp.float32)),
            unroll=True)

        # Fused FC head on this layer's final hidden state; lane-dense store.
        out_ref[...] = (jnp.dot(h.astype(jnp.bfloat16), fc_w_ref[...],
                                preferred_element_type=jnp.float32)
                        + fc_b_ref[...])

    return kernel


@functools.partial(jax.jit, static_argnames=("num_layers",))
def lstm_model_forward(x, params, *, num_layers):
    """x: (B, T, input_size) batch_first, like the PyTorch module.

    Returns (num_layers * B, num_classes): fc applied to the final hidden
    state of every layer (h_out.view(-1, hidden_size) in the reference).
    """
    B, T, D = x.shape
    H = params["layers"][0]["w_hh"].shape[0]
    C = params["fc_w"].shape[1]
    L = num_layers

    H_pad = _round_up(H, 128)                     # lane-aligned gate blocks
    D_pad = max(_round_up(D, 128), H_pad)         # one w_ih row count for all layers
    B_pad = _round_up(B, 16)                      # bf16 sublane quantum
    C_pad = _round_up(C, 128)                     # lane-dense FC output

    # --- stack + pad per-layer weights so the layer axis can be a grid axis ---
    w_ih_all = jnp.stack([
        _pad_gates(params["layers"][l]["w_ih"], D_pad, H, H_pad) for l in range(L)
    ]).astype(jnp.bfloat16)                       # (L, D_pad, 4*H_pad)
    w_hh_all = jnp.stack([
        _pad_gates(params["layers"][l]["w_hh"], H_pad, H, H_pad) for l in range(L)
    ]).astype(jnp.bfloat16)                       # (L, H_pad, 4*H_pad)
    b_all = jnp.stack([
        _pad_gates(params["layers"][l]["b"], 1, H, H_pad) for l in range(L)
    ]).astype(jnp.float32)                        # (L, 1, 4*H_pad)
    fc_w = jnp.pad(params["fc_w"],
                   ((0, H_pad - H), (0, C_pad - C))).astype(jnp.bfloat16)
    fc_b = jnp.pad(params["fc_b"],
                   ((0, 0), (0, C_pad - C))).astype(jnp.float32)

    # Time-major, batch/feature zero-padded: (T*B_pad, D_pad) bf16.
    xt = jnp.pad(jnp.transpose(x, (1, 0, 2)),
                 ((0, 0), (0, B_pad - B), (0, D_pad - D)))
    x2d = xt.reshape(T * B_pad, D_pad).astype(jnp.bfloat16)

    grid_spec = pltpu.PrefetchScalarGridSpec(
        num_scalar_prefetch=0,
        grid=(L,),
        in_specs=[
            pl.BlockSpec((T * B_pad, D_pad), lambda l: (0, 0)),        # x: resident
            pl.BlockSpec((1, D_pad, 4 * H_pad), lambda l: (l, 0, 0)),  # w_ih / layer
            pl.BlockSpec((1, H_pad, 4 * H_pad), lambda l: (l, 0, 0)),  # w_hh / layer
            pl.BlockSpec((1, 1, 4 * H_pad), lambda l: (l, 0, 0)),      # bias / layer
            pl.BlockSpec((H_pad, C_pad), lambda l: (0, 0)),            # fc_w: resident
            pl.BlockSpec((1, C_pad), lambda l: (0, 0)),                # fc_b: resident
        ],
        out_specs=pl.BlockSpec((B_pad, C_pad), lambda l: (l, 0)),
        scratch_shapes=[
            pltpu.VMEM((T * B_pad, H_pad), jnp.bfloat16),      # layer->layer hidden seq
            pltpu.VMEM((T * B_pad, 4 * H_pad), jnp.bfloat16),  # hoisted input projection
        ],
    )

    out_pad = pl.pallas_call(
        _make_fused_lstm_kernel(T, B_pad, H_pad),
        out_shape=jax.ShapeDtypeStruct((L * B_pad, C_pad), jnp.float32),
        grid_spec=grid_spec,
        compiler_params=pltpu.CompilerParams(
            dimension_semantics=("arbitrary",),   # layers are sequential
            vmem_limit_bytes=_vmem_limit_bytes(T, B_pad, D_pad, H_pad, C_pad),
        ),
    )(x2d, w_ih_all, w_hh_all, b_all, fc_w, fc_b)

    # Strip padding: (L, B_pad, C_pad) -> (L*B, C), layer-major like h_out.view(-1, H).
    return out_pad.reshape(L, B_pad, C_pad)[:, :B, :C].reshape(L * B, C)


# ----------------------------------------------------------------------------
# Parameter init (PyTorch-style uniform init; weights stored bf16 for the MXU,
# biases folded (b_ih + b_hh) and kept in f32).
# ----------------------------------------------------------------------------
def init_params(key, num_classes, input_size, hidden_size, num_layers):
    params = {"layers": []}
    scale = 1.0 / jnp.sqrt(hidden_size)
    for layer in range(num_layers):
        d_in = input_size if layer == 0 else hidden_size
        key, k1, k2, k3, k4 = jax.random.split(key, 5)
        w_ih = jax.random.uniform(k1, (d_in, 4 * hidden_size),
                                  minval=-scale, maxval=scale, dtype=jnp.float32)
        w_hh = jax.random.uniform(k2, (hidden_size, 4 * hidden_size),
                                  minval=-scale, maxval=scale, dtype=jnp.float32)
        b_ih = jax.random.uniform(k3, (4 * hidden_size,),
                                  minval=-scale, maxval=scale, dtype=jnp.float32)
        b_hh = jax.random.uniform(k4, (4 * hidden_size,),
                                  minval=-scale, maxval=scale, dtype=jnp.float32)
        params["layers"].append({
            "w_ih": w_ih.astype(jnp.bfloat16),
            "w_hh": w_hh.astype(jnp.bfloat16),
            "b": (b_ih + b_hh)[None, :],          # f32
        })
    key, k5, k6 = jax.random.split(key, 3)
    params["fc_w"] = jax.random.uniform(
        k5, (hidden_size, num_classes),
        minval=-scale, maxval=scale, dtype=jnp.float32).astype(jnp.bfloat16)
    params["fc_b"] = jax.random.uniform(
        k6, (1, num_classes), minval=-scale, maxval=scale, dtype=jnp.float32)
    return params


# ----------------------------------------------------------------------------
# Pure-jnp f32 reference (same stored weights) for correctness checking.
# ----------------------------------------------------------------------------
def _reference_forward(x, params, num_layers):
    B, T, _ = x.shape
    H = params["layers"][0]["w_hh"].shape[0]
    layer_in = x.astype(jnp.float32)
    h_finals = []
    for l in range(num_layers):
        p = params["layers"][l]
        w_ih = p["w_ih"].astype(jnp.float32)
        w_hh = p["w_hh"].astype(jnp.float32)
        b = p["b"].astype(jnp.float32)
        h = jnp.zeros((B, H), jnp.float32)
        c = jnp.zeros((B, H), jnp.float32)
        outs = []
        for t in range(T):
            g = layer_in[:, t, :] @ w_ih + h @ w_hh + b
            i_g = jax.nn.sigmoid(g[:, 0 * H:1 * H])
            f_g = jax.nn.sigmoid(g[:, 1 * H:2 * H])
            g_g = jnp.tanh(g[:, 2 * H:3 * H])
            o_g = jax.nn.sigmoid(g[:, 3 * H:4 * H])
            c = f_g * c + i_g * g_g
            h = o_g * jnp.tanh(c)
            outs.append(h)
        h_finals.append(h)
        layer_in = jnp.stack(outs, axis=1)
    h_out = jnp.concatenate(h_finals, axis=0)
    return h_out @ params["fc_w"].astype(jnp.float32) + params["fc_b"]


if __name__ == "__main__":
    num_classes = 5
    input_size = 4
    hidden_size = 32
    num_layers = 2
    seq_length = 8
    batch = 2

    key = jax.random.PRNGKey(0)
    key, kx, kp = jax.random.split(key, 3)

    x = jax.random.normal(kx, (batch, seq_length, input_size), dtype=jnp.float32)
    params = init_params(kp, num_classes, input_size, hidden_size, num_layers)

    out = lstm_model_forward(x, params, num_layers=num_layers)
    jax.block_until_ready(out)

    assert out.shape == (num_layers * batch, num_classes), out.shape
    assert jnp.all(jnp.isfinite(out))

    # Numerical check vs f32 reference (bf16 matmul operands / staging -> loose tol).
    ref = _reference_forward(x, params, num_layers)
    assert jnp.allclose(out, ref, atol=5e-2, rtol=5e-2), (out, ref)

    print("KERNEL_OK")
</pallas_src>

<mosaic_0001>
module attributes {stable_mosaic.version = 11 : i64} {
  func.func @kernel(%arg0: i32, %arg1: memref<128x128xbf16, #tpu.memory_space<vmem>>, %arg2: memref<1x128x512xbf16, #tpu.memory_space<vmem>>, %arg3: memref<1x128x512xbf16, #tpu.memory_space<vmem>>, %arg4: memref<1x1x512xf32, #tpu.memory_space<vmem>>, %arg5: memref<128x128xbf16, #tpu.memory_space<vmem>>, %arg6: memref<1x128xf32, #tpu.memory_space<vmem>>, %arg7: memref<16x128xf32, #tpu.memory_space<vmem>>, %arg8: memref<128x128xbf16, #tpu.memory_space<vmem>>, %arg9: memref<128x512xbf16, #tpu.memory_space<vmem>>) attributes {dimension_semantics = [#tpu.dimension_semantics<arbitrary>], iteration_bounds = array<i64: 2>, scalar_prefetch = 0 : i64, scratch_operands = 2 : i64, tpu.core_type = #tpu.core_type<tc>, window_params = [{pipeline_mode = #tpu.pipeline_mode<synchronous>, transform_indices = @transform_0, window_bounds = array<i64: 128, 128>}, {transform_indices = @transform_1, window_bounds = array<i64: 1, 128, 512>}, {transform_indices = @transform_2, window_bounds = array<i64: 1, 128, 512>}, {transform_indices = @transform_3, window_bounds = array<i64: 1, 1, 512>}, {pipeline_mode = #tpu.pipeline_mode<synchronous>, transform_indices = @transform_4, window_bounds = array<i64: 128, 128>}, {pipeline_mode = #tpu.pipeline_mode<synchronous>, transform_indices = @transform_5, window_bounds = array<i64: 1, 128>}, {transform_indices = @transform_6, window_bounds = array<i64: 16, 128>}]} {
    %c0 = arith.constant 0 : index
    %c0_0 = arith.constant 0 : index
    %c0_1 = arith.constant 0 : index
    %0 = vector.load %arg2[%c0, %c0_0, %c0_1] : memref<1x128x512xbf16, #tpu.memory_space<vmem>>, vector<1x128x512xbf16>
    %1 = vector.shape_cast %0 : vector<1x128x512xbf16> to vector<128x512xbf16>
    %c0_2 = arith.constant 0 : index
    %c0_3 = arith.constant 0 : index
    %c0_4 = arith.constant 0 : index
    %2 = vector.load %arg3[%c0_2, %c0_3, %c0_4] : memref<1x128x512xbf16, #tpu.memory_space<vmem>>, vector<1x128x512xbf16>
    %3 = vector.shape_cast %2 : vector<1x128x512xbf16> to vector<128x512xbf16>
    %c0_5 = arith.constant 0 : index
    %c0_6 = arith.constant 0 : index
    %c0_7 = arith.constant 0 : index
    %4 = vector.load %arg4[%c0_5, %c0_6, %c0_7] : memref<1x1x512xf32, #tpu.memory_space<vmem>>, vector<1x1x512xf32>
    %5 = vector.shape_cast %4 : vector<1x1x512xf32> to vector<1x512xf32>
    %c0_i32 = arith.constant 0 : i32
    %6 = arith.cmpi eq, %arg0, %c0_i32 : i32
    %7 = arith.extui %6 : i1 to i32
    %c0_i32_8 = arith.constant 0 : i32
    %8 = arith.cmpi ne, %7, %c0_i32_8 : i32
    scf.if %8 {
      %c0_75 = arith.constant 0 : index
      %c0_76 = arith.constant 0 : index
      %325 = vector.load %arg1[%c0_75, %c0_76] : memref<128x128xbf16, #tpu.memory_space<vmem>>, vector<128x128xbf16>
      %cst_77 = arith.constant dense<0.000000e+00> : vector<128x512xf32>
      %326 = tpu.matmul %325, %1, %cst_77 {dimension_numbers = #tpu.dot_dimension_numbers<[1], [0], [0], [1], [0, 0, 1, 1], [], []>} : vector<128x128xbf16>, vector<128x512xbf16>, vector<128x512xf32> -> vector<128x512xf32>
      %327 = arith.truncf %326 : vector<128x512xf32> to vector<128x512xbf16>
      %c0_78 = arith.constant 0 : index
      %c0_79 = arith.constant 0 : index
      %328 = vector.load %arg9[%c0_78, %c0_79] : memref<128x512xbf16, #tpu.memory_space<vmem>>, vector<128x512xbf16>
      tpu.vector_store %arg9[%c0_78, %c0_79], %327 {strides = array<i32>} : memref<128x512xbf16, #tpu.memory_space<vmem>>, vector<128x512xbf16>,
    } else {
    }
    %c0_i32_9 = arith.constant 0 : i32
    %9 = arith.cmpi sgt, %arg0, %c0_i32_9 : i32
    %10 = arith.extui %9 : i1 to i32
    %c0_i32_10 = arith.constant 0 : i32
    %11 = arith.cmpi ne, %10, %c0_i32_10 : i32
    scf.if %11 {
      %c0_75 = arith.constant 0 : index
      %c0_76 = arith.constant 0 : index
      %325 = vector.load %arg8[%c0_75, %c0_76] : memref<128x128xbf16, #tpu.memory_space<vmem>>, vector<128x128xbf16>
      %cst_77 = arith.constant dense<0.000000e+00> : vector<128x512xf32>
      %326 = tpu.matmul %325, %1, %cst_77 {dimension_numbers = #tpu.dot_dimension_numbers<[1], [0], [0], [1], [0, 0, 1, 1], [], []>} : vector<128x128xbf16>, vector<128x512xbf16>, vector<128x512xf32> -> vector<128x512xf32>
      %327 = arith.truncf %326 : vector<128x512xf32> to vector<128x512xbf16>
      %c0_78 = arith.constant 0 : index
      %c0_79 = arith.constant 0 : index
      %328 = vector.load %arg9[%c0_78, %c0_79] : memref<128x512xbf16, #tpu.memory_space<vmem>>, vector<128x512xbf16>
      tpu.vector_store %arg9[%c0_78, %c0_79], %327 {strides = array<i32>} : memref<128x512xbf16, #tpu.memory_space<vmem>>, vector<128x512xbf16>,
    } else {
    }
    %cst = arith.constant 0.000000e+00 : f32
    %12 = vector.broadcast %cst : f32 to vector<16x128xf32>
    %cst_11 = arith.constant 0.000000e+00 : f32
    %13 = vector.broadcast %cst_11 : f32 to vector<16x128xf32>
    %c0_i32_12 = arith.constant 0 : i32
    %c16_i32 = arith.constant 16 : i32
    %14 = arith.muli %c0_i32_12, %c16_i32 : i32
    %15 = tpu.assume_multiple %14, 16 : i32
    %16 = arith.index_cast %15 : i32 to index
    %c0_13 = arith.constant 0 : index
    %17 = vector.load %arg9[%16, %c0_13] : memref<128x512xbf16, #tpu.memory_space<vmem>>, vector<16x512xbf16>
    %18 = arith.extf %17 : vector<16x512xbf16> to vector<16x512xf32>
    %19 = vector.broadcast %5 : vector<1x512xf32> to vector<16x512xf32>
    %20 = arith.addf %18, %19 : vector<16x512xf32>
    %21 = arith.truncf %12 : vector<16x128xf32> to vector<16x128xbf16>
    %cst_14 = arith.constant dense<0.000000e+00> : vector<16x512xf32>
    %22 = tpu.matmul %21, %3, %cst_14 {dimension_numbers = #tpu.dot_dimension_numbers<[1], [0], [0], [1], [0, 0, 1, 1], [], []>} : vector<16x128xbf16>, vector<128x512xbf16>, vector<16x512xf32> -> vector<16x512xf32>
    %23 = arith.addf %20, %22 : vector<16x512xf32>
    %24 = vector.extract_strided_slice %23 {offsets = [0, 0], sizes = [16, 128], strides = [1, 1]} : vector<16x512xf32> to vector<16x128xf32>
    %25 = arith.negf %24 : vector<16x128xf32>
    %26 = math.exp %25 : vector<16x128xf32>
    %cst_15 = arith.constant 1.000000e+00 : f32
    %27 = vector.broadcast %cst_15 : f32 to vector<16x128xf32>
    %28 = arith.addf %27, %26 : vector<16x128xf32>
    %29 = arith.divf %27, %28 : vector<16x128xf32>
    %30 = vector.extract_strided_slice %23 {offsets = [0, 128], sizes = [16, 128], strides = [1, 1]} : vector<16x512xf32> to vector<16x128xf32>
    %31 = arith.negf %30 : vector<16x128xf32>
    %32 = math.exp %31 : vector<16x128xf32>
    %cst_16 = arith.constant 1.000000e+00 : f32
    %33 = vector.broadcast %cst_16 : f32 to vector<16x128xf32>
    %34 = arith.addf %33, %32 : vector<16x128xf32>
    %35 = arith.divf %33, %34 : vector<16x128xf32>
    %36 = vector.extract_strided_slice %23 {offsets = [0, 256], sizes = [16, 128], strides = [1, 1]} : vector<16x512xf32> to vector<16x128xf32>
    %37 = math.tanh %36 : vector<16x128xf32>
    %38 = vector.extract_strided_slice %23 {offsets = [0, 384], sizes = [16, 128], strides = [1, 1]} : vector<16x512xf32> to vector<16x128xf32>
    %39 = arith.negf %38 : vector<16x128xf32>
    %40 = math.exp %39 : vector<16x128xf32>
    %cst_17 = arith.constant 1.000000e+00 : f32
    %41 = vector.broadcast %cst_17 : f32 to vector<16x128xf32>
    %42 = arith.addf %41, %40 : vector<16x128xf32>
    %43 = arith.divf %41, %42 : vector<16x128xf32>
    %44 = arith.mulf %35, %13 : vector<16x128xf32>
    %45 = arith.mulf %29, %37 : vector<16x128xf32>
    %46 = arith.addf %44, %45 : vector<16x128xf32>
    %47 = math.tanh %46 : vector<16x128xf32>
    %48 = arith.mulf %43, %47 : vector<16x128xf32>
    %49 = arith.truncf %48 : vector<16x128xf32> to vector<16x128xbf16>
    %50 = arith.index_cast %15 : i32 to index
    %c0_18 = arith.constant 0 : index
    %51 = vector.load %arg8[%50, %c0_18] : memref<128x128xbf16, #tpu.memory_space<vmem>>, vector<16x128xbf16>
    tpu.vector_store %arg8[%50, %c0_18], %49 {strides = array<i32>} : memref<128x128xbf16, #tpu.memory_space<vmem>>, vector<16x128xbf16>,
    %c1_i32 = arith.constant 1 : i32
    %c16_i32_19 = arith.constant 16 : i32
    %52 = arith.muli %c1_i32, %c16_i32_19 : i32
    %53 = tpu.assume_multiple %52, 16 : i32
    %54 = arith.index_cast %53 : i32 to index
    %c0_20 = arith.constant 0 : index
    %55 = vector.load %arg9[%54, %c0_20] : memref<128x512xbf16, #tpu.memory_space<vmem>>, vector<16x512xbf16>
    %56 = arith.extf %55 : vector<16x512xbf16> to vector<16x512xf32>
    %57 = vector.broadcast %5 : vector<1x512xf32> to vector<16x512xf32>
    %58 = arith.addf %56, %57 : vector<16x512xf32>
    %59 = arith.truncf %48 : vector<16x128xf32> to vector<16x128xbf16>
    %cst_21 = arith.constant dense<0.000000e+00> : vector<16x512xf32>
    %60 = tpu.matmul %59, %3, %cst_21 {dimension_numbers = #tpu.dot_dimension_numbers<[1], [0], [0], [1], [0, 0, 1, 1], [], []>} : vector<16x128xbf16>, vector<128x512xbf16>, vector<16x512xf32> -> vector<16x512xf32>
    %61 = arith.addf %58, %60 : vector<16x512xf32>
    %62 = vector.extract_strided_slice %61 {offsets = [0, 0], sizes = [16, 128], strides = [1, 1]} : vector<16x512xf32> to vector<16x128xf32>
    %63 = arith.negf %62 : vector<16x128xf32>
    %64 = math.exp %63 : vector<16x128xf32>
    %cst_22 = arith.constant 1.000000e+00 : f32
    %65 = vector.broadcast %cst_22 : f32 to vector<16x128xf32>
    %66 = arith.addf %65, %64 : vector<16x128xf32>
    %67 = arith.divf %65, %66 : vector<16x128xf32>
    %68 = vector.extract_strided_slice %61 {offsets = [0, 128], sizes = [16, 128], strides = [1, 1]} : vector<16x512xf32> to vector<16x128xf32>
    %69 = arith.negf %68 : vector<16x128xf32>
    %70 = math.exp %69 : vector<16x128xf32>
    %cst_23 = arith.constant 1.000000e+00 : f32
    %71 = vector.broadcast %cst_23 : f32 to vector<16x128xf32>
    %72 = arith.addf %71, %70 : vector<16x128xf32>
    %73 = arith.divf %71, %72 : vector<16x128xf32>
    %74 = vector.extract_strided_slice %61 {offsets = [0, 256], sizes = [16, 128], strides = [1, 1]} : vector<16x512xf32> to vector<16x128xf32>
    %75 = math.tanh %74 : vector<16x128xf32>
    %76 = vector.extract_strided_slice %61 {offsets = [0, 384], sizes = [16, 128], strides = [1, 1]} : vector<16x512xf32> to vector<16x128xf32>
    %77 = arith.negf %76 : vector<16x128xf32>
    %78 = math.exp %77 : vector<16x128xf32>
    %cst_24 = arith.constant 1.000000e+00 : f32
    %79 = vector.broadcast %cst_24 : f32 to vector<16x128xf32>
    %80 = arith.addf %79, %78 : vector<16x128xf32>
    %81 = arith.divf %79, %80 : vector<16x128xf32>
    %82 = arith.mulf %73, %46 : vector<16x128xf32>
    %83 = arith.mulf %67, %75 : vector<16x128xf32>
    %84 = arith.addf %82, %83 : vector<16x128xf32>
    %85 = math.tanh %84 : vector<16x128xf32>
    %86 = arith.mulf %81, %85 : vector<16x128xf32>
    %87 = arith.truncf %86 : vector<16x128xf32> to vector<16x128xbf16>
    %88 = arith.index_cast %53 : i32 to index
    %c0_25 = arith.constant 0 : index
    %89 = vector.load %arg8[%88, %c0_25] : memref<128x128xbf16, #tpu.memory_space<vmem>>, vector<16x128xbf16>
    tpu.vector_store %arg8[%88, %c0_25], %87 {strides = array<i32>} : memref<128x128xbf16, #tpu.memory_space<vmem>>, vector<16x128xbf16>,
    %c2_i32 = arith.constant 2 : i32
    %c16_i32_26 = arith.constant 16 : i32
    %90 = arith.muli %c2_i32, %c16_i32_26 : i32
    %91 = tpu.assume_multiple %90, 16 : i32
    %92 = arith.index_cast %91 : i32 to index
    %c0_27 = arith.constant 0 : index
    %93 = vector.load %arg9[%92, %c0_27] : memref<128x512xbf16, #tpu.memory_space<vmem>>, vector<16x512xbf16>
    %94 = arith.extf %93 : vector<16x512xbf16> to vector<16x512xf32>
    %95 = vector.broadcast %5 : vector<1x512xf32> to vector<16x512xf32>
    %96 = arith.addf %94, %95 : vector<16x512xf32>
    %97 = arith.truncf %86 : vector<16x128xf32> to vector<16x128xbf16>
    %cst_28 = arith.constant dense<0.000000e+00> : vector<16x512xf32>
    %98 = tpu.matmul %97, %3, %cst_28 {dimension_numbers = #tpu.dot_dimension_numbers<[1], [0], [0], [1], [0, 0, 1, 1], [], []>} : vector<16x128xbf16>, vector<128x512xbf16>, vector<16x512xf32> -> vector<16x512xf32>
    %99 = arith.addf %96, %98 : vector<16x512xf32>
    %100 = vector.extract_strided_slice %99 {offsets = [0, 0], sizes = [16, 128], strides = [1, 1]} : vector<16x512xf32> to vector<16x128xf32>
    %101 = arith.negf %100 : vector<16x128xf32>
    %102 = math.exp %101 : vector<16x128xf32>
    %cst_29 = arith.constant 1.000000e+00 : f32
    %103 = vector.broadcast %cst_29 : f32 to vector<16x128xf32>
    %104 = arith.addf %103, %102 : vector<16x128xf32>
    %105 = arith.divf %103, %104 : vector<16x128xf32>
    %106 = vector.extract_strided_slice %99 {offsets = [0, 128], sizes = [16, 128], strides = [1, 1]} : vector<16x512xf32> to vector<16x128xf32>
    %107 = arith.negf %106 : vector<16x128xf32>
    %108 = math.exp %107 : vector<16x128xf32>
    %cst_30 = arith.constant 1.000000e+00 : f32
    %109 = vector.broadcast %cst_30 : f32 to vector<16x128xf32>
    %110 = arith.addf %109, %108 : vector<16x128xf32>
    %111 = arith.divf %109, %110 : vector<16x128xf32>
    %112 = vector.extract_strided_slice %99 {offsets = [0, 256], sizes = [16, 128], strides = [1, 1]} : vector<16x512xf32> to vector<16x128xf32>
    %113 = math.tanh %112 : vector<16x128xf32>
    %114 = vector.extract_strided_slice %99 {offsets = [0, 384], sizes = [16, 128], strides = [1, 1]} : vector<16x512xf32> to vector<16x128xf32>
    %115 = arith.negf %114 : vector<16x128xf32>
    %116 = math.exp %115 : vector<16x128xf32>
    %cst_31 = arith.constant 1.000000e+00 : f32
    %117 = vector.broadcast %cst_31 : f32 to vector<16x128xf32>
    %118 = arith.addf %117, %116 : vector<16x128xf32>
    %119 = arith.divf %117, %118 : vector<16x128xf32>
    %120 = arith.mulf %111, %84 : vector<16x128xf32>
    %121 = arith.mulf %105, %113 : vector<16x128xf32>
    %122 = arith.addf %120, %121 : vector<16x128xf32>
    %123 = math.tanh %122 : vector<16x128xf32>
    %124 = arith.mulf %119, %123 : vector<16x128xf32>
    %125 = arith.truncf %124 : vector<16x128xf32> to vector<16x128xbf16>
    %126 = arith.index_cast %91 : i32 to index
    %c0_32 = arith.constant 0 : index
    %127 = vector.load %arg8[%126, %c0_32] : memref<128x128xbf16, #tpu.memory_space<vmem>>, vector<16x128xbf16>
    tpu.vector_store %arg8[%126, %c0_32], %125 {strides = array<i32>} : memref<128x128xbf16, #tpu.memory_space<vmem>>, vector<16x128xbf16>,
    %c3_i32 = arith.constant 3 : i32
    %c16_i32_33 = arith.constant 16 : i32
    %128 = arith.muli %c3_i32, %c16_i32_33 : i32
    %129 = tpu.assume_multiple %128, 16 : i32
    %130 = arith.index_cast %129 : i32 to index
    %c0_34 = arith.constant 0 : index
    %131 = vector.load %arg9[%130, %c0_34] : memref<128x512xbf16, #tpu.memory_space<vmem>>, vector<16x512xbf16>
    %132 = arith.extf %131 : vector<16x512xbf16> to vector<16x512xf32>
    %133 = vector.broadcast %5 : vector<1x512xf32> to vector<16x512xf32>
    %134 = arith.addf %132, %133 : vector<16x512xf32>
    %135 = arith.truncf %124 : vector<16x128xf32> to vector<16x128xbf16>
    %cst_35 = arith.constant dense<0.000000e+00> : vector<16x512xf32>
    %136 = tpu.matmul %135, %3, %cst_35 {dimension_numbers = #tpu.dot_dimension_numbers<[1], [0], [0], [1], [0, 0, 1, 1], [], []>} : vector<16x128xbf16>, vector<128x512xbf16>, vector<16x512xf32> -> vector<16x512xf32>
    %137 = arith.addf %134, %136 : vector<16x512xf32>
    %138 = vector.extract_strided_slice %137 {offsets = [0, 0], sizes = [16, 128], strides = [1, 1]} : vector<16x512xf32> to vector<16x128xf32>
    %139 = arith.negf %138 : vector<16x128xf32>
    %140 = math.exp %139 : vector<16x128xf32>
    %cst_36 = arith.constant 1.000000e+00 : f32
    %141 = vector.broadcast %cst_36 : f32 to vector<16x128xf32>
    %142 = arith.addf %141, %140 : vector<16x128xf32>
    %143 = arith.divf %141, %142 : vector<16x128xf32>
    %144 = vector.extract_strided_slice %137 {offsets = [0, 128], sizes = [16, 128], strides = [1, 1]} : vector<16x512xf32> to vector<16x128xf32>
    %145 = arith.negf %144 : vector<16x128xf32>
    %146 = math.exp %145 : vector<16x128xf32>
    %cst_37 = arith.constant 1.000000e+00 : f32
    %147 = vector.broadcast %cst_37 : f32 to vector<16x128xf32>
    %148 = arith.addf %147, %146 : vector<16x128xf32>
    %149 = arith.divf %147, %148 : vector<16x128xf32>
    %150 = vector.extract_strided_slice %137 {offsets = [0, 256], sizes = [16, 128], strides = [1, 1]} : vector<16x512xf32> to vector<16x128xf32>
    %151 = math.tanh %150 : vector<16x128xf32>
    %152 = vector.extract_strided_slice %137 {offsets = [0, 384], sizes = [16, 128], strides = [1, 1]} : vector<16x512xf32> to vector<16x128xf32>
    %153 = arith.negf %152 : vector<16x128xf32>
    %154 = math.exp %153 : vector<16x128xf32>
    %cst_38 = arith.constant 1.000000e+00 : f32
    %155 = vector.broadcast %cst_38 : f32 to vector<16x128xf32>
    %156 = arith.addf %155, %154 : vector<16x128xf32>
    %157 = arith.divf %155, %156 : vector<16x128xf32>
    %158 = arith.mulf %149, %122 : vector<16x128xf32>
    %159 = arith.mulf %143, %151 : vector<16x128xf32>
    %160 = arith.addf %158, %159 : vector<16x128xf32>
    %161 = math.tanh %160 : vector<16x128xf32>
    %162 = arith.mulf %157, %161 : vector<16x128xf32>
    %163 = arith.truncf %162 : vector<16x128xf32> to vector<16x128xbf16>
    %164 = arith.index_cast %129 : i32 to index
    %c0_39 = arith.constant 0 : index
    %165 = vector.load %arg8[%164, %c0_39] : memref<128x128xbf16, #tpu.memory_space<vmem>>, vector<16x128xbf16>
    tpu.vector_store %arg8[%164, %c0_39], %163 {strides = array<i32>} : memref<128x128xbf16, #tpu.memory_space<vmem>>, vector<16x128xbf16>,
    %c4_i32 = arith.constant 4 : i32
    %c16_i32_40 = arith.constant 16 : i32
    %166 = arith.muli %c4_i32, %c16_i32_40 : i32
    %167 = tpu.assume_multiple %166, 16 : i32
    %168 = arith.index_cast %167 : i32 to index
    %c0_41 = arith.constant 0 : index
    %169 = vector.load %arg9[%168, %c0_41] : memref<128x512xbf16, #tpu.memory_space<vmem>>, vector<16x512xbf16>
    %170 = arith.extf %169 : vector<16x512xbf16> to vector<16x512xf32>
    %171 = vector.broadcast %5 : vector<1x512xf32> to vector<16x512xf32>
    %172 = arith.addf %170, %171 : vector<16x512xf32>
    %173 = arith.truncf %162 : vector<16x128xf32> to vector<16x128xbf16>
    %cst_42 = arith.constant dense<0.000000e+00> : vector<16x512xf32>
    %174 = tpu.matmul %173, %3, %cst_42 {dimension_numbers = #tpu.dot_dimension_numbers<[1], [0], [0], [1], [0, 0, 1, 1], [], []>} : vector<16x128xbf16>, vector<128x512xbf16>, vector<16x512xf32> -> vector<16x512xf32>
    %175 = arith.addf %172, %174 : vector<16x512xf32>
    %176 = vector.extract_strided_slice %175 {offsets = [0, 0], sizes = [16, 128], strides = [1, 1]} : vector<16x512xf32> to vector<16x128xf32>
    %177 = arith.negf %176 : vector<16x128xf32>
    %178 = math.exp %177 : vector<16x128xf32>
    %cst_43 = arith.constant 1.000000e+00 : f32
    %179 = vector.broadcast %cst_43 : f32 to vector<16x128xf32>
    %180 = arith.addf %179, %178 : vector<16x128xf32>
    %181 = arith.divf %179, %180 : vector<16x128xf32>
    %182 = vector.extract_strided_slice %175 {offsets = [0, 128], sizes = [16, 128], strides = [1, 1]} : vector<16x512xf32> to vector<16x128xf32>
    %183 = arith.negf %182 : vector<16x128xf32>
    %184 = math.exp %183 : vector<16x128xf32>
    %cst_44 = arith.constant 1.000000e+00 : f32
    %185 = vector.broadcast %cst_44 : f32 to vector<16x128xf32>
    %186 = arith.addf %185, %184 : vector<16x128xf32>
    %187 = arith.divf %185, %186 : vector<16x128xf32>
    %188 = vector.extract_strided_slice %175 {offsets = [0, 256], sizes = [16, 128], strides = [1, 1]} : vector<16x512xf32> to vector<16x128xf32>
    %189 = math.tanh %188 : vector<16x128xf32>
    %190 = vector.extract_strided_slice %175 {offsets = [0, 384], sizes = [16, 128], strides = [1, 1]} : vector<16x512xf32> to vector<16x128xf32>
    %191 = arith.negf %190 : vector<16x128xf32>
    %192 = math.exp %191 : vector<16x128xf32>
    %cst_45 = arith.constant 1.000000e+00 : f32
    %193 = vector.broadcast %cst_45 : f32 to vector<16x128xf32>
    %194 = arith.addf %193, %192 : vector<16x128xf32>
    %195 = arith.divf %193, %194 : vector<16x128xf32>
    %196 = arith.mulf %187, %160 : vector<16x128xf32>
    %197 = arith.mulf %181, %189 : vector<16x128xf32>
    %198 = arith.addf %196, %197 : vector<16x128xf32>
    %199 = math.tanh %198 : vector<16x128xf32>
    %200 = arith.mulf %195, %199 : vector<16x128xf32>
    %201 = arith.truncf %200 : vector<16x128xf32> to vector<16x128xbf16>
    %202 = arith.index_cast %167 : i32 to index
    %c0_46 = arith.constant 0 : index
    %203 = vector.load %arg8[%202, %c0_46] : memref<128x128xbf16, #tpu.memory_space<vmem>>, vector<16x128xbf16>
    tpu.vector_store %arg8[%202, %c0_46], %201 {strides = array<i32>} : memref<128x128xbf16, #tpu.memory_space<vmem>>, vector<16x128xbf16>,
    %c5_i32 = arith.constant 5 : i32
    %c16_i32_47 = arith.constant 16 : i32
    %204 = arith.muli %c5_i32, %c16_i32_47 : i32
    %205 = tpu.assume_multiple %204, 16 : i32
    %206 = arith.index_cast %205 : i32 to index
    %c0_48 = arith.constant 0 : index
    %207 = vector.load %arg9[%206, %c0_48] : memref<128x512xbf16, #tpu.memory_space<vmem>>, vector<16x512xbf16>
    %208 = arith.extf %207 : vector<16x512xbf16> to vector<16x512xf32>
    %209 = vector.broadcast %5 : vector<1x512xf32> to vector<16x512xf32>
    %210 = arith.addf %208, %209 : vector<16x512xf32>
    %211 = arith.truncf %200 : vector<16x128xf32> to vector<16x128xbf16>
    %cst_49 = arith.constant dense<0.000000e+00> : vector<16x512xf32>
    %212 = tpu.matmul %211, %3, %cst_49 {dimension_numbers = #tpu.dot_dimension_numbers<[1], [0], [0], [1], [0, 0, 1, 1], [], []>} : vector<16x128xbf16>, vector<128x512xbf16>, vector<16x512xf32> -> vector<16x512xf32>
    %213 = arith.addf %210, %212 : vector<16x512xf32>
    %214 = vector.extract_strided_slice %213 {offsets = [0, 0], sizes = [16, 128], strides = [1, 1]} : vector<16x512xf32> to vector<16x128xf32>
    %215 = arith.negf %214 : vector<16x128xf32>
    %216 = math.exp %215 : vector<16x128xf32>
    %cst_50 = arith.constant 1.000000e+00 : f32
    %217 = vector.broadcast %cst_50 : f32 to vector<16x128xf32>
    %218 = arith.addf %217, %216 : vector<16x128xf32>
    %219 = arith.divf %217, %218 : vector<16x128xf32>
    %220 = vector.extract_strided_slice %213 {offsets = [0, 128], sizes = [16, 128], strides = [1, 1]} : vector<16x512xf32> to vector<16x128xf32>
    %221 = arith.negf %220 : vector<16x128xf32>
    %222 = math.exp %221 : vector<16x128xf32>
    %cst_51 = arith.constant 1.000000e+00 : f32
    %223 = vector.broadcast %cst_51 : f32 to vector<16x128xf32>
    %224 = arith.addf %223, %222 : vector<16x128xf32>
    %225 = arith.divf %223, %224 : vector<16x128xf32>
    %226 = vector.extract_strided_slice %213 {offsets = [0, 256], sizes = [16, 128], strides = [1, 1]} : vector<16x512xf32> to vector<16x128xf32>
    %227 = math.tanh %226 : vector<16x128xf32>
    %228 = vector.extract_strided_slice %213 {offsets = [0, 384], sizes = [16, 128], strides = [1, 1]} : vector<16x512xf32> to vector<16x128xf32>
    %229 = arith.negf %228 : vector<16x128xf32>
    %230 = math.exp %229 : vector<16x128xf32>
    %cst_52 = arith.constant 1.000000e+00 : f32
    %231 = vector.broadcast %cst_52 : f32 to vector<16x128xf32>
    %232 = arith.addf %231, %230 : vector<16x128xf32>
    %233 = arith.divf %231, %232 : vector<16x128xf32>
    %234 = arith.mulf %225, %198 : vector<16x128xf32>
    %235 = arith.mulf %219, %227 : vector<16x128xf32>
    %236 = arith.addf %234, %235 : vector<16x128xf32>
    %237 = math.tanh %236 : vector<16x128xf32>
    %238 = arith.mulf %233, %237 : vector<16x128xf32>
    %239 = arith.truncf %238 : vector<16x128xf32> to vector<16x128xbf16>
    %240 = arith.index_cast %205 : i32 to index
    %c0_53 = arith.constant 0 : index
    %241 = vector.load %arg8[%240, %c0_53] : memref<128x128xbf16, #tpu.memory_space<vmem>>, vector<16x128xbf16>
    tpu.vector_store %arg8[%240, %c0_53], %239 {strides = array<i32>} : memref<128x128xbf16, #tpu.memory_space<vmem>>, vector<16x128xbf16>,
    %c6_i32 = arith.constant 6 : i32
    %c16_i32_54 = arith.constant 16 : i32
    %242 = arith.muli %c6_i32, %c16_i32_54 : i32
    %243 = tpu.assume_multiple %242, 16 : i32
    %244 = arith.index_cast %243 : i32 to index
    %c0_55 = arith.constant 0 : index
    %245 = vector.load %arg9[%244, %c0_55] : memref<128x512xbf16, #tpu.memory_space<vmem>>, vector<16x512xbf16>
    %246 = arith.extf %245 : vector<16x512xbf16> to vector<16x512xf32>
    %247 = vector.broadcast %5 : vector<1x512xf32> to vector<16x512xf32>
    %248 = arith.addf %246, %247 : vector<16x512xf32>
    %249 = arith.truncf %238 : vector<16x128xf32> to vector<16x128xbf16>
    %cst_56 = arith.constant dense<0.000000e+00> : vector<16x512xf32>
    %250 = tpu.matmul %249, %3, %cst_56 {dimension_numbers = #tpu.dot_dimension_numbers<[1], [0], [0], [1], [0, 0, 1, 1], [], []>} : vector<16x128xbf16>, vector<128x512xbf16>, vector<16x512xf32> -> vector<16x512xf32>
    %251 = arith.addf %248, %250 : vector<16x512xf32>
    %252 = vector.extract_strided_slice %251 {offsets = [0, 0], sizes = [16, 128], strides = [1, 1]} : vector<16x512xf32> to vector<16x128xf32>
    %253 = arith.negf %252 : vector<16x128xf32>
    %254 = math.exp %253 : vector<16x128xf32>
    %cst_57 = arith.constant 1.000000e+00 : f32
    %255 = vector.broadcast %cst_57 : f32 to vector<16x128xf32>
    %256 = arith.addf %255, %254 : vector<16x128xf32>
    %257 = arith.divf %255, %256 : vector<16x128xf32>
    %258 = vector.extract_strided_slice %251 {offsets = [0, 128], sizes = [16, 128], strides = [1, 1]} : vector<16x512xf32> to vector<16x128xf32>
    %259 = arith.negf %258 : vector<16x128xf32>
    %260 = math.exp %259 : vector<16x128xf32>
    %cst_58 = arith.constant 1.000000e+00 : f32
    %261 = vector.broadcast %cst_58 : f32 to vector<16x128xf32>
    %262 = arith.addf %261, %260 : vector<16x128xf32>
    %263 = arith.divf %261, %262 : vector<16x128xf32>
    %264 = vector.extract_strided_slice %251 {offsets = [0, 256], sizes = [16, 128], strides = [1, 1]} : vector<16x512xf32> to vector<16x128xf32>
    %265 = math.tanh %264 : vector<16x128xf32>
    %266 = vector.extract_strided_slice %251 {offsets = [0, 384], sizes = [16, 128], strides = [1, 1]} : vector<16x512xf32> to vector<16x128xf32>
    %267 = arith.negf %266 : vector<16x128xf32>
    %268 = math.exp %267 : vector<16x128xf32>
    %cst_59 = arith.constant 1.000000e+00 : f32
    %269 = vector.broadcast %cst_59 : f32 to vector<16x128xf32>
    %270 = arith.addf %269, %268 : vector<16x128xf32>
    %271 = arith.divf %269, %270 : vector<16x128xf32>
    %272 = arith.mulf %263, %236 : vector<16x128xf32>
    %273 = arith.mulf %257, %265 : vector<16x128xf32>
    %274 = arith.addf %272, %273 : vector<16x128xf32>
    %275 = math.tanh %274 : vector<16x128xf32>
    %276 = arith.mulf %271, %275 : vector<16x128xf32>
    %277 = arith.truncf %276 : vector<16x128xf32> to vector<16x128xbf16>
    %278 = arith.index_cast %243 : i32 to index
    %c0_60 = arith.constant 0 : index
    %279 = vector.load %arg8[%278, %c0_60] : memref<128x128xbf16, #tpu.memory_space<vmem>>, vector<16x128xbf16>
    tpu.vector_store %arg8[%278, %c0_60], %277 {strides = array<i32>} : memref<128x128xbf16, #tpu.memory_space<vmem>>, vector<16x128xbf16>,
    %c7_i32 = arith.constant 7 : i32
    %c16_i32_61 = arith.constant 16 : i32
    %280 = arith.muli %c7_i32, %c16_i32_61 : i32
    %281 = tpu.assume_multiple %280, 16 : i32
    %282 = arith.index_cast %281 : i32 to index
    %c0_62 = arith.constant 0 : index
    %283 = vector.load %arg9[%282, %c0_62] : memref<128x512xbf16, #tpu.memory_space<vmem>>, vector<16x512xbf16>
    %284 = arith.extf %283 : vector<16x512xbf16> to vector<16x512xf32>
    %285 = vector.broadcast %5 : vector<1x512xf32> to vector<16x512xf32>
    %286 = arith.addf %284, %285 : vector<16x512xf32>
    %287 = arith.truncf %276 : vector<16x128xf32> to vector<16x128xbf16>
    %cst_63 = arith.constant dense<0.000000e+00> : vector<16x512xf32>
    %288 = tpu.matmul %287, %3, %cst_63 {dimension_numbers = #tpu.dot_dimension_numbers<[1], [0], [0], [1], [0, 0, 1, 1], [], []>} : vector<16x128xbf16>, vector<128x512xbf16>, vector<16x512xf32> -> vector<16x512xf32>
    %289 = arith.addf %286, %288 : vector<16x512xf32>
    %290 = vector.extract_strided_slice %289 {offsets = [0, 0], sizes = [16, 128], strides = [1, 1]} : vector<16x512xf32> to vector<16x128xf32>
    %291 = arith.negf %290 : vector<16x128xf32>
    %292 = math.exp %291 : vector<16x128xf32>
    %cst_64 = arith.constant 1.000000e+00 : f32
    %293 = vector.broadcast %cst_64 : f32 to vector<16x128xf32>
    %294 = arith.addf %293, %292 : vector<16x128xf32>
    %295 = arith.divf %293, %294 : vector<16x128xf32>
    %296 = vector.extract_strided_slice %289 {offsets = [0, 128], sizes = [16, 128], strides = [1, 1]} : vector<16x512xf32> to vector<16x128xf32>
    %297 = arith.negf %296 : vector<16x128xf32>
    %298 = math.exp %297 : vector<16x128xf32>
    %cst_65 = arith.constant 1.000000e+00 : f32
    %299 = vector.broadcast %cst_65 : f32 to vector<16x128xf32>
    %300 = arith.addf %299, %298 : vector<16x128xf32>
    %301 = arith.divf %299, %300 : vector<16x128xf32>
    %302 = vector.extract_strided_slice %289 {offsets = [0, 256], sizes = [16, 128], strides = [1, 1]} : vector<16x512xf32> to vector<16x128xf32>
    %303 = math.tanh %302 : vector<16x128xf32>
    %304 = vector.extract_strided_slice %289 {offsets = [0, 384], sizes = [16, 128], strides = [1, 1]} : vector<16x512xf32> to vector<16x128xf32>
    %305 = arith.negf %304 : vector<16x128xf32>
    %306 = math.exp %305 : vector<16x128xf32>
    %cst_66 = arith.constant 1.000000e+00 : f32
    %307 = vector.broadcast %cst_66 : f32 to vector<16x128xf32>
    %308 = arith.addf %307, %306 : vector<16x128xf32>
    %309 = arith.divf %307, %308 : vector<16x128xf32>
    %310 = arith.mulf %301, %274 : vector<16x128xf32>
    %311 = arith.mulf %295, %303 : vector<16x128xf32>
    %312 = arith.addf %310, %311 : vector<16x128xf32>
    %313 = math.tanh %312 : vector<16x128xf32>
    %314 = arith.mulf %309, %313 : vector<16x128xf32>
    %315 = arith.truncf %314 : vector<16x128xf32> to vector<16x128xbf16>
    %316 = arith.index_cast %281 : i32 to index
    %c0_67 = arith.constant 0 : index
    %317 = vector.load %arg8[%316, %c0_67] : memref<128x128xbf16, #tpu.memory_space<vmem>>, vector<16x128xbf16>
    tpu.vector_store %arg8[%316, %c0_67], %315 {strides = array<i32>} : memref<128x128xbf16, #tpu.memory_space<vmem>>, vector<16x128xbf16>,
    %c8_i32 = arith.constant 8 : i32
    %318 = arith.truncf %314 : vector<16x128xf32> to vector<16x128xbf16>
    %c0_68 = arith.constant 0 : index
    %c0_69 = arith.constant 0 : index
    %319 = vector.load %arg5[%c0_68, %c0_69] : memref<128x128xbf16, #tpu.memory_space<vmem>>, vector<128x128xbf16>
    %cst_70 = arith.constant dense<0.000000e+00> : vector<16x128xf32>
    %320 = tpu.matmul %318, %319, %cst_70 {dimension_numbers = #tpu.dot_dimension_numbers<[1], [0], [0], [1], [0, 0, 1, 1], [], []>} : vector<16x128xbf16>, vector<128x128xbf16>, vector<16x128xf32> -> vector<16x128xf32>
    %c0_71 = arith.constant 0 : index
    %c0_72 = arith.constant 0 : index
    %321 = vector.load %arg6[%c0_71, %c0_72] : memref<1x128xf32, #tpu.memory_space<vmem>>, vector<1x128xf32>
    %322 = vector.broadcast %321 : vector<1x128xf32> to vector<16x128xf32>
    %323 = arith.addf %320, %322 : vector<16x128xf32>
    %c0_73 = arith.constant 0 : index
    %c0_74 = arith.constant 0 : index
    %324 = vector.load %arg7[%c0_73, %c0_74] : memref<16x128xf32, #tpu.memory_space<vmem>>, vector<16x128xf32>
    tpu.vector_store %arg7[%c0_73, %c0_74], %323 {strides = array<i32>} : memref<16x128xf32, #tpu.memory_space<vmem>>, vector<16x128xf32>,
    return
  }
  func.func @transform_0(%arg0: i32) -> (i32, i32) {
    %c0_i32 = arith.constant 0 : i32
    %c0_i32_0 = arith.constant 0 : i32
    %c0_i32_1 = arith.constant 0 : i32
    return %c0_i32, %c0_i32_0 : i32, i32
  }
  func.func @transform_1(%arg0: i32) -> (i32, i32, i32) {
    %c0_i32 = arith.constant 0 : i32
    %c0_i32_0 = arith.constant 0 : i32
    %c0_i32_1 = arith.constant 0 : i32
    return %arg0, %c0_i32, %c0_i32_0 : i32, i32, i32
  }
  func.func @transform_2(%arg0: i32) -> (i32, i32, i32) {
    %c0_i32 = arith.constant 0 : i32
    %c0_i32_0 = arith.constant 0 : i32
    %c0_i32_1 = arith.constant 0 : i32
    return %arg0, %c0_i32, %c0_i32_0 : i32, i32, i32
  }
  func.func @transform_3(%arg0: i32) -> (i32, i32, i32) {
    %c0_i32 = arith.constant 0 : i32
    %c0_i32_0 = arith.constant 0 : i32
    %c0_i32_1 = arith.constant 0 : i32
    return %arg0, %c0_i32, %c0_i32_0 : i32, i32, i32
  }
  func.func @transform_4(%arg0: i32) -> (i32, i32) {
    %c0_i32 = arith.constant 0 : i32
    %c0_i32_0 = arith.constant 0 : i32
    %c0_i32_1 = arith.constant 0 : i32
    return %c0_i32, %c0_i32_0 : i32, i32
  }
  func.func @transform_5(%arg0: i32) -> (i32, i32) {
    %c0_i32 = arith.constant 0 : i32
    %c0_i32_0 = arith.constant 0 : i32
    %c0_i32_1 = arith.constant 0 : i32
    return %c0_i32, %c0_i32_0 : i32, i32
  }
  func.func @transform_6(%arg0: i32) -> (i32, i32) {
    %c0_i32 = arith.constant 0 : i32
    %c0_i32_0 = arith.constant 0 : i32
    return %arg0, %c0_i32 : i32, i32
  }
}

</mosaic_0001>

<llo_original>
// kernel: lstm_model_forward.1
$region0: #{lstm_model_forward.1}
  #allocation0 [shape = 'u32[]', space=smem, size = 0x4, offset = 0x4, fixed_abs, tag = 'smem constant byte address 0x4 - core index']
  #allocation1 [shape = 'u32[144,128]{1,0:T(1,128)}', space=vmem, size = 0x12000, scoped, tag = 'internal scratch']
  #allocation2 [shape = 'bf16[128,128]{1,0:T(16,128)(2,1)}', space=vmem, size = 0x8000, scoped, tag = 'scratch operand']
  #allocation3 [shape = 'bf16[128,512]{1,0:T(16,128)(2,1)}', space=vmem, size = 0x20000, scoped, tag = 'scratch operand']
  %s0 = inlined_call_operand.vmem [shape: bf16[128,128], index: 0, kind: input, shape index: {}]
  %s1 = inlined_call_operand.vmem [shape: bf16[2,128,512], index: 1, kind: input, shape index: {}]
  %s2 = inlined_call_operand.vmem [shape: bf16[2,128,512], index: 2, kind: input, shape index: {}]
  %s3 = inlined_call_operand.vmem [shape: f32[2,1,512], index: 3, kind: input, shape index: {}]
  %s4 = inlined_call_operand.vmem [shape: bf16[128,128], index: 4, kind: input, shape index: {}]
  %s5 = inlined_call_operand.vmem [shape: f32[1,128], index: 5, kind: input, shape index: {}]
  %s6 = inlined_call_operand.vmem [shape: f32[32,128], index: 6, kind: output, shape index: {}]
  %s7 = sld [smem:[#allocation0]]
  $region65: #{lstm_model_forward.1} parent=0
    _
  %s9 = ssub.s32 1, %s7
  %s10 = scalar_select 0, %s9, %s7
  loop: start=0, step=1, limit=4
  $region2: #{lstm_model_forward.1} parent=0 // loop_pre_header
    _
  $region3: #{lstm_model_forward.1} parent=0 // loop_header
    %s12 = sphi 0, %s16
    %p13 = scmp.ge.s32.totalorder %s12, 4
    %s20 = sphi 0, %s20
    %s22 = sphi 0, %s20
    %s23 = sphi 0, %s22
    %s37 = sphi 0, %s23
    %s43 = sphi 0, %s45
    %s46 = sphi 0, %s43
    %s47 = sphi 0, %s46
    %s63 = sphi 0, %s47
    %s69 = sphi 0, %s71
    %s72 = sphi 0, %s69
    %s73 = sphi 0, %s72
    %s89 = sphi 0, %s73
    %s95 = sphi 0, %s97
    %s98 = sphi 0, %s95
    %s99 = sphi 0, %s98
    %s115 = sphi 0, %s99
    %s119 = sphi 0, %s119
    %s121 = sphi 0, %s119
    %s122 = sphi 0, %s121
    %s136 = sphi 0, %s122
    %s140 = sphi 0, %s140
    %s142 = sphi 0, %s140
    %s143 = sphi 0, %s142
    %s157 = sphi 0, %s143
    %s163 = sphi 0, %s165
    %s166 = sphi 0, %s163
    %s167 = sphi 0, %s166
    %s183 = sphi 0, %s167
  $region4: #{lstm_model_forward.1} parent=0 // loop_header_branch
    %15 = sbr.rel (%p13) target = $region8
  $region5: #{lstm_model_forward.1} parent=0 // loop_body
    %s17 = ssub.s32 %s12, 1
    %s18 = ssub.s32 %s12, 2
    %s19 = sadd.s32 %s12, 1
    %s21 = sadd.s32 %s20, 1
    %p24 = scmp.eq.s32.totalorder %s12, 1
    %p25 = scmp.ne.s32.totalorder %s20, %s22
    %p26 = scmp.eq.s32.totalorder %s12, 0
    %p27 = por %p25, %p26
    %p28 = scmp.ne.s32.totalorder %s20, %s22
    %p29 = scmp.eq.s32.totalorder %s17, 1
    %p30 = por %p28, %p29
    %p31 = scmp.ne.s32.totalorder %s22, %s23
    %p32 = scmp.eq.s32.totalorder %s17, 0
    %p33 = por %p31, %p32
    %p34 = scmp.ne.s32.totalorder %s22, %s23
    %p35 = scmp.eq.s32.totalorder %s18, 1
    %p36 = por %p34, %p35
    %p38 = scmp.ne.s32.totalorder %s23, %s37
    %p39 = scmp.eq.s32.totalorder %s18, 0
    %p40 = por %p38, %p39
    %s41 = ssub.s32 %s12, %s19
    %p42 = scmp.eq.s32.totalorder %s41, 0
    %s44 = sadd.s32 %s43, 1
    %s45 = scalar_select %p42, %s43, %s44
    %p48 = pneg %p42
    %p49 = scmp.eq.s32.totalorder %s12, 1
    %p50 = por %p48, %p49
    %p51 = scmp.ne.s32.totalorder %s43, %s46
    %p52 = scmp.eq.s32.totalorder %s12, 0
    %p53 = por %p51, %p52
    %p54 = scmp.ne.s32.totalorder %s43, %s46
    %p55 = scmp.eq.s32.totalorder %s17, 1
    %p56 = por %p54, %p55
    %p57 = scmp.ne.s32.totalorder %s46, %s47
    %p58 = scmp.eq.s32.totalorder %s17, 0
    %p59 = por %p57, %p58
    %p60 = scmp.ne.s32.totalorder %s46, %s47
    %p61 = scmp.eq.s32.totalorder %s18, 1
    %p62 = por %p60, %p61
    %p64 = scmp.ne.s32.totalorder %s47, %s63
    %p65 = scmp.eq.s32.totalorder %s18, 0
    %p66 = por %p64, %p65
    %s67 = ssub.s32 %s12, %s19
    %p68 = scmp.eq.s32.totalorder %s67, 0
    %s70 = sadd.s32 %s69, 1
    %s71 = scalar_select %p68, %s69, %s70
    %p74 = pneg %p68
    %p75 = scmp.eq.s32.totalorder %s12, 1
    %p76 = por %p74, %p75
    %p77 = scmp.ne.s32.totalorder %s69, %s72
    %p78 = scmp.eq.s32.totalorder %s12, 0
    %p79 = por %p77, %p78
    %p80 = scmp.ne.s32.totalorder %s69, %s72
    %p81 = scmp.eq.s32.totalorder %s17, 1
    %p82 = por %p80, %p81
    %p83 = scmp.ne.s32.totalorder %s72, %s73
    %p84 = scmp.eq.s32.totalorder %s17, 0
    %p85 = por %p83, %p84
    %p86 = scmp.ne.s32.totalorder %s72, %s73
    %p87 = scmp.eq.s32.totalorder %s18, 1
    %p88 = por %p86, %p87
    %p90 = scmp.ne.s32.totalorder %s73, %s89
    %p91 = scmp.eq.s32.totalorder %s18, 0
    %p92 = por %p90, %p91
    %s93 = ssub.s32 %s12, %s19
    %p94 = scmp.eq.s32.totalorder %s93, 0
    %s96 = sadd.s32 %s95, 1
    %s97 = scalar_select %p94, %s95, %s96
    %p100 = pneg %p94
    %p101 = scmp.eq.s32.totalorder %s12, 1
    %p102 = por %p100, %p101
    %p103 = scmp.ne.s32.totalorder %s95, %s98
    %p104 = scmp.eq.s32.totalorder %s12, 0
    %p105 = por %p103, %p104
    %p106 = scmp.ne.s32.totalorder %s95, %s98
    %p107 = scmp.eq.s32.totalorder %s17, 1
    %p108 = por %p106, %p107
    %p109 = scmp.ne.s32.totalorder %s98, %s99
    %p110 = scmp.eq.s32.totalorder %s17, 0
    %p111 = por %p109, %p110
    %p112 = scmp.ne.s32.totalorder %s98, %s99
    %p113 = scmp.eq.s32.totalorder %s18, 1
    %p114 = por %p112, %p113
    %p116 = scmp.ne.s32.totalorder %s99, %s115
    %p117 = scmp.eq.s32.totalorder %s18, 0
    %p118 = por %p116, %p117
    %s120 = sadd.s32 %s119, 1
    %p123 = scmp.eq.s32.totalorder %s12, 1
    %p124 = scmp.ne.s32.totalorder %s119, %s121
    %p125 = scmp.eq.s32.totalorder %s12, 0
    %p126 = por %p124, %p125
    %p127 = scmp.ne.s32.totalorder %s119, %s121
    %p128 = scmp.eq.s32.totalorder %s17, 1
    %p129 = por %p127, %p128
    %p130 = scmp.ne.s32.totalorder %s121, %s122
    %p131 = scmp.eq.s32.totalorder %s17, 0
    %p132 = por %p130, %p131
    %p133 = scmp.ne.s32.totalorder %s121, %s122
    %p134 = scmp.eq.s32.totalorder %s18, 1
    %p135 = por %p133, %p134
    %p137 = scmp.ne.s32.totalorder %s122, %s136
    %p138 = scmp.eq.s32.totalorder %s18, 0
    %p139 = por %p137, %p138
    %s141 = sadd.s32 %s140, 1
    %p144 = scmp.eq.s32.totalorder %s12, 1
    %p145 = scmp.ne.s32.totalorder %s140, %s142
    %p146 = scmp.eq.s32.totalorder %s12, 0
    %p147 = por %p145, %p146
    %p148 = scmp.ne.s32.totalorder %s140, %s142
    %p149 = scmp.eq.s32.totalorder %s17, 1
    %p150 = por %p148, %p149
    %p151 = scmp.ne.s32.totalorder %s142, %s143
    %p152 = scmp.eq.s32.totalorder %s17, 0
    %p153 = por %p151, %p152
    %p154 = scmp.ne.s32.totalorder %s142, %s143
    %p155 = scmp.eq.s32.totalorder %s18, 1
    %p156 = por %p154, %p155
    %p158 = scmp.ne.s32.totalorder %s143, %s157
    %p159 = scmp.eq.s32.totalorder %s18, 0
    %p160 = por %p158, %p159
    %s161 = ssub.s32 %s12, %s19
    %p162 = scmp.eq.s32.totalorder %s161, 0
    %s164 = sadd.s32 %s163, 1
    %s165 = scalar_select %p162, %s163, %s164
    %p168 = pneg %p162
    %p169 = scmp.eq.s32.totalorder %s12, 1
    %p170 = por %p168, %p169
    %p171 = scmp.ne.s32.totalorder %s163, %s166
    %p172 = scmp.eq.s32.totalorder %s12, 0
    %p173 = por %p171, %p172
    %p174 = scmp.ne.s32.totalorder %s163, %s166
    %p175 = scmp.eq.s32.totalorder %s17, 1
    %p176 = por %p174, %p175
    %p177 = scmp.ne.s32.totalorder %s166, %s167
    %p178 = scmp.eq.s32.totalorder %s17, 0
    %p179 = por %p177, %p178
    %p180 = scmp.ne.s32.totalorder %s166, %s167
    %p181 = scmp.eq.s32.totalorder %s18, 1
    %p182 = por %p180, %p181
    %p184 = scmp.ne.s32.totalorder %s167, %s183
    %p185 = scmp.eq.s32.totalorder %s18, 0
    %p186 = por %p184, %p185
    %p187 = scmp.le.s32.totalorder 1, %s12
    %p188 = scmp.lt.s32.totalorder %s12, 3
    %p189 = pnand %p187, %p188
    %p190 = pneg %p189
    // Predicated region
    $region9: #{lstm_model_forward.1} parent=5 // pred_check
      _
    $region10: #{lstm_model_forward.1} parent=5 // pred_check_branch
      %192 = sbr.rel (%p189) target = $region12
    $region11: #{lstm_model_forward.1} parent=5 // pred_region
      %s193 = ssub.s32 %s12, 1
      // Predicated region
      $region13: #{lstm_model_forward.1} parent=11 // pred_check
        %p194 = pneg %p33
      $region14: #{lstm_model_forward.1} parent=11 // pred_check_branch
        %196 = sbr.rel (%p194) target = $region16
      $region15: #{lstm_model_forward.1} parent=11 // pred_region
        _
      $region16: #{lstm_model_forward.1} parent=11 // pred_fallthru
        _
      // Predicated region
      $region17: #{lstm_model_forward.1} parent=11 // pred_check
        %p197 = pneg %p132
      $region18: #{lstm_model_forward.1} parent=11 // pred_check_branch
        %199 = sbr.rel (%p197) target = $region20
      $region19: #{lstm_model_forward.1} parent=11 // pred_region
        _
      $region20: #{lstm_model_forward.1} parent=11 // pred_fallthru
        _
      // Predicated region
      $region21: #{lstm_model_forward.1} parent=11 // pred_check
        %p200 = pneg %p153
      $region22: #{lstm_model_forward.1} parent=11 // pred_check_branch
        %202 = sbr.rel (%p200) target = $region24
      $region23: #{lstm_model_forward.1} parent=11 // pred_region
        _
      $region24: #{lstm_model_forward.1} parent=11 // pred_fallthru
        _
    $region12: #{lstm_model_forward.1} parent=5 // pred_fallthru
      _
    %p203 = scmp.lt.s32.totalorder %s12, 2
    // Predicated region
    $region25: #{lstm_model_forward.1} parent=5 // pred_check
      %p204 = pneg %p203
    $region26: #{lstm_model_forward.1} parent=5 // pred_check_branch
      %206 = sbr.rel (%p204) target = $region28
    $region27: #{lstm_model_forward.1} parent=5 // pred_region
      // Predicated region
      $region29: #{lstm_model_forward.1} parent=27 // pred_check
        %p207 = pneg %p53
      $region30: #{lstm_model_forward.1} parent=27 // pred_check_branch
        %209 = sbr.rel (%p207) target = $region32
      $region31: #{lstm_model_forward.1} parent=27 // pred_region
        %p210 = scmp.lt.s32.totalorder %s12, 1
        %s211 = scalar_select %p210, %s12, 1
        %s212 = smul.addr %s211, 64
        %s213 = smul.addr %s212, 4
        %s214 = scalar_lea.vmem %s1, %s213
      $region32: #{lstm_model_forward.1} parent=27 // pred_fallthru
        _
      // Predicated region
      $region33: #{lstm_model_forward.1} parent=27 // pred_check
        %p215 = pneg %p79
      $region34: #{lstm_model_forward.1} parent=27 // pred_check_branch
        %217 = sbr.rel (%p215) target = $region36
      $region35: #{lstm_model_forward.1} parent=27 // pred_region
        %p218 = scmp.lt.s32.totalorder %s12, 1
        %s219 = scalar_select %p218, %s12, 1
        %s220 = smul.addr %s219, 64
        %s221 = smul.addr %s220, 4
        %s222 = scalar_lea.vmem %s2, %s221
      $region36: #{lstm_model_forward.1} parent=27 // pred_fallthru
        _
      // Predicated region
      $region37: #{lstm_model_forward.1} parent=27 // pred_check
        %p223 = pneg %p105
      $region38: #{lstm_model_forward.1} parent=27 // pred_check_branch
        %225 = sbr.rel (%p223) target = $region40
      $region39: #{lstm_model_forward.1} parent=27 // pred_region
        %p226 = scmp.lt.s32.totalorder %s12, 1
        %s227 = scalar_select %p226, %s12, 1
        %s228 = smul.addr %s227, 4
        %s229 = scalar_lea.vmem %s3, %s228
      $region40: #{lstm_model_forward.1} parent=27 // pred_fallthru
        _
    $region28: #{lstm_model_forward.1} parent=5 // pred_fallthru
      _
    %p230 = scmp.le.s32.totalorder 1, %s12
    %p231 = scmp.lt.s32.totalorder %s12, 3
    %p232 = pnand %p230, %p231
    %p233 = pneg %p232
    // Predicated region
    $region41: #{lstm_model_forward.1} parent=5 // pred_check
      _
    $region42: #{lstm_model_forward.1} parent=5 // pred_check_branch
      %235 = sbr.rel (%p232) target = $region44
    $region43: #{lstm_model_forward.1} parent=5 // pred_region
      %s236 = ssub.s32 %s12, 1
      %p237 = pneg %p33
      %p238 = pneg %p30
      %p239 = scmp.lt.s32.totalorder %s17, 1
      %s240 = scalar_select %p239, %s17, 1
      %s241 = smul.addr %s240, 64
      %s242 = smul.addr %s241, 4
      %s243 = scalar_lea.vmem %s1, %s242
      %p244 = pneg %p59
      %p245 = pneg %p56
      %p246 = scmp.lt.s32.totalorder %s17, 1
      %s247 = scalar_select %p246, %s17, 1
      %s248 = smul.addr %s247, 64
      %s249 = smul.addr %s248, 4
      %s250 = scalar_lea.vmem %s2, %s249
      %p251 = pneg %p85
      %p252 = pneg %p82
      %p253 = scmp.lt.s32.totalorder %s17, 1
      %s254 = scalar_select %p253, %s17, 1
      %s255 = smul.addr %s254, 4
      %s256 = scalar_lea.vmem %s3, %s255
      %p257 = pneg %p111
      %p258 = pneg %p108
      %p259 = pneg %p132
      %p260 = pneg %p129
      %p261 = pneg %p153
      %p262 = pneg %p150
      %p263 = pneg %p179
      %p264 = pneg %p176
      %s265 = smul.u32 2, %s17
      %p266 = scmp.lt.s32.totalorder %s265, 3
      %s267 = scalar_select %p266, %s265, 3
      %s268 = smul.addr %s267, 8
      %s269 = scalar_lea.vmem %s6, %s268
      %p270 = scmp.lt.s32.totalorder %s17, 1
      %s271 = scalar_select %p270, %s17, 1
      %s272 = smul.addr %s271, 64
      %s273 = smul.addr %s272, 4
      %s274 = scalar_lea.vmem %s1, %s273
      %p275 = scmp.lt.s32.totalorder %s17, 1
      %s276 = scalar_select %p275, %s17, 1
      %s277 = smul.addr %s276, 64
      %s278 = smul.addr %s277, 4
      %s279 = scalar_lea.vmem %s2, %s278
      %p280 = scmp.lt.s32.totalorder %s17, 1
      %s281 = scalar_select %p280, %s17, 1
      %s282 = smul.addr %s281, 4
      %s283 = scalar_lea.vmem %s3, %s282
      %s284 = smul.u32 2, %s17
      %p285 = scmp.lt.s32.totalorder %s284, 3
      %s286 = scalar_select %p285, %s284, 3
      %s287 = smul.addr %s286, 8
      %s288 = scalar_lea.vmem %s6, %s287
      %s289 = smul.u32 2, %s17
      %v291 = vld [vmem:[%s274] sm:$0xff]
      %v292 = vld [vmem:[%s274 + $0x8] sm:$0xff]
      %v293 = vld [vmem:[%s274 + $0x10] sm:$0xff]
      %v294 = vld [vmem:[%s274 + $0x18] sm:$0xff]
      %v295 = vld [vmem:[%s274 + $0x20] sm:$0xff]
      %v296 = vld [vmem:[%s274 + $0x28] sm:$0xff]
      %v297 = vld [vmem:[%s274 + $0x30] sm:$0xff]
      %v298 = vld [vmem:[%s274 + $0x38] sm:$0xff]
      %v299 = vld [vmem:[%s274 + $0x40] sm:$0xff]
      %v300 = vld [vmem:[%s274 + $0x48] sm:$0xff]
      %v301 = vld [vmem:[%s274 + $0x50] sm:$0xff]
      %v302 = vld [vmem:[%s274 + $0x58] sm:$0xff]
      %v303 = vld [vmem:[%s274 + $0x60] sm:$0xff]
      %v304 = vld [vmem:[%s274 + $0x68] sm:$0xff]
      %v305 = vld [vmem:[%s274 + $0x70] sm:$0xff]
      %v306 = vld [vmem:[%s274 + $0x78] sm:$0xff]
      %v307 = vld [vmem:[%s274 + $0x80] sm:$0xff]
      %v308 = vld [vmem:[%s274 + $0x88] sm:$0xff]
      %v309 = vld [vmem:[%s274 + $0x90] sm:$0xff]
      %v310 = vld [vmem:[%s274 + $0x98] sm:$0xff]
      %v311 = vld [vmem:[%s274 + $0xa0] sm:$0xff]
      %v312 = vld [vmem:[%s274 + $0xa8] sm:$0xff]
      %v313 = vld [vmem:[%s274 + $0xb0] sm:$0xff]
      %v314 = vld [vmem:[%s274 + $0xb8] sm:$0xff]
      %v315 = vld [vmem:[%s274 + $0xc0] sm:$0xff]
      %v316 = vld [vmem:[%s274 + $0xc8] sm:$0xff]
      %v317 = vld [vmem:[%s274 + $0xd0] sm:$0xff]
      %v318 = vld [vmem:[%s274 + $0xd8] sm:$0xff]
      %v319 = vld [vmem:[%s274 + $0xe0] sm:$0xff]
      %v320 = vld [vmem:[%s274 + $0xe8] sm:$0xff]
      %v321 = vld [vmem:[%s274 + $0xf0] sm:$0xff]
      %v322 = vld [vmem:[%s274 + $0xf8] sm:$0xff]
      %v323 = vld [vmem:[%s279] sm:$0xff]
      %v324 = vld [vmem:[%s279 + $0x8] sm:$0xff]
      %v325 = vld [vmem:[%s279 + $0x10] sm:$0xff]
      %v326 = vld [vmem:[%s279 + $0x18] sm:$0xff]
      %v327 = vld [vmem:[%s279 + $0x20] sm:$0xff]
      %v328 = vld [vmem:[%s279 + $0x28] sm:$0xff]
      %v329 = vld [vmem:[%s279 + $0x30] sm:$0xff]
      %v330 = vld [vmem:[%s279 + $0x38] sm:$0xff]
      %v331 = vld [vmem:[%s279 + $0x40] sm:$0xff]
      %v332 = vld [vmem:[%s279 + $0x48] sm:$0xff]
      %v333 = vld [vmem:[%s279 + $0x50] sm:$0xff]
      %v334 = vld [vmem:[%s279 + $0x58] sm:$0xff]
      %v335 = vld [vmem:[%s279 + $0x60] sm:$0xff]
      %v336 = vld [vmem:[%s279 + $0x68] sm:$0xff]
      %v337 = vld [vmem:[%s279 + $0x70] sm:$0xff]
      %v338 = vld [vmem:[%s279 + $0x78] sm:$0xff]
      %v339 = vld [vmem:[%s279 + $0x80] sm:$0xff]
      %v340 = vld [vmem:[%s279 + $0x88] sm:$0xff]
      %v341 = vld [vmem:[%s279 + $0x90] sm:$0xff]
      %v342 = vld [vmem:[%s279 + $0x98] sm:$0xff]
      %v343 = vld [vmem:[%s279 + $0xa0] sm:$0xff]
      %v344 = vld [vmem:[%s279 + $0xa8] sm:$0xff]
      %v345 = vld [vmem:[%s279 + $0xb0] sm:$0xff]
      %v346 = vld [vmem:[%s279 + $0xb8] sm:$0xff]
      %v347 = vld [vmem:[%s279 + $0xc0] sm:$0xff]
      %v348 = vld [vmem:[%s279 + $0xc8] sm:$0xff]
      %v349 = vld [vmem:[%s279 + $0xd0] sm:$0xff]
      %v350 = vld [vmem:[%s279 + $0xd8] sm:$0xff]
      %v351 = vld [vmem:[%s279 + $0xe0] sm:$0xff]
      %v352 = vld [vmem:[%s279 + $0xe8] sm:$0xff]
      %v353 = vld [vmem:[%s279 + $0xf0] sm:$0xff]
      %v354 = vld [vmem:[%s279 + $0xf8] sm:$0xff]
      %v355 = vld [vmem:[%s283] sm:$0xf]
      %p356 = scmp.eq.s32.totalorder %s17, 0
      // Predicated region
      $region45: #{lstm_model_forward.1} parent=43 // pred_check
        %p357 = pneg %p356
      $region46: #{lstm_model_forward.1} parent=43 // pred_check_branch
        %359 = sbr.rel (%p357) target = $region48
      $region47: #{lstm_model_forward.1} parent=43 // pred_region
        %v360 = vld [vmem:[%s0] sm:$0xf]
        %v361 = vld [vmem:[%s0 + $0x4] sm:$0xf]
        %v362 = vld [vmem:[%s0 + $0x8] sm:$0xf]
        %v363 = vld [vmem:[%s0 + $0xc] sm:$0xf]
        %v364 = vld [vmem:[%s0 + $0x10] sm:$0xf]
        %v365 = vld [vmem:[%s0 + $0x14] sm:$0xf]
        %v366 = vld [vmem:[%s0 + $0x18] sm:$0xf]
        %v367 = vld [vmem:[%s0 + $0x1c] sm:$0xf]
        %v368 = vld [vmem:[%s0 + $0x20] sm:$0xf]
        %v369 = vld [vmem:[%s0 + $0x24] sm:$0xf]
        %v370 = vld [vmem:[%s0 + $0x28] sm:$0xf]
        %v371 = vld [vmem:[%s0 + $0x2c] sm:$0xf]
        %v372 = vld [vmem:[%s0 + $0x30] sm:$0xf]
        %v373 = vld [vmem:[%s0 + $0x34] sm:$0xf]
        %v374 = vld [vmem:[%s0 + $0x38] sm:$0xf]
        %v375 = vld [vmem:[%s0 + $0x3c] sm:$0xf]
        %v392 = vunpack.c.l.b16 %v360
        %v393 = vunpack.c.l.b16 %v361
        %v394 = vunpack.c.l.b16 %v362
        %v395 = vunpack.c.l.b16 %v363
        %v396 = vunpack.c.l.b16 %v364
        %v397 = vunpack.c.l.b16 %v365
        %v398 = vunpack.c.l.b16 %v366
        %v399 = vunpack.c.l.b16 %v367
        %v400 = vunpack.c.l.b16 %v368
        %v401 = vunpack.c.l.b16 %v369
        %v402 = vunpack.c.l.b16 %v370
        %v403 = vunpack.c.l.b16 %v371
        %v404 = vunpack.c.l.b16 %v372
        %v405 = vunpack.c.l.b16 %v373
        %v406 = vunpack.c.l.b16 %v374
        %v407 = vunpack.c.l.b16 %v375
        %v408 = vpack.c.b16 %v393, %v392
        %v409 = vpack.c.b16 %v395, %v394
        %v410 = vpack.c.b16 %v397, %v396
        %v411 = vpack.c.b16 %v399, %v398
        %v412 = vpack.c.b16 %v401, %v400
        %v413 = vpack.c.b16 %v403, %v402
        %v414 = vpack.c.b16 %v405, %v404
        %v415 = vpack.c.b16 %v407, %v406
        %v456 = vunpack.c.l.b16 %v291
        %v457 = vunpack.c.h.b16 %v291
        %v458 = vunpack.c.l.b16 %v292
        %v459 = vunpack.c.h.b16 %v292
        %v460 = vunpack.c.l.b16 %v293
        %v461 = vunpack.c.h.b16 %v293
        %v462 = vunpack.c.l.b16 %v294
        %v463 = vunpack.c.h.b16 %v294
        %v464 = vunpack.c.l.b16 %v295
        %v465 = vunpack.c.h.b16 %v295
        %v466 = vunpack.c.l.b16 %v296
        %v467 = vunpack.c.h.b16 %v296
        %v468 = vunpack.c.l.b16 %v297
        %v469 = vunpack.c.h.b16 %v297
        %v470 = vunpack.c.l.b16 %v298
        %v471 = vunpack.c.h.b16 %v298
        %v472 = vunpack.c.l.b16 %v299
        %v473 = vunpack.c.h.b16 %v299
        %v474 = vunpack.c.l.b16 %v300
        %v475 = vunpack.c.h.b16 %v300
        %v476 = vunpack.c.l.b16 %v301
        %v477 = vunpack.c.h.b16 %v301
        %v478 = vunpack.c.l.b16 %v302
        %v479 = vunpack.c.h.b16 %v302
        %v480 = vunpack.c.l.b16 %v303
        %v481 = vunpack.c.h.b16 %v303
        %v482 = vunpack.c.l.b16 %v304
        %v483 = vunpack.c.h.b16 %v304
        %v484 = vunpack.c.l.b16 %v305
        %v485 = vunpack.c.h.b16 %v305
        %v486 = vunpack.c.l.b16 %v306
        %v487 = vunpack.c.h.b16 %v306
        %v488 = vunpack.c.l.b16 %v307
        %v489 = vunpack.c.h.b16 %v307
        %v490 = vunpack.c.l.b16 %v308
        %v491 = vunpack.c.h.b16 %v308
        %v492 = vunpack.c.l.b16 %v309
        %v493 = vunpack.c.h.b16 %v309
        %v494 = vunpack.c.l.b16 %v310
        %v495 = vunpack.c.h.b16 %v310
        %v496 = vunpack.c.l.b16 %v311
        %v497 = vunpack.c.h.b16 %v311
        %v498 = vunpack.c.l.b16 %v312
        %v499 = vunpack.c.h.b16 %v312
        %v500 = vunpack.c.l.b16 %v313
        %v501 = vunpack.c.h.b16 %v313
        %v502 = vunpack.c.l.b16 %v314
        %v503 = vunpack.c.h.b16 %v314
        %v504 = vunpack.c.l.b16 %v315
        %v505 = vunpack.c.h.b16 %v315
        %v506 = vunpack.c.l.b16 %v316
        %v507 = vunpack.c.h.b16 %v316
        %v508 = vunpack.c.l.b16 %v317
        %v509 = vunpack.c.h.b16 %v317
        %v510 = vunpack.c.l.b16 %v318
        %v511 = vunpack.c.h.b16 %v318
        %v512 = vunpack.c.l.b16 %v319
        %v513 = vunpack.c.h.b16 %v319
        %v514 = vunpack.c.l.b16 %v320
        %v515 = vunpack.c.h.b16 %v320
        %v516 = vunpack.c.l.b16 %v321
        %v517 = vunpack.c.h.b16 %v321
        %v518 = vunpack.c.l.b16 %v322
        %v519 = vunpack.c.h.b16 %v322
        %v520 = vpack.c.b16 %v460, %v456
        %v521 = vpack.c.b16 %v461, %v457
        %v522 = vpack.c.b16 %v462, %v458
        %v523 = vpack.c.b16 %v463, %v459
        %v524 = vpack.c.b16 %v468, %v464
        %v525 = vpack.c.b16 %v469, %v465
        %v526 = vpack.c.b16 %v470, %v466
        %v527 = vpack.c.b16 %v471, %v467
        %v528 = vpack.c.b16 %v476, %v472
        %v529 = vpack.c.b16 %v477, %v473
        %v530 = vpack.c.b16 %v478, %v474
        %v531 = vpack.c.b16 %v479, %v475
        %v532 = vpack.c.b16 %v484, %v480
        %v533 = vpack.c.b16 %v485, %v481
        %v534 = vpack.c.b16 %v486, %v482
        %v535 = vpack.c.b16 %v487, %v483
        %v536 = vpack.c.b16 %v492, %v488
        %v537 = vpack.c.b16 %v493, %v489
        %v538 = vpack.c.b16 %v494, %v490
        %v539 = vpack.c.b16 %v495, %v491
        %v540 = vpack.c.b16 %v500, %v496
        %v541 = vpack.c.b16 %v501, %v497
        %v542 = vpack.c.b16 %v502, %v498
        %v543 = vpack.c.b16 %v503, %v499
        %v544 = vpack.c.b16 %v508, %v504
        %v545 = vpack.c.b16 %v509, %v505
        %v546 = vpack.c.b16 %v510, %v506
        %v547 = vpack.c.b16 %v511, %v507
        %v548 = vpack.c.b16 %v516, %v512
        %v549 = vpack.c.b16 %v517, %v513
        %v550 = vpack.c.b16 %v518, %v514
        %v551 = vpack.c.b16 %v519, %v515
        %584 = vmatprep.subr.bf16.mxu0 %v521
        %585 = vmatpush1.bf16.msra.mxu0 %v520
        %586 = vmatprep.subr.bf16.mxu0 %v525
        %587 = vmatpush1.bf16.msra.mxu0 %v524
        %588 = vmatprep.subr.bf16.mxu0 %v529
        %589 = vmatpush1.bf16.msra.mxu0 %v528
        %590 = vmatprep.subr.bf16.mxu0 %v533
        %591 = vmatpush1.bf16.msra.mxu0 %v532
        %592 = vmatprep.subr.bf16.mxu0 %v537
        %593 = vmatpush1.bf16.msra.mxu0 %v536
        %594 = vmatprep.subr.bf16.mxu0 %v541
        %595 = vmatpush1.bf16.msra.mxu0 %v540
        %596 = vmatprep.subr.bf16.mxu0 %v545
        %597 = vmatpush1.bf16.msra.mxu0 %v544
        %598 = vmatprep.subr.bf16.mxu0 %v549
        %599 = vmatpush1.bf16.msra.mxu0 %v548
        %600 = vmatprep.subr.bf16.mxu0 0
        %601 = vmatpush1.bf16.msra.mxu0 0
        %602 = vmatprep.subr.bf16.mxu0 0
        %603 = vmatpush1.bf16.msra.mxu0 0
        %604 = vmatprep.subr.bf16.mxu0 0
        %605 = vmatpush1.bf16.msra.mxu0 0
        %606 = vmatprep.subr.bf16.mxu0 0
        %607 = vmatpush1.bf16.msra.mxu0 0
        %608 = vmatprep.subr.bf16.mxu0 0
        %609 = vmatpush1.bf16.msra.mxu0 0
        %610 = vmatprep.subr.bf16.mxu0 0
        %611 = vmatpush1.bf16.msra.mxu0 0
        %612 = vmatprep.subr.bf16.mxu0 0
        %613 = vmatpush1.bf16.msra.mxu0 0
        %614 = vmatprep.subr.bf16.mxu0 0
        %615 = vmatpush1.bf16.msra.mxu0 0
        %616 = vmatprep.mubr.bf16.mxu0 0
        %617 = vmatmul.mubr.bf16.gmra.mrb[0].mxu0 %v408
        %v618 = vpop.f32.mrb[0].mxu0
        %v619 = vadd.f32 0.0, %v618
        %v620 = vpop.f32.mrb[0].mxu0
        %v621 = vadd.f32 0.0, %v620
        %v622 = vpop.f32.mrb[0].mxu0
        %v623 = vadd.f32 0.0, %v622
        %v624 = vpop.f32.mrb[0].mxu0
        %v625 = vadd.f32 0.0, %v624
        %626 = vmatprep.mubr.bf16.mxu0 0
        %627 = vmatmul.mubr.bf16.gmra.mrb[0].mxu0 %v409
        %v628 = vpop.f32.mrb[0].mxu0
        %v629 = vadd.f32 0.0, %v628
        %v630 = vpop.f32.mrb[0].mxu0
        %v631 = vadd.f32 0.0, %v630
        %v632 = vpop.f32.mrb[0].mxu0
        %v633 = vadd.f32 0.0, %v632
        %v634 = vpop.f32.mrb[0].mxu0
        %v635 = vadd.f32 0.0, %v634
        %636 = vmatprep.mubr.bf16.mxu0 0
        %637 = vmatmul.mubr.bf16.gmra.mrb[0].mxu0 %v410
        %v638 = vpop.f32.mrb[0].mxu0
        %v639 = vadd.f32 0.0, %v638
        %v640 = vpop.f32.mrb[0].mxu0
        %v641 = vadd.f32 0.0, %v640
        %v642 = vpop.f32.mrb[0].mxu0
        %v643 = vadd.f32 0.0, %v642
        %v644 = vpop.f32.mrb[0].mxu0
        %v645 = vadd.f32 0.0, %v644
        %646 = vmatprep.mubr.bf16.mxu0 0
        %647 = vmatmul.mubr.bf16.gmra.mrb[0].mxu0 %v411
        %v648 = vpop.f32.mrb[0].mxu0
        %v649 = vadd.f32 0.0, %v648
        %v650 = vpop.f32.mrb[0].mxu0
        %v651 = vadd.f32 0.0, %v650
        %v652 = vpop.f32.mrb[0].mxu0
        %v653 = vadd.f32 0.0, %v652
        %v654 = vpop.f32.mrb[0].mxu0
        %v655 = vadd.f32 0.0, %v654
        %656 = vmatprep.mubr.bf16.mxu0 0
        %657 = vmatmul.mubr.bf16.gmra.mrb[0].mxu0 %v412
        %v658 = vpop.f32.mrb[0].mxu0
        %v659 = vadd.f32 0.0, %v658
        %v660 = vpop.f32.mrb[0].mxu0
        %v661 = vadd.f32 0.0, %v660
        %v662 = vpop.f32.mrb[0].mxu0
        %v663 = vadd.f32 0.0, %v662
        %v664 = vpop.f32.mrb[0].mxu0
        %v665 = vadd.f32 0.0, %v664
        %666 = vmatprep.mubr.bf16.mxu0 0
        %667 = vmatmul.mubr.bf16.gmra.mrb[0].mxu0 %v413
        %v668 = vpop.f32.mrb[0].mxu0
        %v669 = vadd.f32 0.0, %v668
        %v670 = vpop.f32.mrb[0].mxu0
        %v671 = vadd.f32 0.0, %v670
        %v672 = vpop.f32.mrb[0].mxu0
        %v673 = vadd.f32 0.0, %v672
        %v674 = vpop.f32.mrb[0].mxu0
        %v675 = vadd.f32 0.0, %v674
        %676 = vmatprep.mubr.bf16.mxu0 0
        %677 = vmatmul.mubr.bf16.gmra.mrb[0].mxu0 %v414
        %v678 = vpop.f32.mrb[0].mxu0
        %v679 = vadd.f32 0.0, %v678
        %v680 = vpop.f32.mrb[0].mxu0
        %v681 = vadd.f32 0.0, %v680
        %v682 = vpop.f32.mrb[0].mxu0
        %v683 = vadd.f32 0.0, %v682
        %v684 = vpop.f32.mrb[0].mxu0
        %v685 = vadd.f32 0.0, %v684
        %686 = vmatprep.mubr.bf16.mxu0 0
        %687 = vmatmul.mubr.bf16.gmra.mrb[0].mxu0 %v415
        %v688 = vpop.f32.mrb[0].mxu0
        %v689 = vadd.f32 0.0, %v688
        %v690 = vpop.f32.mrb[0].mxu0
        %v691 = vadd.f32 0.0, %v690
        %v692 = vpop.f32.mrb[0].mxu0
        %v693 = vadd.f32 0.0, %v692
        %v694 = vpop.f32.mrb[0].mxu0
        %v695 = vadd.f32 0.0, %v694
        %696 = vdwg.mxu0
        %697 = vmatprep.subr.bf16.mxu0 %v523
        %698 = vmatpush1.bf16.msra.mxu0 %v522
        %699 = vmatprep.subr.bf16.mxu0 %v527
        %700 = vmatpush1.bf16.msra.mxu0 %v526
        %701 = vmatprep.subr.bf16.mxu0 %v531
        %702 = vmatpush1.bf16.msra.mxu0 %v530
        %703 = vmatprep.subr.bf16.mxu0 %v535
        %704 = vmatpush1.bf16.msra.mxu0 %v534
        %705 = vmatprep.subr.bf16.mxu0 %v539
        %706 = vmatpush1.bf16.msra.mxu0 %v538
        %707 = vmatprep.subr.bf16.mxu0 %v543
        %708 = vmatpush1.bf16.msra.mxu0 %v542
        %709 = vmatprep.subr.bf16.mxu0 %v547
        %710 = vmatpush1.bf16.msra.mxu0 %v546
        %711 = vmatprep.subr.bf16.mxu0 %v551
        %712 = vmatpush1.bf16.msra.mxu0 %v550
        %713 = vmatprep.subr.bf16.mxu0 0
        %714 = vmatpush1.bf16.msra.mxu0 0
        %715 = vmatprep.subr.bf16.mxu0 0
        %716 = vmatpush1.bf16.msra.mxu0 0
        %717 = vmatprep.subr.bf16.mxu0 0
        %718 = vmatpush1.bf16.msra.mxu0 0
        %719 = vmatprep.subr.bf16.mxu0 0
        %720 = vmatpush1.bf16.msra.mxu0 0
        %721 = vmatprep.subr.bf16.mxu0 0
        %722 = vmatpush1.bf16.msra.mxu0 0
        %723 = vmatprep.subr.bf16.mxu0 0
        %724 = vmatpush1.bf16.msra.mxu0 0
        %725 = vmatprep.subr.bf16.mxu0 0
        %726 = vmatpush1.bf16.msra.mxu0 0
        %727 = vmatprep.subr.bf16.mxu0 0
        %728 = vmatpush1.bf16.msra.mxu0 0
        %729 = vmatprep.mubr.bf16.mxu0 0
        %730 = vmatmul.mubr.bf16.gmra.mrb[0].mxu0 %v408
        %v731 = vpop.f32.mrb[0].mxu0
        %v732 = vadd.f32 0.0, %v731
        %v733 = vpop.f32.mrb[0].mxu0
        %v734 = vadd.f32 0.0, %v733
        %v735 = vpop.f32.mrb[0].mxu0
        %v736 = vadd.f32 0.0, %v735
        %v737 = vpop.f32.mrb[0].mxu0
        %v738 = vadd.f32 0.0, %v737
        %739 = vmatprep.mubr.bf16.mxu0 0
        %740 = vmatmul.mubr.bf16.gmra.mrb[0].mxu0 %v409
        %v741 = vpop.f32.mrb[0].mxu0
        %v742 = vadd.f32 0.0, %v741
        %v743 = vpop.f32.mrb[0].mxu0
        %v744 = vadd.f32 0.0, %v743
        %v745 = vpop.f32.mrb[0].mxu0
        %v746 = vadd.f32 0.0, %v745
        %v747 = vpop.f32.mrb[0].mxu0
        %v748 = vadd.f32 0.0, %v747
        %749 = vmatprep.mubr.bf16.mxu0 0
        %750 = vmatmul.mubr.bf16.gmra.mrb[0].mxu0 %v410
        %v751 = vpop.f32.mrb[0].mxu0
        %v752 = vadd.f32 0.0, %v751
        %v753 = vpop.f32.mrb[0].mxu0
        %v754 = vadd.f32 0.0, %v753
        %v755 = vpop.f32.mrb[0].mxu0
        %v756 = vadd.f32 0.0, %v755
        %v757 = vpop.f32.mrb[0].mxu0
        %v758 = vadd.f32 0.0, %v757
        %759 = vmatprep.mubr.bf16.mxu0 0
        %760 = vmatmul.mubr.bf16.gmra.mrb[0].mxu0 %v411
        %v761 = vpop.f32.mrb[0].mxu0
        %v762 = vadd.f32 0.0, %v761
        %v763 = vpop.f32.mrb[0].mxu0
        %v764 = vadd.f32 0.0, %v763
        %v765 = vpop.f32.mrb[0].mxu0
        %v766 = vadd.f32 0.0, %v765
        %v767 = vpop.f32.mrb[0].mxu0
        %v768 = vadd.f32 0.0, %v767
        %769 = vmatprep.mubr.bf16.mxu0 0
        %770 = vmatmul.mubr.bf16.gmra.mrb[0].mxu0 %v412
        %v771 = vpop.f32.mrb[0].mxu0
        %v772 = vadd.f32 0.0, %v771
        %v773 = vpop.f32.mrb[0].mxu0
        %v774 = vadd.f32 0.0, %v773
        %v775 = vpop.f32.mrb[0].mxu0
        %v776 = vadd.f32 0.0, %v775
        %v777 = vpop.f32.mrb[0].mxu0
        %v778 = vadd.f32 0.0, %v777
        %779 = vmatprep.mubr.bf16.mxu0 0
        %780 = vmatmul.mubr.bf16.gmra.mrb[0].mxu0 %v413
        %v781 = vpop.f32.mrb[0].mxu0
        %v782 = vadd.f32 0.0, %v781
        %v783 = vpop.f32.mrb[0].mxu0
        %v784 = vadd.f32 0.0, %v783
        %v785 = vpop.f32.mrb[0].mxu0
        %v786 = vadd.f32 0.0, %v785
        %v787 = vpop.f32.mrb[0].mxu0
        %v788 = vadd.f32 0.0, %v787
        %789 = vmatprep.mubr.bf16.mxu0 0
        %790 = vmatmul.mubr.bf16.gmra.mrb[0].mxu0 %v414
        %v791 = vpop.f32.mrb[0].mxu0
        %v792 = vadd.f32 0.0, %v791
        %v793 = vpop.f32.mrb[0].mxu0
        %v794 = vadd.f32 0.0, %v793
        %v795 = vpop.f32.mrb[0].mxu0
        %v796 = vadd.f32 0.0, %v795
        %v797 = vpop.f32.mrb[0].mxu0
        %v798 = vadd.f32 0.0, %v797
        %799 = vmatprep.mubr.bf16.mxu0 0
        %800 = vmatmul.mubr.bf16.gmra.mrb[0].mxu0 %v415
        %v801 = vpop.f32.mrb[0].mxu0
        %v802 = vadd.f32 0.0, %v801
        %v803 = vpop.f32.mrb[0].mxu0
        %v804 = vadd.f32 0.0, %v803
        %v805 = vpop.f32.mrb[0].mxu0
        %v806 = vadd.f32 0.0, %v805
        %v807 = vpop.f32.mrb[0].mxu0
        %v808 = vadd.f32 0.0, %v807
        %809 = vdwg.mxu0
        %v810 = vpack.c.bf16 %v623, %v619
        %v811 = vpack.c.bf16 %v625, %v621
        %v812 = vpack.c.bf16 %v736, %v732
        %v813 = vpack.c.bf16 %v738, %v734
        %v814 = vpack.c.bf16 %v633, %v629
        %v815 = vpack.c.bf16 %v635, %v631
        %v816 = vpack.c.bf16 %v746, %v742
        %v817 = vpack.c.bf16 %v748, %v744
        %v818 = vpack.c.bf16 %v643, %v639
        %v819 = vpack.c.bf16 %v645, %v641
        %v820 = vpack.c.bf16 %v756, %v752
        %v821 = vpack.c.bf16 %v758, %v754
        %v822 = vpack.c.bf16 %v653, %v649
        %v823 = vpack.c.bf16 %v655, %v651
        %v824 = vpack.c.bf16 %v766, %v762
        %v825 = vpack.c.bf16 %v768, %v764
        %v826 = vpack.c.bf16 %v663, %v659
        %v827 = vpack.c.bf16 %v665, %v661
        %v828 = vpack.c.bf16 %v776, %v772
        %v829 = vpack.c.bf16 %v778, %v774
        %v830 = vpack.c.bf16 %v673, %v669
        %v831 = vpack.c.bf16 %v675, %v671
        %v832 = vpack.c.bf16 %v786, %v782
        %v833 = vpack.c.bf16 %v788, %v784
        %v834 = vpack.c.bf16 %v683, %v679
        %v835 = vpack.c.bf16 %v685, %v681
        %v836 = vpack.c.bf16 %v796, %v792
        %v837 = vpack.c.bf16 %v798, %v794
        %v838 = vpack.c.bf16 %v693, %v689
        %v839 = vpack.c.bf16 %v695, %v691
        %v840 = vpack.c.bf16 %v806, %v802
        %v841 = vpack.c.bf16 %v808, %v804
        %842 = vst [vmem:[#allocation3] sm:$0xff] %v810
        %843 = vst [vmem:[#allocation3 + $0x8] sm:$0xff] %v811
        %844 = vst [vmem:[#allocation3 + $0x10] sm:$0xff] %v812
        %845 = vst [vmem:[#allocation3 + $0x18] sm:$0xff] %v813
        %846 = vst [vmem:[#allocation3 + $0x20] sm:$0xff] %v814
        %847 = vst [vmem:[#allocation3 + $0x28] sm:$0xff] %v815
        %848 = vst [vmem:[#allocation3 + $0x30] sm:$0xff] %v816
        %849 = vst [vmem:[#allocation3 + $0x38] sm:$0xff] %v817
        %850 = vst [vmem:[#allocation3 + $0x40] sm:$0xff] %v818
        %851 = vst [vmem:[#allocation3 + $0x48] sm:$0xff] %v819
        %852 = vst [vmem:[#allocation3 + $0x50] sm:$0xff] %v820
        %853 = vst [vmem:[#allocation3 + $0x58] sm:$0xff] %v821
        %854 = vst [vmem:[#allocation3 + $0x60] sm:$0xff] %v822
        %855 = vst [vmem:[#allocation3 + $0x68] sm:$0xff] %v823
        %856 = vst [vmem:[#allocation3 + $0x70] sm:$0xff] %v824
        %857 = vst [vmem:[#allocation3 + $0x78] sm:$0xff] %v825
        %858 = vst [vmem:[#allocation3 + $0x80] sm:$0xff] %v826
        %859 = vst [vmem:[#allocation3 + $0x88] sm:$0xff] %v827
        %860 = vst [vmem:[#allocation3 + $0x90] sm:$0xff] %v828
        %861 = vst [vmem:[#allocation3 + $0x98] sm:$0xff] %v829
        %862 = vst [vmem:[#allocation3 + $0xa0] sm:$0xff] %v830
        %863 = vst [vmem:[#allocation3 + $0xa8] sm:$0xff] %v831
        %864 = vst [vmem:[#allocation3 + $0xb0] sm:$0xff] %v832
        %865 = vst [vmem:[#allocation3 + $0xb8] sm:$0xff] %v833
        %866 = vst [vmem:[#allocation3 + $0xc0] sm:$0xff] %v834
        %867 = vst [vmem:[#allocation3 + $0xc8] sm:$0xff] %v835
        %868 = vst [vmem:[#allocation3 + $0xd0] sm:$0xff] %v836
        %869 = vst [vmem:[#allocation3 + $0xd8] sm:$0xff] %v837
        %870 = vst [vmem:[#allocation3 + $0xe0] sm:$0xff] %v838
        %871 = vst [vmem:[#allocation3 + $0xe8] sm:$0xff] %v839
        %872 = vst [vmem:[#allocation3 + $0xf0] sm:$0xff] %v840
        %873 = vst [vmem:[#allocation3 + $0xf8] sm:$0xff] %v841
      $region48: #{lstm_model_forward.1} parent=43 // pred_fallthru
        _
      %p874 = scmp.gt.s32.totalorder %s17, 0
      // Predicated region
      $region49: #{lstm_model_forward.1} parent=43 // pred_check
        %p875 = pneg %p874
      $region50: #{lstm_model_forward.1} parent=43 // pred_check_branch
        %877 = sbr.rel (%p875) target = $region52
      $region51: #{lstm_model_forward.1} parent=43 // pred_region
        %v878 = vld [vmem:[#allocation2] sm:$0xff]
        %v879 = vld [vmem:[#allocation2 + $0x8] sm:$0xff]
        %v880 = vld [vmem:[#allocation2 + $0x10] sm:$0xff]
        %v881 = vld [vmem:[#allocation2 + $0x18] sm:$0xff]
        %v882 = vld [vmem:[#allocation2 + $0x20] sm:$0xff]
        %v883 = vld [vmem:[#allocation2 + $0x28] sm:$0xff]
        %v884 = vld [vmem:[#allocation2 + $0x30] sm:$0xff]
        %v885 = vld [vmem:[#allocation2 + $0x38] sm:$0xff]
        %v918 = vunpack.c.l.b16 %v291
        %v919 = vunpack.c.h.b16 %v291
        %v920 = vunpack.c.l.b16 %v292
        %v921 = vunpack.c.h.b16 %v292
        %v922 = vunpack.c.l.b16 %v293
        %v923 = vunpack.c.h.b16 %v293
        %v924 = vunpack.c.l.b16 %v294
        %v925 = vunpack.c.h.b16 %v294
        %v926 = vunpack.c.l.b16 %v295
        %v927 = vunpack.c.h.b16 %v295
        %v928 = vunpack.c.l.b16 %v296
        %v929 = vunpack.c.h.b16 %v296
        %v930 = vunpack.c.l.b16 %v297
        %v931 = vunpack.c.h.b16 %v297
        %v932 = vunpack.c.l.b16 %v298
        %v933 = vunpack.c.h.b16 %v298
        %v934 = vunpack.c.l.b16 %v299
        %v935 = vunpack.c.h.b16 %v299
        %v936 = vunpack.c.l.b16 %v300
        %v937 = vunpack.c.h.b16 %v300
        %v938 = vunpack.c.l.b16 %v301
        %v939 = vunpack.c.h.b16 %v301
        %v940 = vunpack.c.l.b16 %v302
        %v941 = vunpack.c.h.b16 %v302
        %v942 = vunpack.c.l.b16 %v303
        %v943 = vunpack.c.h.b16 %v303
        %v944 = vunpack.c.l.b16 %v304
        %v945 = vunpack.c.h.b16 %v304
        %v946 = vunpack.c.l.b16 %v305
        %v947 = vunpack.c.h.b16 %v305
        %v948 = vunpack.c.l.b16 %v306
        %v949 = vunpack.c.h.b16 %v306
        %v950 = vunpack.c.l.b16 %v307
        %v951 = vunpack.c.h.b16 %v307
        %v952 = vunpack.c.l.b16 %v308
        %v953 = vunpack.c.h.b16 %v308
        %v954 = vunpack.c.l.b16 %v309
        %v955 = vunpack.c.h.b16 %v309
        %v956 = vunpack.c.l.b16 %v310
        %v957 = vunpack.c.h.b16 %v310
        %v958 = vunpack.c.l.b16 %v311
        %v959 = vunpack.c.h.b16 %v311
        %v960 = vunpack.c.l.b16 %v312
        %v961 = vunpack.c.h.b16 %v312
        %v962 = vunpack.c.l.b16 %v313
        %v963 = vunpack.c.h.b16 %v313
        %v964 = vunpack.c.l.b16 %v314
        %v965 = vunpack.c.h.b16 %v314
        %v966 = vunpack.c.l.b16 %v315
        %v967 = vunpack.c.h.b16 %v315
        %v968 = vunpack.c.l.b16 %v316
        %v969 = vunpack.c.h.b16 %v316
        %v970 = vunpack.c.l.b16 %v317
        %v971 = vunpack.c.h.b16 %v317
        %v972 = vunpack.c.l.b16 %v318
        %v973 = vunpack.c.h.b16 %v318
        %v974 = vunpack.c.l.b16 %v319
        %v975 = vunpack.c.h.b16 %v319
        %v976 = vunpack.c.l.b16 %v320
        %v977 = vunpack.c.h.b16 %v320
        %v978 = vunpack.c.l.b16 %v321
        %v979 = vunpack.c.h.b16 %v321
        %v980 = vunpack.c.l.b16 %v322
        %v981 = vunpack.c.h.b16 %v322
        %v982 = vpack.c.b16 %v922, %v918
        %v983 = vpack.c.b16 %v923, %v919
        %v984 = vpack.c.b16 %v924, %v920
        %v985 = vpack.c.b16 %v925, %v921
        %v986 = vpack.c.b16 %v930, %v926
        %v987 = vpack.c.b16 %v931, %v927
        %v988 = vpack.c.b16 %v932, %v928
        %v989 = vpack.c.b16 %v933, %v929
        %v990 = vpack.c.b16 %v938, %v934
        %v991 = vpack.c.b16 %v939, %v935
        %v992 = vpack.c.b16 %v940, %v936
        %v993 = vpack.c.b16 %v941, %v937
        %v994 = vpack.c.b16 %v946, %v942
        %v995 = vpack.c.b16 %v947, %v943
        %v996 = vpack.c.b16 %v948, %v944
        %v997 = vpack.c.b16 %v949, %v945
        %v998 = vpack.c.b16 %v954, %v950
        %v999 = vpack.c.b16 %v955, %v951
        %v1000 = vpack.c.b16 %v956, %v952
        %v1001 = vpack.c.b16 %v957, %v953
        %v1002 = vpack.c.b16 %v962, %v958
        %v1003 = vpack.c.b16 %v963, %v959
        %v1004 = vpack.c.b16 %v964, %v960
        %v1005 = vpack.c.b16 %v965, %v961
        %v1006 = vpack.c.b16 %v970, %v966
        %v1007 = vpack.c.b16 %v971, %v967
        %v1008 = vpack.c.b16 %v972, %v968
        %v1009 = vpack.c.b16 %v973, %v969
        %v1010 = vpack.c.b16 %v978, %v974
        %v1011 = vpack.c.b16 %v979, %v975
        %v1012 = vpack.c.b16 %v980, %v976
        %v1013 = vpack.c.b16 %v981, %v977
        %1046 = vmatprep.subr.bf16.mxu0 %v983
        %1047 = vmatpush1.bf16.msra.mxu0 %v982
        %1048 = vmatprep.subr.bf16.mxu0 %v987
        %1049 = vmatpush1.bf16.msra.mxu0 %v986
        %1050 = vmatprep.subr.bf16.mxu0 %v991
        %1051 = vmatpush1.bf16.msra.mxu0 %v990
        %1052 = vmatprep.subr.bf16.mxu0 %v995
        %1053 = vmatpush1.bf16.msra.mxu0 %v994
        %1054 = vmatprep.subr.bf16.mxu0 %v999
        %1055 = vmatpush1.bf16.msra.mxu0 %v998
        %1056 = vmatprep.subr.bf16.mxu0 %v1003
        %1057 = vmatpush1.bf16.msra.mxu0 %v1002
        %1058 = vmatprep.subr.bf16.mxu0 %v1007
        %1059 = vmatpush1.bf16.msra.mxu0 %v1006
        %1060 = vmatprep.subr.bf16.mxu0 %v1011
        %1061 = vmatpush1.bf16.msra.mxu0 %v1010
        %1062 = vmatprep.subr.bf16.mxu0 0
        %1063 = vmatpush1.bf16.msra.mxu0 0
        %1064 = vmatprep.subr.bf16.mxu0 0
        %1065 = vmatpush1.bf16.msra.mxu0 0
        %1066 = vmatprep.subr.bf16.mxu0 0
        %1067 = vmatpush1.bf16.msra.mxu0 0
        %1068 = vmatprep.subr.bf16.mxu0 0
        %1069 = vmatpush1.bf16.msra.mxu0 0
        %1070 = vmatprep.subr.bf16.mxu0 0
        %1071 = vmatpush1.bf16.msra.mxu0 0
        %1072 = vmatprep.subr.bf16.mxu0 0
        %1073 = vmatpush1.bf16.msra.mxu0 0
        %1074 = vmatprep.subr.bf16.mxu0 0
        %1075 = vmatpush1.bf16.msra.mxu0 0
        %1076 = vmatprep.subr.bf16.mxu0 0
        %1077 = vmatpush1.bf16.msra.mxu0 0
        %1078 = vmatprep.mubr.bf16.mxu0 0
        %1079 = vmatmul.mubr.bf16.gmra.mrb[0].mxu0 %v878
        %v1080 = vpop.f32.mrb[0].mxu0
        %v1081 = vadd.f32 0.0, %v1080
        %v1082 = vpop.f32.mrb[0].mxu0
        %v1083 = vadd.f32 0.0, %v1082
        %v1084 = vpop.f32.mrb[0].mxu0
        %v1085 = vadd.f32 0.0, %v1084
        %v1086 = vpop.f32.mrb[0].mxu0
        %v1087 = vadd.f32 0.0, %v1086
        %1088 = vmatprep.mubr.bf16.mxu0 0
        %1089 = vmatmul.mubr.bf16.gmra.mrb[0].mxu0 %v879
        %v1090 = vpop.f32.mrb[0].mxu0
        %v1091 = vadd.f32 0.0, %v1090
        %v1092 = vpop.f32.mrb[0].mxu0
        %v1093 = vadd.f32 0.0, %v1092
        %v1094 = vpop.f32.mrb[0].mxu0
        %v1095 = vadd.f32 0.0, %v1094
        %v1096 = vpop.f32.mrb[0].mxu0
        %v1097 = vadd.f32 0.0, %v1096
        %1098 = vmatprep.mubr.bf16.mxu0 0
        %1099 = vmatmul.mubr.bf16.gmra.mrb[0].mxu0 %v880
        %v1100 = vpop.f32.mrb[0].mxu0
        %v1101 = vadd.f32 0.0, %v1100
        %v1102 = vpop.f32.mrb[0].mxu0
        %v1103 = vadd.f32 0.0, %v1102
        %v1104 = vpop.f32.mrb[0].mxu0
        %v1105 = vadd.f32 0.0, %v1104
        %v1106 = vpop.f32.mrb[0].mxu0
        %v1107 = vadd.f32 0.0, %v1106
        %1108 = vmatprep.mubr.bf16.mxu0 0
        %1109 = vmatmul.mubr.bf16.gmra.mrb[0].mxu0 %v881
        %v1110 = vpop.f32.mrb[0].mxu0
        %v1111 = vadd.f32 0.0, %v1110
        %v1112 = vpop.f32.mrb[0].mxu0
        %v1113 = vadd.f32 0.0, %v1112
        %v1114 = vpop.f32.mrb[0].mxu0
        %v1115 = vadd.f32 0.0, %v1114
        %v1116 = vpop.f32.mrb[0].mxu0
        %v1117 = vadd.f32 0.0, %v1116
        %1118 = vmatprep.mubr.bf16.mxu0 0
        %1119 = vmatmul.mubr.bf16.gmra.mrb[0].mxu0 %v882
        %v1120 = vpop.f32.mrb[0].mxu0
        %v1121 = vadd.f32 0.0, %v1120
        %v1122 = vpop.f32.mrb[0].mxu0
        %v1123 = vadd.f32 0.0, %v1122
        %v1124 = vpop.f32.mrb[0].mxu0
        %v1125 = vadd.f32 0.0, %v1124
        %v1126 = vpop.f32.mrb[0].mxu0
        %v1127 = vadd.f32 0.0, %v1126
        %1128 = vmatprep.mubr.bf16.mxu0 0
        %1129 = vmatmul.mubr.bf16.gmra.mrb[0].mxu0 %v883
        %v1130 = vpop.f32.mrb[0].mxu0
        %v1131 = vadd.f32 0.0, %v1130
        %v1132 = vpop.f32.mrb[0].mxu0
        %v1133 = vadd.f32 0.0, %v1132
        %v1134 = vpop.f32.mrb[0].mxu0
        %v1135 = vadd.f32 0.0, %v1134
        %v1136 = vpop.f32.mrb[0].mxu0
        %v1137 = vadd.f32 0.0, %v1136
        %1138 = vmatprep.mubr.bf16.mxu0 0
        %1139 = vmatmul.mubr.bf16.gmra.mrb[0].mxu0 %v884
        %v1140 = vpop.f32.mrb[0].mxu0
        %v1141 = vadd.f32 0.0, %v1140
        %v1142 = vpop.f32.mrb[0].mxu0
        %v1143 = vadd.f32 0.0, %v1142
        %v1144 = vpop.f32.mrb[0].mxu0
        %v1145 = vadd.f32 0.0, %v1144
        %v1146 = vpop.f32.mrb[0].mxu0
        %v1147 = vadd.f32 0.0, %v1146
        %1148 = vmatprep.mubr.bf16.mxu0 0
        %1149 = vmatmul.mubr.bf16.gmra.mrb[0].mxu0 %v885
        %v1150 = vpop.f32.mrb[0].mxu0
        %v1151 = vadd.f32 0.0, %v1150
        %v1152 = vpop.f32.mrb[0].mxu0
        %v1153 = vadd.f32 0.0, %v1152
        %v1154 = vpop.f32.mrb[0].mxu0
        %v1155 = vadd.f32 0.0, %v1154
        %v1156 = vpop.f32.mrb[0].mxu0
        %v1157 = vadd.f32 0.0, %v1156
        %1158 = vdwg.mxu0
        %1159 = vmatprep.subr.bf16.mxu0 %v985
        %1160 = vmatpush1.bf16.msra.mxu0 %v984
        %1161 = vmatprep.subr.bf16.mxu0 %v989
        %1162 = vmatpush1.bf16.msra.mxu0 %v988
        %1163 = vmatprep.subr.bf16.mxu0 %v993
        %1164 = vmatpush1.bf16.msra.mxu0 %v992
        %1165 = vmatprep.subr.bf16.mxu0 %v997
        %1166 = vmatpush1.bf16.msra.mxu0 %v996
        %1167 = vmatprep.subr.bf16.mxu0 %v1001
        %1168 = vmatpush1.bf16.msra.mxu0 %v1000
        %1169 = vmatprep.subr.bf16.mxu0 %v1005
        %1170 = vmatpush1.bf16.msra.mxu0 %v1004
        %1171 = vmatprep.subr.bf16.mxu0 %v1009
        %1172 = vmatpush1.bf16.msra.mxu0 %v1008
        %1173 = vmatprep.subr.bf16.mxu0 %v1013
        %1174 = vmatpush1.bf16.msra.mxu0 %v1012
        %1175 = vmatprep.subr.bf16.mxu0 0
        %1176 = vmatpush1.bf16.msra.mxu0 0
        %1177 = vmatprep.subr.bf16.mxu0 0
        %1178 = vmatpush1.bf16.msra.mxu0 0
        %1179 = vmatprep.subr.bf16.mxu0 0
        %1180 = vmatpush1.bf16.msra.mxu0 0
        %1181 = vmatprep.subr.bf16.mxu0 0
        %1182 = vmatpush1.bf16.msra.mxu0 0
        %1183 = vmatprep.subr.bf16.mxu0 0
        %1184 = vmatpush1.bf16.msra.mxu0 0
        %1185 = vmatprep.subr.bf16.mxu0 0
        %1186 = vmatpush1.bf16.msra.mxu0 0
        %1187 = vmatprep.subr.bf16.mxu0 0
        %1188 = vmatpush1.bf16.msra.mxu0 0
        %1189 = vmatprep.subr.bf16.mxu0 0
        %1190 = vmatpush1.bf16.msra.mxu0 0
        %1191 = vmatprep.mubr.bf16.mxu0 0
        %1192 = vmatmul.mubr.bf16.gmra.mrb[0].mxu0 %v878
        %v1193 = vpop.f32.mrb[0].mxu0
        %v1194 = vadd.f32 0.0, %v1193
        %v1195 = vpop.f32.mrb[0].mxu0
        %v1196 = vadd.f32 0.0, %v1195
        %v1197 = vpop.f32.mrb[0].mxu0
        %v1198 = vadd.f32 0.0, %v1197
        %v1199 = vpop.f32.mrb[0].mxu0
        %v1200 = vadd.f32 0.0, %v1199
        %1201 = vmatprep.mubr.bf16.mxu0 0
        %1202 = vmatmul.mubr.bf16.gmra.mrb[0].mxu0 %v879
        %v1203 = vpop.f32.mrb[0].mxu0
        %v1204 = vadd.f32 0.0, %v1203
        %v1205 = vpop.f32.mrb[0].mxu0
        %v1206 = vadd.f32 0.0, %v1205
        %v1207 = vpop.f32.mrb[0].mxu0
        %v1208 = vadd.f32 0.0, %v1207
        %v1209 = vpop.f32.mrb[0].mxu0
        %v1210 = vadd.f32 0.0, %v1209
        %1211 = vmatprep.mubr.bf16.mxu0 0
        %1212 = vmatmul.mubr.bf16.gmra.mrb[0].mxu0 %v880
        %v1213 = vpop.f32.mrb[0].mxu0
        %v1214 = vadd.f32 0.0, %v1213
        %v1215 = vpop.f32.mrb[0].mxu0
        %v1216 = vadd.f32 0.0, %v1215
        %v1217 = vpop.f32.mrb[0].mxu0
        %v1218 = vadd.f32 0.0, %v1217
        %v1219 = vpop.f32.mrb[0].mxu0
        %v1220 = vadd.f32 0.0, %v1219
        %1221 = vmatprep.mubr.bf16.mxu0 0
        %1222 = vmatmul.mubr.bf16.gmra.mrb[0].mxu0 %v881
        %v1223 = vpop.f32.mrb[0].mxu0
        %v1224 = vadd.f32 0.0, %v1223
        %v1225 = vpop.f32.mrb[0].mxu0
        %v1226 = vadd.f32 0.0, %v1225
        %v1227 = vpop.f32.mrb[0].mxu0
        %v1228 = vadd.f32 0.0, %v1227
        %v1229 = vpop.f32.mrb[0].mxu0
        %v1230 = vadd.f32 0.0, %v1229
        %1231 = vmatprep.mubr.bf16.mxu0 0
        %1232 = vmatmul.mubr.bf16.gmra.mrb[0].mxu0 %v882
        %v1233 = vpop.f32.mrb[0].mxu0
        %v1234 = vadd.f32 0.0, %v1233
        %v1235 = vpop.f32.mrb[0].mxu0
        %v1236 = vadd.f32 0.0, %v1235
        %v1237 = vpop.f32.mrb[0].mxu0
        %v1238 = vadd.f32 0.0, %v1237
        %v1239 = vpop.f32.mrb[0].mxu0
        %v1240 = vadd.f32 0.0, %v1239
        %1241 = vmatprep.mubr.bf16.mxu0 0
        %1242 = vmatmul.mubr.bf16.gmra.mrb[0].mxu0 %v883
        %v1243 = vpop.f32.mrb[0].mxu0
        %v1244 = vadd.f32 0.0, %v1243
        %v1245 = vpop.f32.mrb[0].mxu0
        %v1246 = vadd.f32 0.0, %v1245
        %v1247 = vpop.f32.mrb[0].mxu0
        %v1248 = vadd.f32 0.0, %v1247
        %v1249 = vpop.f32.mrb[0].mxu0
        %v1250 = vadd.f32 0.0, %v1249
        %1251 = vmatprep.mubr.bf16.mxu0 0
        %1252 = vmatmul.mubr.bf16.gmra.mrb[0].mxu0 %v884
        %v1253 = vpop.f32.mrb[0].mxu0
        %v1254 = vadd.f32 0.0, %v1253
        %v1255 = vpop.f32.mrb[0].mxu0
        %v1256 = vadd.f32 0.0, %v1255
        %v1257 = vpop.f32.mrb[0].mxu0
        %v1258 = vadd.f32 0.0, %v1257
        %v1259 = vpop.f32.mrb[0].mxu0
        %v1260 = vadd.f32 0.0, %v1259
        %1261 = vmatprep.mubr.bf16.mxu0 0
        %1262 = vmatmul.mubr.bf16.gmra.mrb[0].mxu0 %v885
        %v1263 = vpop.f32.mrb[0].mxu0
        %v1264 = vadd.f32 0.0, %v1263
        %v1265 = vpop.f32.mrb[0].mxu0
        %v1266 = vadd.f32 0.0, %v1265
        %v1267 = vpop.f32.mrb[0].mxu0
        %v1268 = vadd.f32 0.0, %v1267
        %v1269 = vpop.f32.mrb[0].mxu0
        %v1270 = vadd.f32 0.0, %v1269
        %1271 = vdwg.mxu0
        %v1272 = vpack.c.bf16 %v1085, %v1081
        %v1273 = vpack.c.bf16 %v1087, %v1083
        %v1274 = vpack.c.bf16 %v1198, %v1194
        %v1275 = vpack.c.bf16 %v1200, %v1196
        %v1276 = vpack.c.bf16 %v1095, %v1091
        %v1277 = vpack.c.bf16 %v1097, %v1093
        %v1278 = vpack.c.bf16 %v1208, %v1204
        %v1279 = vpack.c.bf16 %v1210, %v1206
        %v1280 = vpack.c.bf16 %v1105, %v1101
        %v1281 = vpack.c.bf16 %v1107, %v1103
        %v1282 = vpack.c.bf16 %v1218, %v1214
        %v1283 = vpack.c.bf16 %v1220, %v1216
        %v1284 = vpack.c.bf16 %v1115, %v1111
        %v1285 = vpack.c.bf16 %v1117, %v1113
        %v1286 = vpack.c.bf16 %v1228, %v1224
        %v1287 = vpack.c.bf16 %v1230, %v1226
        %v1288 = vpack.c.bf16 %v1125, %v1121
        %v1289 = vpack.c.bf16 %v1127, %v1123
        %v1290 = vpack.c.bf16 %v1238, %v1234
        %v1291 = vpack.c.bf16 %v1240, %v1236
        %v1292 = vpack.c.bf16 %v1135, %v1131
        %v1293 = vpack.c.bf16 %v1137, %v1133
        %v1294 = vpack.c.bf16 %v1248, %v1244
        %v1295 = vpack.c.bf16 %v1250, %v1246
        %v1296 = vpack.c.bf16 %v1145, %v1141
        %v1297 = vpack.c.bf16 %v1147, %v1143
        %v1298 = vpack.c.bf16 %v1258, %v1254
        %v1299 = vpack.c.bf16 %v1260, %v1256
        %v1300 = vpack.c.bf16 %v1155, %v1151
        %v1301 = vpack.c.bf16 %v1157, %v1153
        %v1302 = vpack.c.bf16 %v1268, %v1264
        %v1303 = vpack.c.bf16 %v1270, %v1266
        %1304 = vst [vmem:[#allocation3] sm:$0xff] %v1272
        %1305 = vst [vmem:[#allocation3 + $0x8] sm:$0xff] %v1273
        %1306 = vst [vmem:[#allocation3 + $0x10] sm:$0xff] %v1274
        %1307 = vst [vmem:[#allocation3 + $0x18] sm:$0xff] %v1275
        %1308 = vst [vmem:[#allocation3 + $0x20] sm:$0xff] %v1276
        %1309 = vst [vmem:[#allocation3 + $0x28] sm:$0xff] %v1277
        %1310 = vst [vmem:[#allocation3 + $0x30] sm:$0xff] %v1278
        %1311 = vst [vmem:[#allocation3 + $0x38] sm:$0xff] %v1279
        %1312 = vst [vmem:[#allocation3 + $0x40] sm:$0xff] %v1280
        %1313 = vst [vmem:[#allocation3 + $0x48] sm:$0xff] %v1281
        %1314 = vst [vmem:[#allocation3 + $0x50] sm:$0xff] %v1282
        %1315 = vst [vmem:[#allocation3 + $0x58] sm:$0xff] %v1283
        %1316 = vst [vmem:[#allocation3 + $0x60] sm:$0xff] %v1284
        %1317 = vst [vmem:[#allocation3 + $0x68] sm:$0xff] %v1285
        %1318 = vst [vmem:[#allocation3 + $0x70] sm:$0xff] %v1286
        %1319 = vst [vmem:[#allocation3 + $0x78] sm:$0xff] %v1287
        %1320 = vst [vmem:[#allocation3 + $0x80] sm:$0xff] %v1288
        %1321 = vst [vmem:[#allocation3 + $0x88] sm:$0xff] %v1289
        %1322 = vst [vmem:[#allocation3 + $0x90] sm:$0xff] %v1290
        %1323 = vst [vmem:[#allocation3 + $0x98] sm:$0xff] %v1291
        %1324 = vst [vmem:[#allocation3 + $0xa0] sm:$0xff] %v1292
        %1325 = vst [vmem:[#allocation3 + $0xa8] sm:$0xff] %v1293
        %1326 = vst [vmem:[#allocation3 + $0xb0] sm:$0xff] %v1294
        %1327 = vst [vmem:[#allocation3 + $0xb8] sm:$0xff] %v1295
        %1328 = vst [vmem:[#allocation3 + $0xc0] sm:$0xff] %v1296
        %1329 = vst [vmem:[#allocation3 + $0xc8] sm:$0xff] %v1297
        %1330 = vst [vmem:[#allocation3 + $0xd0] sm:$0xff] %v1298
        %1331 = vst [vmem:[#allocation3 + $0xd8] sm:$0xff] %v1299
        %1332 = vst [vmem:[#allocation3 + $0xe0] sm:$0xff] %v1300
        %1333 = vst [vmem:[#allocation3 + $0xe8] sm:$0xff] %v1301
        %1334 = vst [vmem:[#allocation3 + $0xf0] sm:$0xff] %v1302
        %1335 = vst [vmem:[#allocation3 + $0xf8] sm:$0xff] %v1303
      $region52: #{lstm_model_forward.1} parent=43 // pred_fallthru
        _
      %s1336 = smul.u32 0, 4
      %s1337 = smul.addr %s1336, 8
      %s1338 = scalar_lea.vmem [#allocation3], %s1337
      %v1339 = vld [vmem:[%s1338] sm:$0xff]
      %v1340 = vld [vmem:[%s1338 + $0x8] sm:$0xff]
      %v1341 = vld [vmem:[%s1338 + $0x10] sm:$0xff]
      %v1342 = vld [vmem:[%s1338 + $0x18] sm:$0xff]
      %v1343 = vunpack.c.l.bf16 %v1339
      %v1344 = vunpack.c.l.bf16 %v1340
      %v1345 = vunpack.c.l.bf16 %v1341
      %v1346 = vunpack.c.l.bf16 %v1342
      %v1347 = vunpack.c.h.bf16 %v1339
      %v1348 = vunpack.c.h.bf16 %v1340
      %v1349 = vunpack.c.h.bf16 %v1341
      %v1350 = vunpack.c.h.bf16 %v1342
      %v1352 = vlaneseq
      %v1353 = vshrl.u32 %v1352, 7
      %v1354 = vsub.s32 0, %v1353
      %v1355 = vrot.slane %v355, %v1354
      %v1356 = vlaneseq
      %v1357 = vshrl.u32 %v1356, 7
      %v1358 = vsub.s32 1, %v1357
      %v1359 = vrot.slane %v355, %v1358
      %v1360 = vlaneseq
      %v1361 = vshrl.u32 %v1360, 7
      %v1362 = vsub.s32 2, %v1361
      %v1363 = vrot.slane %v355, %v1362
      %v1364 = vlaneseq
      %v1365 = vshrl.u32 %v1364, 7
      %v1366 = vsub.s32 3, %v1365
      %v1367 = vrot.slane %v355, %v1366
      %v1372 = vadd.f32 %v1343, %v1355
      %v1373 = vadd.f32 %v1344, %v1359
      %v1374 = vadd.f32 %v1345, %v1363
      %v1375 = vadd.f32 %v1346, %v1367
      %v1376 = vadd.f32 %v1347, %v1355
      %v1377 = vadd.f32 %v1348, %v1359
      %v1378 = vadd.f32 %v1349, %v1363
      %v1379 = vadd.f32 %v1350, %v1367
      %v1412 = vunpack.c.l.b16 %v323
      %v1413 = vunpack.c.h.b16 %v323
      %v1414 = vunpack.c.l.b16 %v324
      %v1415 = vunpack.c.h.b16 %v324
      %v1416 = vunpack.c.l.b16 %v325
      %v1417 = vunpack.c.h.b16 %v325
      %v1418 = vunpack.c.l.b16 %v326
      %v1419 = vunpack.c.h.b16 %v326
      %v1420 = vunpack.c.l.b16 %v327
      %v1421 = vunpack.c.h.b16 %v327
      %v1422 = vunpack.c.l.b16 %v328
      %v1423 = vunpack.c.h.b16 %v328
      %v1424 = vunpack.c.l.b16 %v329
      %v1425 = vunpack.c.h.b16 %v329
      %v1426 = vunpack.c.l.b16 %v330
      %v1427 = vunpack.c.h.b16 %v330
      %v1428 = vunpack.c.l.b16 %v331
      %v1429 = vunpack.c.h.b16 %v331
      %v1430 = vunpack.c.l.b16 %v332
      %v1431 = vunpack.c.h.b16 %v332
      %v1432 = vunpack.c.l.b16 %v333
      %v1433 = vunpack.c.h.b16 %v333
      %v1434 = vunpack.c.l.b16 %v334
      %v1435 = vunpack.c.h.b16 %v334
      %v1436 = vunpack.c.l.b16 %v335
      %v1437 = vunpack.c.h.b16 %v335
      %v1438 = vunpack.c.l.b16 %v336
      %v1439 = vunpack.c.h.b16 %v336
      %v1440 = vunpack.c.l.b16 %v337
      %v1441 = vunpack.c.h.b16 %v337
      %v1442 = vunpack.c.l.b16 %v338
      %v1443 = vunpack.c.h.b16 %v338
      %v1444 = vunpack.c.l.b16 %v339
      %v1445 = vunpack.c.h.b16 %v339
      %v1446 = vunpack.c.l.b16 %v340
      %v1447 = vunpack.c.h.b16 %v340
      %v1448 = vunpack.c.l.b16 %v341
      %v1449 = vunpack.c.h.b16 %v341
      %v1450 = vunpack.c.l.b16 %v342
      %v1451 = vunpack.c.h.b16 %v342
      %v1452 = vunpack.c.l.b16 %v343
      %v1453 = vunpack.c.h.b16 %v343
      %v1454 = vunpack.c.l.b16 %v344
      %v1455 = vunpack.c.h.b16 %v344
      %v1456 = vunpack.c.l.b16 %v345
      %v1457 = vunpack.c.h.b16 %v345
      %v1458 = vunpack.c.l.b16 %v346
      %v1459 = vunpack.c.h.b16 %v346
      %v1460 = vunpack.c.l.b16 %v347
      %v1461 = vunpack.c.h.b16 %v347
      %v1462 = vunpack.c.l.b16 %v348
      %v1463 = vunpack.c.h.b16 %v348
      %v1464 = vunpack.c.l.b16 %v349
      %v1465 = vunpack.c.h.b16 %v349
      %v1466 = vunpack.c.l.b16 %v350
      %v1467 = vunpack.c.h.b16 %v350
      %v1468 = vunpack.c.l.b16 %v351
      %v1469 = vunpack.c.h.b16 %v351
      %v1470 = vunpack.c.l.b16 %v352
      %v1471 = vunpack.c.h.b16 %v352
      %v1472 = vunpack.c.l.b16 %v353
      %v1473 = vunpack.c.h.b16 %v353
      %v1474 = vunpack.c.l.b16 %v354
      %v1475 = vunpack.c.h.b16 %v354
      %v1476 = vpack.c.b16 %v1416, %v1412
      %v1477 = vpack.c.b16 %v1417, %v1413
      %v1478 = vpack.c.b16 %v1418, %v1414
      %v1479 = vpack.c.b16 %v1419, %v1415
      %v1480 = vpack.c.b16 %v1424, %v1420
      %v1481 = vpack.c.b16 %v1425, %v1421
      %v1482 = vpack.c.b16 %v1426, %v1422
      %v1483 = vpack.c.b16 %v1427, %v1423
      %v1484 = vpack.c.b16 %v1432, %v1428
      %v1485 = vpack.c.b16 %v1433, %v1429
      %v1486 = vpack.c.b16 %v1434, %v1430
      %v1487 = vpack.c.b16 %v1435, %v1431
      %v1488 = vpack.c.b16 %v1440, %v1436
      %v1489 = vpack.c.b16 %v1441, %v1437
      %v1490 = vpack.c.b16 %v1442, %v1438
      %v1491 = vpack.c.b16 %v1443, %v1439
      %v1492 = vpack.c.b16 %v1448, %v1444
      %v1493 = vpack.c.b16 %v1449, %v1445
      %v1494 = vpack.c.b16 %v1450, %v1446
      %v1495 = vpack.c.b16 %v1451, %v1447
      %v1496 = vpack.c.b16 %v1456, %v1452
      %v1497 = vpack.c.b16 %v1457, %v1453
      %v1498 = vpack.c.b16 %v1458, %v1454
      %v1499 = vpack.c.b16 %v1459, %v1455
      %v1500 = vpack.c.b16 %v1464, %v1460
      %v1501 = vpack.c.b16 %v1465, %v1461
      %v1502 = vpack.c.b16 %v1466, %v1462
      %v1503 = vpack.c.b16 %v1467, %v1463
      %v1504 = vpack.c.b16 %v1472, %v1468
      %v1505 = vpack.c.b16 %v1473, %v1469
      %v1506 = vpack.c.b16 %v1474, %v1470
      %v1507 = vpack.c.b16 %v1475, %v1471
      %1540 = vmatprep.subr.bf16.mxu0 %v1477
      %1541 = vmatpush1.bf16.msra.mxu0 %v1476
      %1542 = vmatprep.subr.bf16.mxu0 %v1481
      %1543 = vmatpush1.bf16.msra.mxu0 %v1480
      %1544 = vmatprep.subr.bf16.mxu0 %v1485
      %1545 = vmatpush1.bf16.msra.mxu0 %v1484
      %1546 = vmatprep.subr.bf16.mxu0 %v1489
      %1547 = vmatpush1.bf16.msra.mxu0 %v1488
      %1548 = vmatprep.subr.bf16.mxu0 %v1493
      %1549 = vmatpush1.bf16.msra.mxu0 %v1492
      %1550 = vmatprep.subr.bf16.mxu0 %v1497
      %1551 = vmatpush1.bf16.msra.mxu0 %v1496
      %1552 = vmatprep.subr.bf16.mxu0 %v1501
      %1553 = vmatpush1.bf16.msra.mxu0 %v1500
      %1554 = vmatprep.subr.bf16.mxu0 %v1505
      %1555 = vmatpush1.bf16.msra.mxu0 %v1504
      %1556 = vmatprep.subr.bf16.mxu0 0
      %1557 = vmatpush1.bf16.msra.mxu0 0
      %1558 = vmatprep.subr.bf16.mxu0 0
      %1559 = vmatpush1.bf16.msra.mxu0 0
      %1560 = vmatprep.subr.bf16.mxu0 0
      %1561 = vmatpush1.bf16.msra.mxu0 0
      %1562 = vmatprep.subr.bf16.mxu0 0
      %1563 = vmatpush1.bf16.msra.mxu0 0
      %1564 = vmatprep.subr.bf16.mxu0 0
      %1565 = vmatpush1.bf16.msra.mxu0 0
      %1566 = vmatprep.subr.bf16.mxu0 0
      %1567 = vmatpush1.bf16.msra.mxu0 0
      %1568 = vmatprep.subr.bf16.mxu0 0
      %1569 = vmatpush1.bf16.msra.mxu0 0
      %1570 = vmatprep.subr.bf16.mxu0 0
      %1571 = vmatpush1.bf16.msra.mxu0 0
      %1572 = vmatprep.mubr.bf16.mxu0 0
      %1573 = vmatmul.mubr.bf16.gmra.mrb[0].mxu0 0
      %v1574 = vpop.f32.mrb[0].mxu0
      %v1575 = vadd.f32 0.0, %v1574
      %v1576 = vpop.f32.mrb[0].mxu0
      %v1577 = vadd.f32 0.0, %v1576
      %v1578 = vpop.f32.mrb[0].mxu0
      %v1579 = vadd.f32 0.0, %v1578
      %v1580 = vpop.f32.mrb[0].mxu0
      %v1581 = vadd.f32 0.0, %v1580
      %1582 = vdwg.mxu0
      %1583 = vmatprep.subr.bf16.mxu0 %v1479
      %1584 = vmatpush1.bf16.msra.mxu0 %v1478
      %1585 = vmatprep.subr.bf16.mxu0 %v1483
      %1586 = vmatpush1.bf16.msra.mxu0 %v1482
      %1587 = vmatprep.subr.bf16.mxu0 %v1487
      %1588 = vmatpush1.bf16.msra.mxu0 %v1486
      %1589 = vmatprep.subr.bf16.mxu0 %v1491
      %1590 = vmatpush1.bf16.msra.mxu0 %v1490
      %1591 = vmatprep.subr.bf16.mxu0 %v1495
      %1592 = vmatpush1.bf16.msra.mxu0 %v1494
      %1593 = vmatprep.subr.bf16.mxu0 %v1499
      %1594 = vmatpush1.bf16.msra.mxu0 %v1498
      %1595 = vmatprep.subr.bf16.mxu0 %v1503
      %1596 = vmatpush1.bf16.msra.mxu0 %v1502
      %1597 = vmatprep.subr.bf16.mxu0 %v1507
      %1598 = vmatpush1.bf16.msra.mxu0 %v1506
      %1599 = vmatprep.subr.bf16.mxu0 0
      %1600 = vmatpush1.bf16.msra.mxu0 0
      %1601 = vmatprep.subr.bf16.mxu0 0
      %1602 = vmatpush1.bf16.msra.mxu0 0
      %1603 = vmatprep.subr.bf16.mxu0 0
      %1604 = vmatpush1.bf16.msra.mxu0 0
      %1605 = vmatprep.subr.bf16.mxu0 0
      %1606 = vmatpush1.bf16.msra.mxu0 0
      %1607 = vmatprep.subr.bf16.mxu0 0
      %1608 = vmatpush1.bf16.msra.mxu0 0
      %1609 = vmatprep.subr.bf16.mxu0 0
      %1610 = vmatpush1.bf16.msra.mxu0 0
      %1611 = vmatprep.subr.bf16.mxu0 0
      %1612 = vmatpush1.bf16.msra.mxu0 0
      %1613 = vmatprep.subr.bf16.mxu0 0
      %1614 = vmatpush1.bf16.msra.mxu0 0
      %1615 = vmatprep.mubr.bf16.mxu0 0
      %1616 = vmatmul.mubr.bf16.gmra.mrb[0].mxu0 0
      %v1617 = vpop.f32.mrb[0].mxu0
      %v1618 = vadd.f32 0.0, %v1617
      %v1619 = vpop.f32.mrb[0].mxu0
      %v1620 = vadd.f32 0.0, %v1619
      %v1621 = vpop.f32.mrb[0].mxu0
      %v1622 = vadd.f32 0.0, %v1621
      %v1623 = vpop.f32.mrb[0].mxu0
      %v1624 = vadd.f32 0.0, %v1623
      %1625 = vdwg.mxu0
      %v1626 = vadd.f32 %v1372, %v1575
      %v1627 = vadd.f32 %v1373, %v1577
      %v1628 = vadd.f32 %v1374, %v1618
      %v1629 = vadd.f32 %v1375, %v1620
      %v1630 = vadd.f32 %v1376, %v1579
      %v1631 = vadd.f32 %v1377, %v1581
      %v1632 = vadd.f32 %v1378, %v1622
      %v1633 = vadd.f32 %v1379, %v1624
      %v1634 = vxor.u32 %v1626, 2147483648
      %v1635 = vxor.u32 %v1630, 2147483648
      %v1636 = vmul.f32 %v1634, 1.442695
      %v1637 = vpow.pop %v1636
      %v1638 = vmul.f32 %v1635, 1.442695
      %v1639 = vpow.pop %v1638
      %v1640 = vadd.f32 %v1637, 1.0
      %v1641 = vadd.f32 %v1639, 1.0
      %v1642 = vrcp.pop %v1640
      %v1643 = vmul.f32 1.0, %v1642
      %v1644 = vrcp.pop %v1641
      %v1645 = vmul.f32 1.0, %v1644
      %v1646 = vxor.u32 %v1627, 2147483648
      %v1647 = vxor.u32 %v1631, 2147483648
      %v1648 = vmul.f32 %v1646, 1.442695
      %v1649 = vpow.pop %v1648
      %v1650 = vmul.f32 %v1647, 1.442695
      %v1651 = vpow.pop %v1650
      %v1652 = vadd.f32 %v1649, 1.0
      %v1653 = vadd.f32 %v1651, 1.0
      %v1654 = vrcp.pop %v1652
      %v1655 = vmul.f32 1.0, %v1654
      %v1656 = vrcp.pop %v1653
      %v1657 = vmul.f32 1.0, %v1656
      %v1658 = vtanh.pop %v1628
      %v1659 = vtanh.pop %v1632
      %v1660 = vxor.u32 %v1629, 2147483648
      %v1661 = vxor.u32 %v1633, 2147483648
      %v1662 = vmul.f32 %v1660, 1.442695
      %v1663 = vpow.pop %v1662
      %v1664 = vmul.f32 %v1661, 1.442695
      %v1665 = vpow.pop %v1664
      %v1666 = vadd.f32 %v1663, 1.0
      %v1667 = vadd.f32 %v1665, 1.0
      %v1668 = vrcp.pop %v1666
      %v1669 = vmul.f32 1.0, %v1668
      %v1670 = vrcp.pop %v1667
      %v1671 = vmul.f32 1.0, %v1670
      %v1672 = vmul.f32 %v1655, 0.0
      %v1673 = vmul.f32 %v1657, 0.0
      %v1674 = vmul.f32 %v1643, %v1658
      %v1675 = vmul.f32 %v1645, %v1659
      %v1676 = vadd.f32 %v1672, %v1674
      %v1677 = vadd.f32 %v1673, %v1675
      %v1678 = vtanh.pop %v1676
      %v1679 = vtanh.pop %v1677
      %v1680 = vmul.f32 %v1669, %v1678
      %v1681 = vmul.f32 %v1671, %v1679
      %v1682 = vpack.c.bf16 %v1681, %v1680
      %1683 = vst [vmem:[#allocation2] sm:$0xff] %v1682
      %s1684 = smul.u32 1, 4
      %s1685 = smul.addr %s1684, 8
      %s1686 = scalar_lea.vmem [#allocation3], %s1685
      %v1687 = vld [vmem:[%s1686] sm:$0xff]
      %v1688 = vld [vmem:[%s1686 + $0x8] sm:$0xff]
      %v1689 = vld [vmem:[%s1686 + $0x10] sm:$0xff]
      %v1690 = vld [vmem:[%s1686 + $0x18] sm:$0xff]
      %v1691 = vunpack.c.l.bf16 %v1687
      %v1692 = vunpack.c.l.bf16 %v1688
      %v1693 = vunpack.c.l.bf16 %v1689
      %v1694 = vunpack.c.l.bf16 %v1690
      %v1695 = vunpack.c.h.bf16 %v1687
      %v1696 = vunpack.c.h.bf16 %v1688
      %v1697 = vunpack.c.h.bf16 %v1689
      %v1698 = vunpack.c.h.bf16 %v1690
      %v1699 = vadd.f32 %v1691, %v1355
      %v1700 = vadd.f32 %v1692, %v1359
      %v1701 = vadd.f32 %v1693, %v1363
      %v1702 = vadd.f32 %v1694, %v1367
      %v1703 = vadd.f32 %v1695, %v1355
      %v1704 = vadd.f32 %v1696, %v1359
      %v1705 = vadd.f32 %v1697, %v1363
      %v1706 = vadd.f32 %v1698, %v1367
      %1707 = vmatprep.subr.bf16.mxu0 %v1477
      %1708 = vmatpush1.bf16.msra.mxu0 %v1476
      %1709 = vmatprep.subr.bf16.mxu0 %v1481
      %1710 = vmatpush1.bf16.msra.mxu0 %v1480
      %1711 = vmatprep.subr.bf16.mxu0 %v1485
      %1712 = vmatpush1.bf16.msra.mxu0 %v1484
      %1713 = vmatprep.subr.bf16.mxu0 %v1489
      %1714 = vmatpush1.bf16.msra.mxu0 %v1488
      %1715 = vmatprep.subr.bf16.mxu0 %v1493
      %1716 = vmatpush1.bf16.msra.mxu0 %v1492
      %1717 = vmatprep.subr.bf16.mxu0 %v1497
      %1718 = vmatpush1.bf16.msra.mxu0 %v1496
      %1719 = vmatprep.subr.bf16.mxu0 %v1501
      %1720 = vmatpush1.bf16.msra.mxu0 %v1500
      %1721 = vmatprep.subr.bf16.mxu0 %v1505
      %1722 = vmatpush1.bf16.msra.mxu0 %v1504
      %1723 = vmatprep.subr.bf16.mxu0 0
      %1724 = vmatpush1.bf16.msra.mxu0 0
      %1725 = vmatprep.subr.bf16.mxu0 0
      %1726 = vmatpush1.bf16.msra.mxu0 0
      %1727 = vmatprep.subr.bf16.mxu0 0
      %1728 = vmatpush1.bf16.msra.mxu0 0
      %1729 = vmatprep.subr.bf16.mxu0 0
      %1730 = vmatpush1.bf16.msra.mxu0 0
      %1731 = vmatprep.subr.bf16.mxu0 0
      %1732 = vmatpush1.bf16.msra.mxu0 0
      %1733 = vmatprep.subr.bf16.mxu0 0
      %1734 = vmatpush1.bf16.msra.mxu0 0
      %1735 = vmatprep.subr.bf16.mxu0 0
      %1736 = vmatpush1.bf16.msra.mxu0 0
      %1737 = vmatprep.subr.bf16.mxu0 0
      %1738 = vmatpush1.bf16.msra.mxu0 0
      %1739 = vmatprep.mubr.bf16.mxu0 0
      %1740 = vmatmul.mubr.bf16.gmra.mrb[0].mxu0 %v1682
      %v1741 = vpop.f32.mrb[0].mxu0
      %v1742 = vadd.f32 0.0, %v1741
      %v1743 = vpop.f32.mrb[0].mxu0
      %v1744 = vadd.f32 0.0, %v1743
      %v1745 = vpop.f32.mrb[0].mxu0
      %v1746 = vadd.f32 0.0, %v1745
      %v1747 = vpop.f32.mrb[0].mxu0
      %v1748 = vadd.f32 0.0, %v1747
      %1749 = vdwg.mxu0
      %1750 = vmatprep.subr.bf16.mxu0 %v1479
      %1751 = vmatpush1.bf16.msra.mxu0 %v1478
      %1752 = vmatprep.subr.bf16.mxu0 %v1483
      %1753 = vmatpush1.bf16.msra.mxu0 %v1482
      %1754 = vmatprep.subr.bf16.mxu0 %v1487
      %1755 = vmatpush1.bf16.msra.mxu0 %v1486
      %1756 = vmatprep.subr.bf16.mxu0 %v1491
      %1757 = vmatpush1.bf16.msra.mxu0 %v1490
      %1758 = vmatprep.subr.bf16.mxu0 %v1495
      %1759 = vmatpush1.bf16.msra.mxu0 %v1494
      %1760 = vmatprep.subr.bf16.mxu0 %v1499
      %1761 = vmatpush1.bf16.msra.mxu0 %v1498
      %1762 = vmatprep.subr.bf16.mxu0 %v1503
      %1763 = vmatpush1.bf16.msra.mxu0 %v1502
      %1764 = vmatprep.subr.bf16.mxu0 %v1507
      %1765 = vmatpush1.bf16.msra.mxu0 %v1506
      %1766 = vmatprep.subr.bf16.mxu0 0
      %1767 = vmatpush1.bf16.msra.mxu0 0
      %1768 = vmatprep.subr.bf16.mxu0 0
      %1769 = vmatpush1.bf16.msra.mxu0 0
      %1770 = vmatprep.subr.bf16.mxu0 0
      %1771 = vmatpush1.bf16.msra.mxu0 0
      %1772 = vmatprep.subr.bf16.mxu0 0
      %1773 = vmatpush1.bf16.msra.mxu0 0
      %1774 = vmatprep.subr.bf16.mxu0 0
      %1775 = vmatpush1.bf16.msra.mxu0 0
      %1776 = vmatprep.subr.bf16.mxu0 0
      %1777 = vmatpush1.bf16.msra.mxu0 0
      %1778 = vmatprep.subr.bf16.mxu0 0
      %1779 = vmatpush1.bf16.msra.mxu0 0
      %1780 = vmatprep.subr.bf16.mxu0 0
      %1781 = vmatpush1.bf16.msra.mxu0 0
      %1782 = vmatprep.mubr.bf16.mxu0 0
      %1783 = vmatmul.mubr.bf16.gmra.mrb[0].mxu0 %v1682
      %v1784 = vpop.f32.mrb[0].mxu0
      %v1785 = vadd.f32 0.0, %v1784
      %v1786 = vpop.f32.mrb[0].mxu0
      %v1787 = vadd.f32 0.0, %v1786
      %v1788 = vpop.f32.mrb[0].mxu0
      %v1789 = vadd.f32 0.0, %v1788
      %v1790 = vpop.f32.mrb[0].mxu0
      %v1791 = vadd.f32 0.0, %v1790
      %1792 = vdwg.mxu0
      %v1793 = vadd.f32 %v1699, %v1742
      %v1794 = vadd.f32 %v1700, %v1744
      %v1795 = vadd.f32 %v1701, %v1785
      %v1796 = vadd.f32 %v1702, %v1787
      %v1797 = vadd.f32 %v1703, %v1746
      %v1798 = vadd.f32 %v1704, %v1748
      %v1799 = vadd.f32 %v1705, %v1789
      %v1800 = vadd.f32 %v1706, %v1791
      %v1801 = vxor.u32 %v1793, 2147483648
      %v1802 = vxor.u32 %v1797, 2147483648
      %v1803 = vmul.f32 %v1801, 1.442695
      %v1804 = vpow.pop %v1803
      %v1805 = vmul.f32 %v1802, 1.442695
      %v1806 = vpow.pop %v1805
      %v1807 = vadd.f32 %v1804, 1.0
      %v1808 = vadd.f32 %v1806, 1.0
      %v1809 = vrcp.pop %v1807
      %v1810 = vmul.f32 1.0, %v1809
      %v1811 = vrcp.pop %v1808
      %v1812 = vmul.f32 1.0, %v1811
      %v1813 = vxor.u32 %v1794, 2147483648
      %v1814 = vxor.u32 %v1798, 2147483648
      %v1815 = vmul.f32 %v1813, 1.442695
      %v1816 = vpow.pop %v1815
      %v1817 = vmul.f32 %v1814, 1.442695
      %v1818 = vpow.pop %v1817
      %v1819 = vadd.f32 %v1816, 1.0
      %v1820 = vadd.f32 %v1818, 1.0
      %v1821 = vrcp.pop %v1819
      %v1822 = vmul.f32 1.0, %v1821
      %v1823 = vrcp.pop %v1820
      %v1824 = vmul.f32 1.0, %v1823
      %v1825 = vtanh.pop %v1795
      %v1826 = vtanh.pop %v1799
      %v1827 = vxor.u32 %v1796, 2147483648
      %v1828 = vxor.u32 %v1800, 2147483648
      %v1829 = vmul.f32 %v1827, 1.442695
      %v1830 = vpow.pop %v1829
      %v1831 = vmul.f32 %v1828, 1.442695
      %v1832 = vpow.pop %v1831
      %v1833 = vadd.f32 %v1830, 1.0
      %v1834 = vadd.f32 %v1832, 1.0
      %v1835 = vrcp.pop %v1833
      %v1836 = vmul.f32 1.0, %v1835
      %v1837 = vrcp.pop %v1834
      %v1838 = vmul.f32 1.0, %v1837
      %v1839 = vmul.f32 %v1822, %v1676
      %v1840 = vmul.f32 %v1824, %v1677
      %v1841 = vmul.f32 %v1810, %v1825
      %v1842 = vmul.f32 %v1812, %v1826
      %v1843 = vadd.f32 %v1839, %v1841
      %v1844 = vadd.f32 %v1840, %v1842
      %v1845 = vtanh.pop %v1843
      %v1846 = vtanh.pop %v1844
      %v1847 = vmul.f32 %v1836, %v1845
      %v1848 = vmul.f32 %v1838, %v1846
      %v1849 = vpack.c.bf16 %v1848, %v1847
      %s1850 = scalar_lea.vmem [#allocation2], 8
      %1851 = vst [vmem:[%s1850] sm:$0xff] %v1849
      %s1852 = smul.u32 2, 4
      %s1853 = smul.addr %s1852, 8
      %s1854 = scalar_lea.vmem [#allocation3], %s1853
      %v1855 = vld [vmem:[%s1854] sm:$0xff]
      %v1856 = vld [vmem:[%s1854 + $0x8] sm:$0xff]
      %v1857 = vld [vmem:[%s1854 + $0x10] sm:$0xff]
      %v1858 = vld [vmem:[%s1854 + $0x18] sm:$0xff]
      %v1859 = vunpack.c.l.bf16 %v1855
      %v1860 = vunpack.c.l.bf16 %v1856
      %v1861 = vunpack.c.l.bf16 %v1857
      %v1862 = vunpack.c.l.bf16 %v1858
      %v1863 = vunpack.c.h.bf16 %v1855
      %v1864 = vunpack.c.h.bf16 %v1856
      %v1865 = vunpack.c.h.bf16 %v1857
      %v1866 = vunpack.c.h.bf16 %v1858
      %v1867 = vadd.f32 %v1859, %v1355
      %v1868 = vadd.f32 %v1860, %v1359
      %v1869 = vadd.f32 %v1861, %v1363
      %v1870 = vadd.f32 %v1862, %v1367
      %v1871 = vadd.f32 %v1863, %v1355
      %v1872 = vadd.f32 %v1864, %v1359
      %v1873 = vadd.f32 %v1865, %v1363
      %v1874 = vadd.f32 %v1866, %v1367
      %1875 = vmatprep.subr.bf16.mxu0 %v1477
      %1876 = vmatpush1.bf16.msra.mxu0 %v1476
      %1877 = vmatprep.subr.bf16.mxu0 %v1481
      %1878 = vmatpush1.bf16.msra.mxu0 %v1480
      %1879 = vmatprep.subr.bf16.mxu0 %v1485
      %1880 = vmatpush1.bf16.msra.mxu0 %v1484
      %1881 = vmatprep.subr.bf16.mxu0 %v1489
      %1882 = vmatpush1.bf16.msra.mxu0 %v1488
      %1883 = vmatprep.subr.bf16.mxu0 %v1493
      %1884 = vmatpush1.bf16.msra.mxu0 %v1492
      %1885 = vmatprep.subr.bf16.mxu0 %v1497
      %1886 = vmatpush1.bf16.msra.mxu0 %v1496
      %1887 = vmatprep.subr.bf16.mxu0 %v1501
      %1888 = vmatpush1.bf16.msra.mxu0 %v1500
      %1889 = vmatprep.subr.bf16.mxu0 %v1505
      %1890 = vmatpush1.bf16.msra.mxu0 %v1504
      %1891 = vmatprep.subr.bf16.mxu0 0
      %1892 = vmatpush1.bf16.msra.mxu0 0
      %1893 = vmatprep.subr.bf16.mxu0 0
      %1894 = vmatpush1.bf16.msra.mxu0 0
      %1895 = vmatprep.subr.bf16.mxu0 0
      %1896 = vmatpush1.bf16.msra.mxu0 0
      %1897 = vmatprep.subr.bf16.mxu0 0
      %1898 = vmatpush1.bf16.msra.mxu0 0
      %1899 = vmatprep.subr.bf16.mxu0 0
      %1900 = vmatpush1.bf16.msra.mxu0 0
      %1901 = vmatprep.subr.bf16.mxu0 0
      %1902 = vmatpush1.bf16.msra.mxu0 0
      %1903 = vmatprep.subr.bf16.mxu0 0
      %1904 = vmatpush1.bf16.msra.mxu0 0
      %1905 = vmatprep.subr.bf16.mxu0 0
      %1906 = vmatpush1.bf16.msra.mxu0 0
      %1907 = vmatprep.mubr.bf16.mxu0 0
      %1908 = vmatmul.mubr.bf16.gmra.mrb[0].mxu0 %v1849
      %v1909 = vpop.f32.mrb[0].mxu0
      %v1910 = vadd.f32 0.0, %v1909
      %v1911 = vpop.f32.mrb[0].mxu0
      %v1912 = vadd.f32 0.0, %v1911
      %v1913 = vpop.f32.mrb[0].mxu0
      %v1914 = vadd.f32 0.0, %v1913
      %v1915 = vpop.f32.mrb[0].mxu0
      %v1916 = vadd.f32 0.0, %v1915
      %1917 = vdwg.mxu0
      %1918 = vmatprep.subr.bf16.mxu0 %v1479
      %1919 = vmatpush1.bf16.msra.mxu0 %v1478
      %1920 = vmatprep.subr.bf16.mxu0 %v1483
      %1921 = vmatpush1.bf16.msra.mxu0 %v1482
      %1922 = vmatprep.subr.bf16.mxu0 %v1487
      %1923 = vmatpush1.bf16.msra.mxu0 %v1486
      %1924 = vmatprep.subr.bf16.mxu0 %v1491
      %1925 = vmatpush1.bf16.msra.mxu0 %v1490
      %1926 = vmatprep.subr.bf16.mxu0 %v1495
      %1927 = vmatpush1.bf16.msra.mxu0 %v1494
      %1928 = vmatprep.subr.bf16.mxu0 %v1499
      %1929 = vmatpush1.bf16.msra.mxu0 %v1498
      %1930 = vmatprep.subr.bf16.mxu0 %v1503
      %1931 = vmatpush1.bf16.msra.mxu0 %v1502
      %1932 = vmatprep.subr.bf16.mxu0 %v1507
      %1933 = vmatpush1.bf16.msra.mxu0 %v1506
      %1934 = vmatprep.subr.bf16.mxu0 0
      %1935 = vmatpush1.bf16.msra.mxu0 0
      %1936 = vmatprep.subr.bf16.mxu0 0
      %1937 = vmatpush1.bf16.msra.mxu0 0
      %1938 = vmatprep.subr.bf16.mxu0 0
      %1939 = vmatpush1.bf16.msra.mxu0 0
      %1940 = vmatprep.subr.bf16.mxu0 0
      %1941 = vmatpush1.bf16.msra.mxu0 0
      %1942 = vmatprep.subr.bf16.mxu0 0
      %1943 = vmatpush1.bf16.msra.mxu0 0
      %1944 = vmatprep.subr.bf16.mxu0 0
      %1945 = vmatpush1.bf16.msra.mxu0 0
      %1946 = vmatprep.subr.bf16.mxu0 0
      %1947 = vmatpush1.bf16.msra.mxu0 0
      %1948 = vmatprep.subr.bf16.mxu0 0
      %1949 = vmatpush1.bf16.msra.mxu0 0
      %1950 = vmatprep.mubr.bf16.mxu0 0
      %1951 = vmatmul.mubr.bf16.gmra.mrb[0].mxu0 %v1849
      %v1952 = vpop.f32.mrb[0].mxu0
      %v1953 = vadd.f32 0.0, %v1952
      %v1954 = vpop.f32.mrb[0].mxu0
      %v1955 = vadd.f32 0.0, %v1954
      %v1956 = vpop.f32.mrb[0].mxu0
      %v1957 = vadd.f32 0.0, %v1956
      %v1958 = vpop.f32.mrb[0].mxu0
      %v1959 = vadd.f32 0.0, %v1958
      %1960 = vdwg.mxu0
      %v1961 = vadd.f32 %v1867, %v1910
      %v1962 = vadd.f32 %v1868, %v1912
      %v1963 = vadd.f32 %v1869, %v1953
      %v1964 = vadd.f32 %v1870, %v1955
      %v1965 = vadd.f32 %v1871, %v1914
      %v1966 = vadd.f32 %v1872, %v1916
      %v1967 = vadd.f32 %v1873, %v1957
      %v1968 = vadd.f32 %v1874, %v1959
      %v1969 = vxor.u32 %v1961, 2147483648
      %v1970 = vxor.u32 %v1965, 2147483648
      %v1971 = vmul.f32 %v1969, 1.442695
      %v1972 = vpow.pop %v1971
      %v1973 = vmul.f32 %v1970, 1.442695
      %v1974 = vpow.pop %v1973
      %v1975 = vadd.f32 %v1972, 1.0
      %v1976 = vadd.f32 %v1974, 1.0
      %v1977 = vrcp.pop %v1975
      %v1978 = vmul.f32 1.0, %v1977
      %v1979 = vrcp.pop %v1976
      %v1980 = vmul.f32 1.0, %v1979
      %v1981 = vxor.u32 %v1962, 2147483648
      %v1982 = vxor.u32 %v1966, 2147483648
      %v1983 = vmul.f32 %v1981, 1.442695
      %v1984 = vpow.pop %v1983
      %v1985 = vmul.f32 %v1982, 1.442695
      %v1986 = vpow.pop %v1985
      %v1987 = vadd.f32 %v1984, 1.0
      %v1988 = vadd.f32 %v1986, 1.0
      %v1989 = vrcp.pop %v1987
      %v1990 = vmul.f32 1.0, %v1989
      %v1991 = vrcp.pop %v1988
      %v1992 = vmul.f32 1.0, %v1991
      %v1993 = vtanh.pop %v1963
      %v1994 = vtanh.pop %v1967
      %v1995 = vxor.u32 %v1964, 2147483648
      %v1996 = vxor.u32 %v1968, 2147483648
      %v1997 = vmul.f32 %v1995, 1.442695
      %v1998 = vpow.pop %v1997
      %v1999 = vmul.f32 %v1996, 1.442695
      %v2000 = vpow.pop %v1999
      %v2001 = vadd.f32 %v1998, 1.0
      %v2002 = vadd.f32 %v2000, 1.0
      %v2003 = vrcp.pop %v2001
      %v2004 = vmul.f32 1.0, %v2003
      %v2005 = vrcp.pop %v2002
      %v2006 = vmul.f32 1.0, %v2005
      %v2007 = vmul.f32 %v1990, %v1843
      %v2008 = vmul.f32 %v1992, %v1844
      %v2009 = vmul.f32 %v1978, %v1993
      %v2010 = vmul.f32 %v1980, %v1994
      %v2011 = vadd.f32 %v2007, %v2009
      %v2012 = vadd.f32 %v2008, %v2010
      %v2013 = vtanh.pop %v2011
      %v2014 = vtanh.pop %v2012
      %v2015 = vmul.f32 %v2004, %v2013
      %v2016 = vmul.f32 %v2006, %v2014
      %v2017 = vpack.c.bf16 %v2016, %v2015
      %s2018 = scalar_lea.vmem [#allocation2], 16
      %2019 = vst [vmem:[%s2018] sm:$0xff] %v2017
      %s2020 = smul.u32 3, 4
      %s2021 = smul.addr %s2020, 8
      %s2022 = scalar_lea.vmem [#allocation3], %s2021
      %v2023 = vld [vmem:[%s2022] sm:$0xff]
      %v2024 = vld [vmem:[%s2022 + $0x8] sm:$0xff]
      %v2025 = vld [vmem:[%s2022 + $0x10] sm:$0xff]
      %v2026 = vld [vmem:[%s2022 + $0x18] sm:$0xff]
      %v2027 = vunpack.c.l.bf16 %v2023
      %v2028 = vunpack.c.l.bf16 %v2024
      %v2029 = vunpack.c.l.bf16 %v2025
      %v2030 = vunpack.c.l.bf16 %v2026
      %v2031 = vunpack.c.h.bf16 %v2023
      %v2032 = vunpack.c.h.bf16 %v2024
      %v2033 = vunpack.c.h.bf16 %v2025
      %v2034 = vunpack.c.h.bf16 %v2026
      %v2035 = vadd.f32 %v2027, %v1355
      %v2036 = vadd.f32 %v2028, %v1359
      %v2037 = vadd.f32 %v2029, %v1363
      %v2038 = vadd.f32 %v2030, %v1367
      %v2039 = vadd.f32 %v2031, %v1355
      %v2040 = vadd.f32 %v2032, %v1359
      %v2041 = vadd.f32 %v2033, %v1363
      %v2042 = vadd.f32 %v2034, %v1367
      %2043 = vmatprep.subr.bf16.mxu0 %v1477
      %2044 = vmatpush1.bf16.msra.mxu0 %v1476
      %2045 = vmatprep.subr.bf16.mxu0 %v1481
      %2046 = vmatpush1.bf16.msra.mxu0 %v1480
      %2047 = vmatprep.subr.bf16.mxu0 %v1485
      %2048 = vmatpush1.bf16.msra.mxu0 %v1484
      %2049 = vmatprep.subr.bf16.mxu0 %v1489
      %2050 = vmatpush1.bf16.msra.mxu0 %v1488
      %2051 = vmatprep.subr.bf16.mxu0 %v1493
      %2052 = vmatpush1.bf16.msra.mxu0 %v1492
      %2053 = vmatprep.subr.bf16.mxu0 %v1497
      %2054 = vmatpush1.bf16.msra.mxu0 %v1496
      %2055 = vmatprep.subr.bf16.mxu0 %v1501
      %2056 = vmatpush1.bf16.msra.mxu0 %v1500
      %2057 = vmatprep.subr.bf16.mxu0 %v1505
      %2058 = vmatpush1.bf16.msra.mxu0 %v1504
      %2059 = vmatprep.subr.bf16.mxu0 0
      %2060 = vmatpush1.bf16.msra.mxu0 0
      %2061 = vmatprep.subr.bf16.mxu0 0
      %2062 = vmatpush1.bf16.msra.mxu0 0
      %2063 = vmatprep.subr.bf16.mxu0 0
      %2064 = vmatpush1.bf16.msra.mxu0 0
      %2065 = vmatprep.subr.bf16.mxu0 0
      %2066 = vmatpush1.bf16.msra.mxu0 0
      %2067 = vmatprep.subr.bf16.mxu0 0
      %2068 = vmatpush1.bf16.msra.mxu0 0
      %2069 = vmatprep.subr.bf16.mxu0 0
      %2070 = vmatpush1.bf16.msra.mxu0 0
      %2071 = vmatprep.subr.bf16.mxu0 0
      %2072 = vmatpush1.bf16.msra.mxu0 0
      %2073 = vmatprep.subr.bf16.mxu0 0
      %2074 = vmatpush1.bf16.msra.mxu0 0
      %2075 = vmatprep.mubr.bf16.mxu0 0
      %2076 = vmatmul.mubr.bf16.gmra.mrb[0].mxu0 %v2017
      %v2077 = vpop.f32.mrb[0].mxu0
      %v2078 = vadd.f32 0.0, %v2077
      %v2079 = vpop.f32.mrb[0].mxu0
      %v2080 = vadd.f32 0.0, %v2079
      %v2081 = vpop.f32.mrb[0].mxu0
      %v2082 = vadd.f32 0.0, %v2081
      %v2083 = vpop.f32.mrb[0].mxu0
      %v2084 = vadd.f32 0.0, %v2083
      %2085 = vdwg.mxu0
      %2086 = vmatprep.subr.bf16.mxu0 %v1479
      %2087 = vmatpush1.bf16.msra.mxu0 %v1478
      %2088 = vmatprep.subr.bf16.mxu0 %v1483
      %2089 = vmatpush1.bf16.msra.mxu0 %v1482
      %2090 = vmatprep.subr.bf16.mxu0 %v1487
      %2091 = vmatpush1.bf16.msra.mxu0 %v1486
      %2092 = vmatprep.subr.bf16.mxu0 %v1491
      %2093 = vmatpush1.bf16.msra.mxu0 %v1490
      %2094 = vmatprep.subr.bf16.mxu0 %v1495
      %2095 = vmatpush1.bf16.msra.mxu0 %v1494
      %2096 = vmatprep.subr.bf16.mxu0 %v1499
      %2097 = vmatpush1.bf16.msra.mxu0 %v1498
      %2098 = vmatprep.subr.bf16.mxu0 %v1503
      %2099 = vmatpush1.bf16.msra.mxu0 %v1502
      %2100 = vmatprep.subr.bf16.mxu0 %v1507
      %2101 = vmatpush1.bf16.msra.mxu0 %v1506
      %2102 = vmatprep.subr.bf16.mxu0 0
      %2103 = vmatpush1.bf16.msra.mxu0 0
      %2104 = vmatprep.subr.bf16.mxu0 0
      %2105 = vmatpush1.bf16.msra.mxu0 0
      %2106 = vmatprep.subr.bf16.mxu0 0
      %2107 = vmatpush1.bf16.msra.mxu0 0
      %2108 = vmatprep.subr.bf16.mxu0 0
      %2109 = vmatpush1.bf16.msra.mxu0 0
      %2110 = vmatprep.subr.bf16.mxu0 0
      %2111 = vmatpush1.bf16.msra.mxu0 0
      %2112 = vmatprep.subr.bf16.mxu0 0
      %2113 = vmatpush1.bf16.msra.mxu0 0
      %2114 = vmatprep.subr.bf16.mxu0 0
      %2115 = vmatpush1.bf16.msra.mxu0 0
      %2116 = vmatprep.subr.bf16.mxu0 0
      %2117 = vmatpush1.bf16.msra.mxu0 0
      %2118 = vmatprep.mubr.bf16.mxu0 0
      %2119 = vmatmul.mubr.bf16.gmra.mrb[0].mxu0 %v2017
      %v2120 = vpop.f32.mrb[0].mxu0
      %v2121 = vadd.f32 0.0, %v2120
      %v2122 = vpop.f32.mrb[0].mxu0
      %v2123 = vadd.f32 0.0, %v2122
      %v2124 = vpop.f32.mrb[0].mxu0
      %v2125 = vadd.f32 0.0, %v2124
      %v2126 = vpop.f32.mrb[0].mxu0
      %v2127 = vadd.f32 0.0, %v2126
      %2128 = vdwg.mxu0
      %v2129 = vadd.f32 %v2035, %v2078
      %v2130 = vadd.f32 %v2036, %v2080
      %v2131 = vadd.f32 %v2037, %v2121
      %v2132 = vadd.f32 %v2038, %v2123
      %v2133 = vadd.f32 %v2039, %v2082
      %v2134 = vadd.f32 %v2040, %v2084
      %v2135 = vadd.f32 %v2041, %v2125
      %v2136 = vadd.f32 %v2042, %v2127
      %v2137 = vxor.u32 %v2129, 2147483648
      %v2138 = vxor.u32 %v2133, 2147483648
      %v2139 = vmul.f32 %v2137, 1.442695
      %v2140 = vpow.pop %v2139
      %v2141 = vmul.f32 %v2138, 1.442695
      %v2142 = vpow.pop %v2141
      %v2143 = vadd.f32 %v2140, 1.0
      %v2144 = vadd.f32 %v2142, 1.0
      %v2145 = vrcp.pop %v2143
      %v2146 = vmul.f32 1.0, %v2145
      %v2147 = vrcp.pop %v2144
      %v2148 = vmul.f32 1.0, %v2147
      %v2149 = vxor.u32 %v2130, 2147483648
      %v2150 = vxor.u32 %v2134, 2147483648
      %v2151 = vmul.f32 %v2149, 1.442695
      %v2152 = vpow.pop %v2151
      %v2153 = vmul.f32 %v2150, 1.442695
      %v2154 = vpow.pop %v2153
      %v2155 = vadd.f32 %v2152, 1.0
      %v2156 = vadd.f32 %v2154, 1.0
      %v2157 = vrcp.pop %v2155
      %v2158 = vmul.f32 1.0, %v2157
      %v2159 = vrcp.pop %v2156
      %v2160 = vmul.f32 1.0, %v2159
      %v2161 = vtanh.pop %v2131
      %v2162 = vtanh.pop %v2135
      %v2163 = vxor.u32 %v2132, 2147483648
      %v2164 = vxor.u32 %v2136, 2147483648
      %v2165 = vmul.f32 %v2163, 1.442695
      %v2166 = vpow.pop %v2165
      %v2167 = vmul.f32 %v2164, 1.442695
      %v2168 = vpow.pop %v2167
      %v2169 = vadd.f32 %v2166, 1.0
      %v2170 = vadd.f32 %v2168, 1.0
      %v2171 = vrcp.pop %v2169
      %v2172 = vmul.f32 1.0, %v2171
      %v2173 = vrcp.pop %v2170
      %v2174 = vmul.f32 1.0, %v2173
      %v2175 = vmul.f32 %v2158, %v2011
      %v2176 = vmul.f32 %v2160, %v2012
      %v2177 = vmul.f32 %v2146, %v2161
      %v2178 = vmul.f32 %v2148, %v2162
      %v2179 = vadd.f32 %v2175, %v2177
      %v2180 = vadd.f32 %v2176, %v2178
      %v2181 = vtanh.pop %v2179
      %v2182 = vtanh.pop %v2180
      %v2183 = vmul.f32 %v2172, %v2181
      %v2184 = vmul.f32 %v2174, %v2182
      %v2185 = vpack.c.bf16 %v2184, %v2183
      %s2186 = scalar_lea.vmem [#allocation2], 24
      %2187 = vst [vmem:[%s2186] sm:$0xff] %v2185
      %s2188 = smul.u32 4, 4
      %s2189 = smul.addr %s2188, 8
      %s2190 = scalar_lea.vmem [#allocation3], %s2189
      %v2191 = vld [vmem:[%s2190] sm:$0xff]
      %v2192 = vld [vmem:[%s2190 + $0x8] sm:$0xff]
      %v2193 = vld [vmem:[%s2190 + $0x10] sm:$0xff]
      %v2194 = vld [vmem:[%s2190 + $0x18] sm:$0xff]
      %v2195 = vunpack.c.l.bf16 %v2191
      %v2196 = vunpack.c.l.bf16 %v2192
      %v2197 = vunpack.c.l.bf16 %v2193
      %v2198 = vunpack.c.l.bf16 %v2194
      %v2199 = vunpack.c.h.bf16 %v2191
      %v2200 = vunpack.c.h.bf16 %v2192
      %v2201 = vunpack.c.h.bf16 %v2193
      %v2202 = vunpack.c.h.bf16 %v2194
      %v2203 = vadd.f32 %v2195, %v1355
      %v2204 = vadd.f32 %v2196, %v1359
      %v2205 = vadd.f32 %v2197, %v1363
      %v2206 = vadd.f32 %v2198, %v1367
      %v2207 = vadd.f32 %v2199, %v1355
      %v2208 = vadd.f32 %v2200, %v1359
      %v2209 = vadd.f32 %v2201, %v1363
      %v2210 = vadd.f32 %v2202, %v1367
      %2211 = vmatprep.subr.bf16.mxu0 %v1477
      %2212 = vmatpush1.bf16.msra.mxu0 %v1476
      %2213 = vmatprep.subr.bf16.mxu0 %v1481
      %2214 = vmatpush1.bf16.msra.mxu0 %v1480
      %2215 = vmatprep.subr.bf16.mxu0 %v1485
      %2216 = vmatpush1.bf16.msra.mxu0 %v1484
      %2217 = vmatprep.subr.bf16.mxu0 %v1489
      %2218 = vmatpush1.bf16.msra.mxu0 %v1488
      %2219 = vmatprep.subr.bf16.mxu0 %v1493
      %2220 = vmatpush1.bf16.msra.mxu0 %v1492
      %2221 = vmatprep.subr.bf16.mxu0 %v1497
      %2222 = vmatpush1.bf16.msra.mxu0 %v1496
      %2223 = vmatprep.subr.bf16.mxu0 %v1501
      %2224 = vmatpush1.bf16.msra.mxu0 %v1500
      %2225 = vmatprep.subr.bf16.mxu0 %v1505
      %2226 = vmatpush1.bf16.msra.mxu0 %v1504
      %2227 = vmatprep.subr.bf16.mxu0 0
      %2228 = vmatpush1.bf16.msra.mxu0 0
      %2229 = vmatprep.subr.bf16.mxu0 0
      %2230 = vmatpush1.bf16.msra.mxu0 0
      %2231 = vmatprep.subr.bf16.mxu0 0
      %2232 = vmatpush1.bf16.msra.mxu0 0
      %2233 = vmatprep.subr.bf16.mxu0 0
      %2234 = vmatpush1.bf16.msra.mxu0 0
      %2235 = vmatprep.subr.bf16.mxu0 0
      %2236 = vmatpush1.bf16.msra.mxu0 0
      %2237 = vmatprep.subr.bf16.mxu0 0
      %2238 = vmatpush1.bf16.msra.mxu0 0
      %2239 = vmatprep.subr.bf16.mxu0 0
      %2240 = vmatpush1.bf16.msra.mxu0 0
      %2241 = vmatprep.subr.bf16.mxu0 0
      %2242 = vmatpush1.bf16.msra.mxu0 0
      %2243 = vmatprep.mubr.bf16.mxu0 0
      %2244 = vmatmul.mubr.bf16.gmra.mrb[0].mxu0 %v2185
      %v2245 = vpop.f32.mrb[0].mxu0
      %v2246 = vadd.f32 0.0, %v2245
      %v2247 = vpop.f32.mrb[0].mxu0
      %v2248 = vadd.f32 0.0, %v2247
      %v2249 = vpop.f32.mrb[0].mxu0
      %v2250 = vadd.f32 0.0, %v2249
      %v2251 = vpop.f32.mrb[0].mxu0
      %v2252 = vadd.f32 0.0, %v2251
      %2253 = vdwg.mxu0
      %2254 = vmatprep.subr.bf16.mxu0 %v1479
      %2255 = vmatpush1.bf16.msra.mxu0 %v1478
      %2256 = vmatprep.subr.bf16.mxu0 %v1483
      %2257 = vmatpush1.bf16.msra.mxu0 %v1482
      %2258 = vmatprep.subr.bf16.mxu0 %v1487
      %2259 = vmatpush1.bf16.msra.mxu0 %v1486
      %2260 = vmatprep.subr.bf16.mxu0 %v1491
      %2261 = vmatpush1.bf16.msra.mxu0 %v1490
      %2262 = vmatprep.subr.bf16.mxu0 %v1495
      %2263 = vmatpush1.bf16.msra.mxu0 %v1494
      %2264 = vmatprep.subr.bf16.mxu0 %v1499
      %2265 = vmatpush1.bf16.msra.mxu0 %v1498
      %2266 = vmatprep.subr.bf16.mxu0 %v1503
      %2267 = vmatpush1.bf16.msra.mxu0 %v1502
      %2268 = vmatprep.subr.bf16.mxu0 %v1507
      %2269 = vmatpush1.bf16.msra.mxu0 %v1506
      %2270 = vmatprep.subr.bf16.mxu0 0
      %2271 = vmatpush1.bf16.msra.mxu0 0
      %2272 = vmatprep.subr.bf16.mxu0 0
      %2273 = vmatpush1.bf16.msra.mxu0 0
      %2274 = vmatprep.subr.bf16.mxu0 0
      %2275 = vmatpush1.bf16.msra.mxu0 0
      %2276 = vmatprep.subr.bf16.mxu0 0
      %2277 = vmatpush1.bf16.msra.mxu0 0
      %2278 = vmatprep.subr.bf16.mxu0 0
      %2279 = vmatpush1.bf16.msra.mxu0 0
      %2280 = vmatprep.subr.bf16.mxu0 0
      %2281 = vmatpush1.bf16.msra.mxu0 0
      %2282 = vmatprep.subr.bf16.mxu0 0
      %2283 = vmatpush1.bf16.msra.mxu0 0
      %2284 = vmatprep.subr.bf16.mxu0 0
      %2285 = vmatpush1.bf16.msra.mxu0 0
      %2286 = vmatprep.mubr.bf16.mxu0 0
      %2287 = vmatmul.mubr.bf16.gmra.mrb[0].mxu0 %v2185
      %v2288 = vpop.f32.mrb[0].mxu0
      %v2289 = vadd.f32 0.0, %v2288
      %v2290 = vpop.f32.mrb[0].mxu0
      %v2291 = vadd.f32 0.0, %v2290
      %v2292 = vpop.f32.mrb[0].mxu0
      %v2293 = vadd.f32 0.0, %v2292
      %v2294 = vpop.f32.mrb[0].mxu0
      %v2295 = vadd.f32 0.0, %v2294
      %2296 = vdwg.mxu0
      %v2297 = vadd.f32 %v2203, %v2246
      %v2298 = vadd.f32 %v2204, %v2248
      %v2299 = vadd.f32 %v2205, %v2289
      %v2300 = vadd.f32 %v2206, %v2291
      %v2301 = vadd.f32 %v2207, %v2250
      %v2302 = vadd.f32 %v2208, %v2252
      %v2303 = vadd.f32 %v2209, %v2293
      %v2304 = vadd.f32 %v2210, %v2295
      %v2305 = vxor.u32 %v2297, 2147483648
      %v2306 = vxor.u32 %v2301, 2147483648
      %v2307 = vmul.f32 %v2305, 1.442695
      %v2308 = vpow.pop %v2307
      %v2309 = vmul.f32 %v2306, 1.442695
      %v2310 = vpow.pop %v2309
      %v2311 = vadd.f32 %v2308, 1.0
      %v2312 = vadd.f32 %v2310, 1.0
      %v2313 = vrcp.pop %v2311
      %v2314 = vmul.f32 1.0, %v2313
      %v2315 = vrcp.pop %v2312
      %v2316 = vmul.f32 1.0, %v2315
      %v2317 = vxor.u32 %v2298, 2147483648
      %v2318 = vxor.u32 %v2302, 2147483648
      %v2319 = vmul.f32 %v2317, 1.442695
      %v2320 = vpow.pop %v2319
      %v2321 = vmul.f32 %v2318, 1.442695
      %v2322 = vpow.pop %v2321
      %v2323 = vadd.f32 %v2320, 1.0
      %v2324 = vadd.f32 %v2322, 1.0
      %v2325 = vrcp.pop %v2323
      %v2326 = vmul.f32 1.0, %v2325
      %v2327 = vrcp.pop %v2324
      %v2328 = vmul.f32 1.0, %v2327
      %v2329 = vtanh.pop %v2299
      %v2330 = vtanh.pop %v2303
      %v2331 = vxor.u32 %v2300, 2147483648
      %v2332 = vxor.u32 %v2304, 2147483648
      %v2333 = vmul.f32 %v2331, 1.442695
      %v2334 = vpow.pop %v2333
      %v2335 = vmul.f32 %v2332, 1.442695
      %v2336 = vpow.pop %v2335
      %v2337 = vadd.f32 %v2334, 1.0
      %v2338 = vadd.f32 %v2336, 1.0
      %v2339 = vrcp.pop %v2337
      %v2340 = vmul.f32 1.0, %v2339
      %v2341 = vrcp.pop %v2338
      %v2342 = vmul.f32 1.0, %v2341
      %v2343 = vmul.f32 %v2326, %v2179
      %v2344 = vmul.f32 %v2328, %v2180
      %v2345 = vmul.f32 %v2314, %v2329
      %v2346 = vmul.f32 %v2316, %v2330
      %v2347 = vadd.f32 %v2343, %v2345
      %v2348 = vadd.f32 %v2344, %v2346
      %v2349 = vtanh.pop %v2347
      %v2350 = vtanh.pop %v2348
      %v2351 = vmul.f32 %v2340, %v2349
      %v2352 = vmul.f32 %v2342, %v2350
      %v2353 = vpack.c.bf16 %v2352, %v2351
      %s2354 = scalar_lea.vmem [#allocation2], 32
      %2355 = vst [vmem:[%s2354] sm:$0xff] %v2353
      %s2356 = smul.u32 5, 4
      %s2357 = smul.addr %s2356, 8
      %s2358 = scalar_lea.vmem [#allocation3], %s2357
      %v2359 = vld [vmem:[%s2358] sm:$0xff]
      %v2360 = vld [vmem:[%s2358 + $0x8] sm:$0xff]
      %v2361 = vld [vmem:[%s2358 + $0x10] sm:$0xff]
      %v2362 = vld [vmem:[%s2358 + $0x18] sm:$0xff]
      %v2363 = vunpack.c.l.bf16 %v2359
      %v2364 = vunpack.c.l.bf16 %v2360
      %v2365 = vunpack.c.l.bf16 %v2361
      %v2366 = vunpack.c.l.bf16 %v2362
      %v2367 = vunpack.c.h.bf16 %v2359
      %v2368 = vunpack.c.h.bf16 %v2360
      %v2369 = vunpack.c.h.bf16 %v2361
      %v2370 = vunpack.c.h.bf16 %v2362
      %v2371 = vadd.f32 %v2363, %v1355
      %v2372 = vadd.f32 %v2364, %v1359
      %v2373 = vadd.f32 %v2365, %v1363
      %v2374 = vadd.f32 %v2366, %v1367
      %v2375 = vadd.f32 %v2367, %v1355
      %v2376 = vadd.f32 %v2368, %v1359
      %v2377 = vadd.f32 %v2369, %v1363
      %v2378 = vadd.f32 %v2370, %v1367
      %2379 = vmatprep.subr.bf16.mxu0 %v1477
      %2380 = vmatpush1.bf16.msra.mxu0 %v1476
      %2381 = vmatprep.subr.bf16.mxu0 %v1481
      %2382 = vmatpush1.bf16.msra.mxu0 %v1480
      %2383 = vmatprep.subr.bf16.mxu0 %v1485
      %2384 = vmatpush1.bf16.msra.mxu0 %v1484
      %2385 = vmatprep.subr.bf16.mxu0 %v1489
      %2386 = vmatpush1.bf16.msra.mxu0 %v1488
      %2387 = vmatprep.subr.bf16.mxu0 %v1493
      %2388 = vmatpush1.bf16.msra.mxu0 %v1492
      %2389 = vmatprep.subr.bf16.mxu0 %v1497
      %2390 = vmatpush1.bf16.msra.mxu0 %v1496
      %2391 = vmatprep.subr.bf16.mxu0 %v1501
      %2392 = vmatpush1.bf16.msra.mxu0 %v1500
      %2393 = vmatprep.subr.bf16.mxu0 %v1505
      %2394 = vmatpush1.bf16.msra.mxu0 %v1504
      %2395 = vmatprep.subr.bf16.mxu0 0
      %2396 = vmatpush1.bf16.msra.mxu0 0
      %2397 = vmatprep.subr.bf16.mxu0 0
      %2398 = vmatpush1.bf16.msra.mxu0 0
      %2399 = vmatprep.subr.bf16.mxu0 0
      %2400 = vmatpush1.bf16.msra.mxu0 0
      %2401 = vmatprep.subr.bf16.mxu0 0
      %2402 = vmatpush1.bf16.msra.mxu0 0
      %2403 = vmatprep.subr.bf16.mxu0 0
      %2404 = vmatpush1.bf16.msra.mxu0 0
      %2405 = vmatprep.subr.bf16.mxu0 0
      %2406 = vmatpush1.bf16.msra.mxu0 0
      %2407 = vmatprep.subr.bf16.mxu0 0
      %2408 = vmatpush1.bf16.msra.mxu0 0
      %2409 = vmatprep.subr.bf16.mxu0 0
      %2410 = vmatpush1.bf16.msra.mxu0 0
      %2411 = vmatprep.mubr.bf16.mxu0 0
      %2412 = vmatmul.mubr.bf16.gmra.mrb[0].mxu0 %v2353
      %v2413 = vpop.f32.mrb[0].mxu0
      %v2414 = vadd.f32 0.0, %v2413
      %v2415 = vpop.f32.mrb[0].mxu0
      %v2416 = vadd.f32 0.0, %v2415
      %v2417 = vpop.f32.mrb[0].mxu0
      %v2418 = vadd.f32 0.0, %v2417
      %v2419 = vpop.f32.mrb[0].mxu0
      %v2420 = vadd.f32 0.0, %v2419
      %2421 = vdwg.mxu0
      %2422 = vmatprep.subr.bf16.mxu0 %v1479
      %2423 = vmatpush1.bf16.msra.mxu0 %v1478
      %2424 = vmatprep.subr.bf16.mxu0 %v1483
      %2425 = vmatpush1.bf16.msra.mxu0 %v1482
      %2426 = vmatprep.subr.bf16.mxu0 %v1487
      %2427 = vmatpush1.bf16.msra.mxu0 %v1486
      %2428 = vmatprep.subr.bf16.mxu0 %v1491
      %2429 = vmatpush1.bf16.msra.mxu0 %v1490
      %2430 = vmatprep.subr.bf16.mxu0 %v1495
      %2431 = vmatpush1.bf16.msra.mxu0 %v1494
      %2432 = vmatprep.subr.bf16.mxu0 %v1499
      %2433 = vmatpush1.bf16.msra.mxu0 %v1498
      %2434 = vmatprep.subr.bf16.mxu0 %v1503
      %2435 = vmatpush1.bf16.msra.mxu0 %v1502
      %2436 = vmatprep.subr.bf16.mxu0 %v1507
      %2437 = vmatpush1.bf16.msra.mxu0 %v1506
      %2438 = vmatprep.subr.bf16.mxu0 0
      %2439 = vmatpush1.bf16.msra.mxu0 0
      %2440 = vmatprep.subr.bf16.mxu0 0
      %2441 = vmatpush1.bf16.msra.mxu0 0
      %2442 = vmatprep.subr.bf16.mxu0 0
      %2443 = vmatpush1.bf16.msra.mxu0 0
      %2444 = vmatprep.subr.bf16.mxu0 0
      %2445 = vmatpush1.bf16.msra.mxu0 0
      %2446 = vmatprep.subr.bf16.mxu0 0
      %2447 = vmatpush1.bf16.msra.mxu0 0
      %2448 = vmatprep.subr.bf16.mxu0 0
      %2449 = vmatpush1.bf16.msra.mxu0 0
      %2450 = vmatprep.subr.bf16.mxu0 0
      %2451 = vmatpush1.bf16.msra.mxu0 0
      %2452 = vmatprep.subr.bf16.mxu0 0
      %2453 = vmatpush1.bf16.msra.mxu0 0
      %2454 = vmatprep.mubr.bf16.mxu0 0
      %2455 = vmatmul.mubr.bf16.gmra.mrb[0].mxu0 %v2353
      %v2456 = vpop.f32.mrb[0].mxu0
      %v2457 = vadd.f32 0.0, %v2456
      %v2458 = vpop.f32.mrb[0].mxu0
      %v2459 = vadd.f32 0.0, %v2458
      %v2460 = vpop.f32.mrb[0].mxu0
      %v2461 = vadd.f32 0.0, %v2460
      %v2462 = vpop.f32.mrb[0].mxu0
      %v2463 = vadd.f32 0.0, %v2462
      %2464 = vdwg.mxu0
      %v2465 = vadd.f32 %v2371, %v2414
      %v2466 = vadd.f32 %v2372, %v2416
      %v2467 = vadd.f32 %v2373, %v2457
      %v2468 = vadd.f32 %v2374, %v2459
      %v2469 = vadd.f32 %v2375, %v2418
      %v2470 = vadd.f32 %v2376, %v2420
      %v2471 = vadd.f32 %v2377, %v2461
      %v2472 = vadd.f32 %v2378, %v2463
      %v2473 = vxor.u32 %v2465, 2147483648
      %v2474 = vxor.u32 %v2469, 2147483648
      %v2475 = vmul.f32 %v2473, 1.442695
      %v2476 = vpow.pop %v2475
      %v2477 = vmul.f32 %v2474, 1.442695
      %v2478 = vpow.pop %v2477
      %v2479 = vadd.f32 %v2476, 1.0
      %v2480 = vadd.f32 %v2478, 1.0
      %v2481 = vrcp.pop %v2479
      %v2482 = vmul.f32 1.0, %v2481
      %v2483 = vrcp.pop %v2480
      %v2484 = vmul.f32 1.0, %v2483
      %v2485 = vxor.u32 %v2466, 2147483648
      %v2486 = vxor.u32 %v2470, 2147483648
      %v2487 = vmul.f32 %v2485, 1.442695
      %v2488 = vpow.pop %v2487
      %v2489 = vmul.f32 %v2486, 1.442695
      %v2490 = vpow.pop %v2489
      %v2491 = vadd.f32 %v2488, 1.0
      %v2492 = vadd.f32 %v2490, 1.0
      %v2493 = vrcp.pop %v2491
      %v2494 = vmul.f32 1.0, %v2493
      %v2495 = vrcp.pop %v2492
      %v2496 = vmul.f32 1.0, %v2495
      %v2497 = vtanh.pop %v2467
      %v2498 = vtanh.pop %v2471
      %v2499 = vxor.u32 %v2468, 2147483648
      %v2500 = vxor.u32 %v2472, 2147483648
      %v2501 = vmul.f32 %v2499, 1.442695
      %v2502 = vpow.pop %v2501
      %v2503 = vmul.f32 %v2500, 1.442695
      %v2504 = vpow.pop %v2503
      %v2505 = vadd.f32 %v2502, 1.0
      %v2506 = vadd.f32 %v2504, 1.0
      %v2507 = vrcp.pop %v2505
      %v2508 = vmul.f32 1.0, %v2507
      %v2509 = vrcp.pop %v2506
      %v2510 = vmul.f32 1.0, %v2509
      %v2511 = vmul.f32 %v2494, %v2347
      %v2512 = vmul.f32 %v2496, %v2348
      %v2513 = vmul.f32 %v2482, %v2497
      %v2514 = vmul.f32 %v2484, %v2498
      %v2515 = vadd.f32 %v2511, %v2513
      %v2516 = vadd.f32 %v2512, %v2514
      %v2517 = vtanh.pop %v2515
      %v2518 = vtanh.pop %v2516
      %v2519 = vmul.f32 %v2508, %v2517
      %v2520 = vmul.f32 %v2510, %v2518
      %v2521 = vpack.c.bf16 %v2520, %v2519
      %s2522 = scalar_lea.vmem [#allocation2], 40
      %2523 = vst [vmem:[%s2522] sm:$0xff] %v2521
      %s2524 = smul.u32 6, 4
      %s2525 = smul.addr %s2524, 8
      %s2526 = scalar_lea.vmem [#allocation3], %s2525
      %v2527 = vld [vmem:[%s2526] sm:$0xff]
      %v2528 = vld [vmem:[%s2526 + $0x8] sm:$0xff]
      %v2529 = vld [vmem:[%s2526 + $0x10] sm:$0xff]
      %v2530 = vld [vmem:[%s2526 + $0x18] sm:$0xff]
      %v2531 = vunpack.c.l.bf16 %v2527
      %v2532 = vunpack.c.l.bf16 %v2528
      %v2533 = vunpack.c.l.bf16 %v2529
      %v2534 = vunpack.c.l.bf16 %v2530
      %v2535 = vunpack.c.h.bf16 %v2527
      %v2536 = vunpack.c.h.bf16 %v2528
      %v2537 = vunpack.c.h.bf16 %v2529
      %v2538 = vunpack.c.h.bf16 %v2530
      %v2539 = vadd.f32 %v2531, %v1355
      %v2540 = vadd.f32 %v2532, %v1359
      %v2541 = vadd.f32 %v2533, %v1363
      %v2542 = vadd.f32 %v2534, %v1367
      %v2543 = vadd.f32 %v2535, %v1355
      %v2544 = vadd.f32 %v2536, %v1359
      %v2545 = vadd.f32 %v2537, %v1363
      %v2546 = vadd.f32 %v2538, %v1367
      %2547 = vmatprep.subr.bf16.mxu0 %v1477
      %2548 = vmatpush1.bf16.msra.mxu0 %v1476
      %2549 = vmatprep.subr.bf16.mxu0 %v1481
      %2550 = vmatpush1.bf16.msra.mxu0 %v1480
      %2551 = vmatprep.subr.bf16.mxu0 %v1485
      %2552 = vmatpush1.bf16.msra.mxu0 %v1484
      %2553 = vmatprep.subr.bf16.mxu0 %v1489
      %2554 = vmatpush1.bf16.msra.mxu0 %v1488
      %2555 = vmatprep.subr.bf16.mxu0 %v1493
      %2556 = vmatpush1.bf16.msra.mxu0 %v1492
      %2557 = vmatprep.subr.bf16.mxu0 %v1497
      %2558 = vmatpush1.bf16.msra.mxu0 %v1496
      %2559 = vmatprep.subr.bf16.mxu0 %v1501
      %2560 = vmatpush1.bf16.msra.mxu0 %v1500
      %2561 = vmatprep.subr.bf16.mxu0 %v1505
      %2562 = vmatpush1.bf16.msra.mxu0 %v1504
      %2563 = vmatprep.subr.bf16.mxu0 0
      %2564 = vmatpush1.bf16.msra.mxu0 0
      %2565 = vmatprep.subr.bf16.mxu0 0
      %2566 = vmatpush1.bf16.msra.mxu0 0
      %2567 = vmatprep.subr.bf16.mxu0 0
      %2568 = vmatpush1.bf16.msra.mxu0 0
      %2569 = vmatprep.subr.bf16.mxu0 0
      %2570 = vmatpush1.bf16.msra.mxu0 0
      %2571 = vmatprep.subr.bf16.mxu0 0
      %2572 = vmatpush1.bf16.msra.mxu0 0
      %2573 = vmatprep.subr.bf16.mxu0 0
      %2574 = vmatpush1.bf16.msra.mxu0 0
      %2575 = vmatprep.subr.bf16.mxu0 0
      %2576 = vmatpush1.bf16.msra.mxu0 0
      %2577 = vmatprep.subr.bf16.mxu0 0
      %2578 = vmatpush1.bf16.msra.mxu0 0
      %2579 = vmatprep.mubr.bf16.mxu0 0
      %2580 = vmatmul.mubr.bf16.gmra.mrb[0].mxu0 %v2521
      %v2581 = vpop.f32.mrb[0].mxu0
      %v2582 = vadd.f32 0.0, %v2581
      %v2583 = vpop.f32.mrb[0].mxu0
      %v2584 = vadd.f32 0.0, %v2583
      %v2585 = vpop.f32.mrb[0].mxu0
      %v2586 = vadd.f32 0.0, %v2585
      %v2587 = vpop.f32.mrb[0].mxu0
      %v2588 = vadd.f32 0.0, %v2587
      %2589 = vdwg.mxu0
      %2590 = vmatprep.subr.bf16.mxu0 %v1479
      %2591 = vmatpush1.bf16.msra.mxu0 %v1478
      %2592 = vmatprep.subr.bf16.mxu0 %v1483
      %2593 = vmatpush1.bf16.msra.mxu0 %v1482
      %2594 = vmatprep.subr.bf16.mxu0 %v1487
      %2595 = vmatpush1.bf16.msra.mxu0 %v1486
      %2596 = vmatprep.subr.bf16.mxu0 %v1491
      %2597 = vmatpush1.bf16.msra.mxu0 %v1490
      %2598 = vmatprep.subr.bf16.mxu0 %v1495
      %2599 = vmatpush1.bf16.msra.mxu0 %v1494
      %2600 = vmatprep.subr.bf16.mxu0 %v1499
      %2601 = vmatpush1.bf16.msra.mxu0 %v1498
      %2602 = vmatprep.subr.bf16.mxu0 %v1503
      %2603 = vmatpush1.bf16.msra.mxu0 %v1502
      %2604 = vmatprep.subr.bf16.mxu0 %v1507
      %2605 = vmatpush1.bf16.msra.mxu0 %v1506
      %2606 = vmatprep.subr.bf16.mxu0 0
      %2607 = vmatpush1.bf16.msra.mxu0 0
      %2608 = vmatprep.subr.bf16.mxu0 0
      %2609 = vmatpush1.bf16.msra.mxu0 0
      %2610 = vmatprep.subr.bf16.mxu0 0
      %2611 = vmatpush1.bf16.msra.mxu0 0
      %2612 = vmatprep.subr.bf16.mxu0 0
      %2613 = vmatpush1.bf16.msra.mxu0 0
      %2614 = vmatprep.subr.bf16.mxu0 0
      %2615 = vmatpush1.bf16.msra.mxu0 0
      %2616 = vmatprep.subr.bf16.mxu0 0
      %2617 = vmatpush1.bf16.msra.mxu0 0
      %2618 = vmatprep.subr.bf16.mxu0 0
      %2619 = vmatpush1.bf16.msra.mxu0 0
      %2620 = vmatprep.subr.bf16.mxu0 0
      %2621 = vmatpush1.bf16.msra.mxu0 0
      %2622 = vmatprep.mubr.bf16.mxu0 0
      %2623 = vmatmul.mubr.bf16.gmra.mrb[0].mxu0 %v2521
      %v2624 = vpop.f32.mrb[0].mxu0
      %v2625 = vadd.f32 0.0, %v2624
      %v2626 = vpop.f32.mrb[0].mxu0
      %v2627 = vadd.f32 0.0, %v2626
      %v2628 = vpop.f32.mrb[0].mxu0
      %v2629 = vadd.f32 0.0, %v2628
      %v2630 = vpop.f32.mrb[0].mxu0
      %v2631 = vadd.f32 0.0, %v2630
      %2632 = vdwg.mxu0
      %v2633 = vadd.f32 %v2539, %v2582
      %v2634 = vadd.f32 %v2540, %v2584
      %v2635 = vadd.f32 %v2541, %v2625
      %v2636 = vadd.f32 %v2542, %v2627
      %v2637 = vadd.f32 %v2543, %v2586
      %v2638 = vadd.f32 %v2544, %v2588
      %v2639 = vadd.f32 %v2545, %v2629
      %v2640 = vadd.f32 %v2546, %v2631
      %v2641 = vxor.u32 %v2633, 2147483648
      %v2642 = vxor.u32 %v2637, 2147483648
      %v2643 = vmul.f32 %v2641, 1.442695
      %v2644 = vpow.pop %v2643
      %v2645 = vmul.f32 %v2642, 1.442695
      %v2646 = vpow.pop %v2645
      %v2647 = vadd.f32 %v2644, 1.0
      %v2648 = vadd.f32 %v2646, 1.0
      %v2649 = vrcp.pop %v2647
      %v2650 = vmul.f32 1.0, %v2649
      %v2651 = vrcp.pop %v2648
      %v2652 = vmul.f32 1.0, %v2651
      %v2653 = vxor.u32 %v2634, 2147483648
      %v2654 = vxor.u32 %v2638, 2147483648
      %v2655 = vmul.f32 %v2653, 1.442695
      %v2656 = vpow.pop %v2655
      %v2657 = vmul.f32 %v2654, 1.442695
      %v2658 = vpow.pop %v2657
      %v2659 = vadd.f32 %v2656, 1.0
      %v2660 = vadd.f32 %v2658, 1.0
      %v2661 = vrcp.pop %v2659
      %v2662 = vmul.f32 1.0, %v2661
      %v2663 = vrcp.pop %v2660
      %v2664 = vmul.f32 1.0, %v2663
      %v2665 = vtanh.pop %v2635
      %v2666 = vtanh.pop %v2639
      %v2667 = vxor.u32 %v2636, 2147483648
      %v2668 = vxor.u32 %v2640, 2147483648
      %v2669 = vmul.f32 %v2667, 1.442695
      %v2670 = vpow.pop %v2669
      %v2671 = vmul.f32 %v2668, 1.442695
      %v2672 = vpow.pop %v2671
      %v2673 = vadd.f32 %v2670, 1.0
      %v2674 = vadd.f32 %v2672, 1.0
      %v2675 = vrcp.pop %v2673
      %v2676 = vmul.f32 1.0, %v2675
      %v2677 = vrcp.pop %v2674
      %v2678 = vmul.f32 1.0, %v2677
      %v2679 = vmul.f32 %v2662, %v2515
      %v2680 = vmul.f32 %v2664, %v2516
      %v2681 = vmul.f32 %v2650, %v2665
      %v2682 = vmul.f32 %v2652, %v2666
      %v2683 = vadd.f32 %v2679, %v2681
      %v2684 = vadd.f32 %v2680, %v2682
      %v2685 = vtanh.pop %v2683
      %v2686 = vtanh.pop %v2684
      %v2687 = vmul.f32 %v2676, %v2685
      %v2688 = vmul.f32 %v2678, %v2686
      %v2689 = vpack.c.bf16 %v2688, %v2687
      %s2690 = scalar_lea.vmem [#allocation2], 48
      %2691 = vst [vmem:[%s2690] sm:$0xff] %v2689
      %s2692 = smul.u32 7, 4
      %s2693 = smul.addr %s2692, 8
      %s2694 = scalar_lea.vmem [#allocation3], %s2693
      %v2695 = vld [vmem:[%s2694] sm:$0xff]
      %v2696 = vld [vmem:[%s2694 + $0x8] sm:$0xff]
      %v2697 = vld [vmem:[%s2694 + $0x10] sm:$0xff]
      %v2698 = vld [vmem:[%s2694 + $0x18] sm:$0xff]
      %v2699 = vunpack.c.l.bf16 %v2695
      %v2700 = vunpack.c.l.bf16 %v2696
      %v2701 = vunpack.c.l.bf16 %v2697
      %v2702 = vunpack.c.l.bf16 %v2698
      %v2703 = vunpack.c.h.bf16 %v2695
      %v2704 = vunpack.c.h.bf16 %v2696
      %v2705 = vunpack.c.h.bf16 %v2697
      %v2706 = vunpack.c.h.bf16 %v2698
      %v2707 = vadd.f32 %v2699, %v1355
      %v2708 = vadd.f32 %v2700, %v1359
      %v2709 = vadd.f32 %v2701, %v1363
      %v2710 = vadd.f32 %v2702, %v1367
      %v2711 = vadd.f32 %v2703, %v1355
      %v2712 = vadd.f32 %v2704, %v1359
      %v2713 = vadd.f32 %v2705, %v1363
      %v2714 = vadd.f32 %v2706, %v1367
      %2715 = vmatprep.subr.bf16.mxu0 %v1477
      %2716 = vmatpush1.bf16.msra.mxu0 %v1476
      %2717 = vmatprep.subr.bf16.mxu0 %v1481
      %2718 = vmatpush1.bf16.msra.mxu0 %v1480
      %2719 = vmatprep.subr.bf16.mxu0 %v1485
      %2720 = vmatpush1.bf16.msra.mxu0 %v1484
      %2721 = vmatprep.subr.bf16.mxu0 %v1489
      %2722 = vmatpush1.bf16.msra.mxu0 %v1488
      %2723 = vmatprep.subr.bf16.mxu0 %v1493
      %2724 = vmatpush1.bf16.msra.mxu0 %v1492
      %2725 = vmatprep.subr.bf16.mxu0 %v1497
      %2726 = vmatpush1.bf16.msra.mxu0 %v1496
      %2727 = vmatprep.subr.bf16.mxu0 %v1501
      %2728 = vmatpush1.bf16.msra.mxu0 %v1500
      %2729 = vmatprep.subr.bf16.mxu0 %v1505
      %2730 = vmatpush1.bf16.msra.mxu0 %v1504
      %2731 = vmatprep.subr.bf16.mxu0 0
      %2732 = vmatpush1.bf16.msra.mxu0 0
      %2733 = vmatprep.subr.bf16.mxu0 0
      %2734 = vmatpush1.bf16.msra.mxu0 0
      %2735 = vmatprep.subr.bf16.mxu0 0
      %2736 = vmatpush1.bf16.msra.mxu0 0
      %2737 = vmatprep.subr.bf16.mxu0 0
      %2738 = vmatpush1.bf16.msra.mxu0 0
      %2739 = vmatprep.subr.bf16.mxu0 0
      %2740 = vmatpush1.bf16.msra.mxu0 0
      %2741 = vmatprep.subr.bf16.mxu0 0
      %2742 = vmatpush1.bf16.msra.mxu0 0
      %2743 = vmatprep.subr.bf16.mxu0 0
      %2744 = vmatpush1.bf16.msra.mxu0 0
      %2745 = vmatprep.subr.bf16.mxu0 0
      %2746 = vmatpush1.bf16.msra.mxu0 0
      %2747 = vmatprep.mubr.bf16.mxu0 0
      %2748 = vmatmul.mubr.bf16.gmra.mrb[0].mxu0 %v2689
      %v2749 = vpop.f32.mrb[0].mxu0
      %v2750 = vadd.f32 0.0, %v2749
      %v2751 = vpop.f32.mrb[0].mxu0
      %v2752 = vadd.f32 0.0, %v2751
      %v2753 = vpop.f32.mrb[0].mxu0
      %v2754 = vadd.f32 0.0, %v2753
      %v2755 = vpop.f32.mrb[0].mxu0
      %v2756 = vadd.f32 0.0, %v2755
      %2757 = vdwg.mxu0
      %2758 = vmatprep.subr.bf16.mxu0 %v1479
      %2759 = vmatpush1.bf16.msra.mxu0 %v1478
      %2760 = vmatprep.subr.bf16.mxu0 %v1483
      %2761 = vmatpush1.bf16.msra.mxu0 %v1482
      %2762 = vmatprep.subr.bf16.mxu0 %v1487
      %2763 = vmatpush1.bf16.msra.mxu0 %v1486
      %2764 = vmatprep.subr.bf16.mxu0 %v1491
      %2765 = vmatpush1.bf16.msra.mxu0 %v1490
      %2766 = vmatprep.subr.bf16.mxu0 %v1495
      %2767 = vmatpush1.bf16.msra.mxu0 %v1494
      %2768 = vmatprep.subr.bf16.mxu0 %v1499
      %2769 = vmatpush1.bf16.msra.mxu0 %v1498
      %2770 = vmatprep.subr.bf16.mxu0 %v1503
      %2771 = vmatpush1.bf16.msra.mxu0 %v1502
      %2772 = vmatprep.subr.bf16.mxu0 %v1507
      %2773 = vmatpush1.bf16.msra.mxu0 %v1506
      %2774 = vmatprep.subr.bf16.mxu0 0
      %2775 = vmatpush1.bf16.msra.mxu0 0
      %2776 = vmatprep.subr.bf16.mxu0 0
      %2777 = vmatpush1.bf16.msra.mxu0 0
      %2778 = vmatprep.subr.bf16.mxu0 0
      %2779 = vmatpush1.bf16.msra.mxu0 0
      %2780 = vmatprep.subr.bf16.mxu0 0
      %2781 = vmatpush1.bf16.msra.mxu0 0
      %2782 = vmatprep.subr.bf16.mxu0 0
      %2783 = vmatpush1.bf16.msra.mxu0 0
      %2784 = vmatprep.subr.bf16.mxu0 0
      %2785 = vmatpush1.bf16.msra.mxu0 0
      %2786 = vmatprep.subr.bf16.mxu0 0
      %2787 = vmatpush1.bf16.msra.mxu0 0
      %2788 = vmatprep.subr.bf16.mxu0 0
      %2789 = vmatpush1.bf16.msra.mxu0 0
      %2790 = vmatprep.mubr.bf16.mxu0 0
      %2791 = vmatmul.mubr.bf16.gmra.mrb[0].mxu0 %v2689
      %v2792 = vpop.f32.mrb[0].mxu0
      %v2793 = vadd.f32 0.0, %v2792
      %v2794 = vpop.f32.mrb[0].mxu0
      %v2795 = vadd.f32 0.0, %v2794
      %v2796 = vpop.f32.mrb[0].mxu0
      %v2797 = vadd.f32 0.0, %v2796
      %v2798 = vpop.f32.mrb[0].mxu0
      %v2799 = vadd.f32 0.0, %v2798
      %2800 = vdwg.mxu0
      %v2801 = vadd.f32 %v2707, %v2750
      %v2802 = vadd.f32 %v2708, %v2752
      %v2803 = vadd.f32 %v2709, %v2793
      %v2804 = vadd.f32 %v2710, %v2795
      %v2805 = vadd.f32 %v2711, %v2754
      %v2806 = vadd.f32 %v2712, %v2756
      %v2807 = vadd.f32 %v2713, %v2797
      %v2808 = vadd.f32 %v2714, %v2799
      %v2809 = vxor.u32 %v2801, 2147483648
      %v2810 = vxor.u32 %v2805, 2147483648
      %v2811 = vmul.f32 %v2809, 1.442695
      %v2812 = vpow.pop %v2811
      %v2813 = vmul.f32 %v2810, 1.442695
      %v2814 = vpow.pop %v2813
      %v2815 = vadd.f32 %v2812, 1.0
      %v2816 = vadd.f32 %v2814, 1.0
      %v2817 = vrcp.pop %v2815
      %v2818 = vmul.f32 1.0, %v2817
      %v2819 = vrcp.pop %v2816
      %v2820 = vmul.f32 1.0, %v2819
      %v2821 = vxor.u32 %v2802, 2147483648
      %v2822 = vxor.u32 %v2806, 2147483648
      %v2823 = vmul.f32 %v2821, 1.442695
      %v2824 = vpow.pop %v2823
      %v2825 = vmul.f32 %v2822, 1.442695
      %v2826 = vpow.pop %v2825
      %v2827 = vadd.f32 %v2824, 1.0
      %v2828 = vadd.f32 %v2826, 1.0
      %v2829 = vrcp.pop %v2827
      %v2830 = vmul.f32 1.0, %v2829
      %v2831 = vrcp.pop %v2828
      %v2832 = vmul.f32 1.0, %v2831
      %v2833 = vtanh.pop %v2803
      %v2834 = vtanh.pop %v2807
      %v2835 = vxor.u32 %v2804, 2147483648
      %v2836 = vxor.u32 %v2808, 2147483648
      %v2837 = vmul.f32 %v2835, 1.442695
      %v2838 = vpow.pop %v2837
      %v2839 = vmul.f32 %v2836, 1.442695
      %v2840 = vpow.pop %v2839
      %v2841 = vadd.f32 %v2838, 1.0
      %v2842 = vadd.f32 %v2840, 1.0
      %v2843 = vrcp.pop %v2841
      %v2844 = vmul.f32 1.0, %v2843
      %v2845 = vrcp.pop %v2842
      %v2846 = vmul.f32 1.0, %v2845
      %v2847 = vmul.f32 %v2830, %v2683
      %v2848 = vmul.f32 %v2832, %v2684
      %v2849 = vmul.f32 %v2818, %v2833
      %v2850 = vmul.f32 %v2820, %v2834
      %v2851 = vadd.f32 %v2847, %v2849
      %v2852 = vadd.f32 %v2848, %v2850
      %v2853 = vtanh.pop %v2851
      %v2854 = vtanh.pop %v2852
      %v2855 = vmul.f32 %v2844, %v2853
      %v2856 = vmul.f32 %v2846, %v2854
      %v2857 = vpack.c.bf16 %v2856, %v2855
      %s2858 = scalar_lea.vmem [#allocation2], 56
      %2859 = vst [vmem:[%s2858] sm:$0xff] %v2857
      %v2860 = vld [vmem:[%s4] sm:$0xf]
      %v2861 = vld [vmem:[%s4 + $0x4] sm:$0xf]
      %v2862 = vld [vmem:[%s4 + $0x8] sm:$0xf]
      %v2863 = vld [vmem:[%s4 + $0xc] sm:$0xf]
      %v2864 = vld [vmem:[%s4 + $0x10] sm:$0xf]
      %v2865 = vld [vmem:[%s4 + $0x14] sm:$0xf]
      %v2866 = vld [vmem:[%s4 + $0x18] sm:$0xf]
      %v2867 = vld [vmem:[%s4 + $0x1c] sm:$0xf]
      %v2868 = vld [vmem:[%s4 + $0x20] sm:$0xf]
      %v2869 = vld [vmem:[%s4 + $0x24] sm:$0xf]
      %v2870 = vld [vmem:[%s4 + $0x28] sm:$0xf]
      %v2871 = vld [vmem:[%s4 + $0x2c] sm:$0xf]
      %v2872 = vld [vmem:[%s4 + $0x30] sm:$0xf]
      %v2873 = vld [vmem:[%s4 + $0x34] sm:$0xf]
      %v2874 = vld [vmem:[%s4 + $0x38] sm:$0xf]
      %v2875 = vld [vmem:[%s4 + $0x3c] sm:$0xf]
      %v2876 = vld [vmem:[%s5] sm:$0x1]
      %v2878 = vlaneseq
      %v2879 = vshrl.u32 %v2878, 7
      %v2880 = vsub.s32 0, %v2879
      %v2881 = vrot.slane %v2876, %v2880
      %v2899 = vunpack.c.l.b16 %v2860
      %v2900 = vunpack.c.l.b16 %v2861
      %v2901 = vunpack.c.l.b16 %v2862
      %v2902 = vunpack.c.l.b16 %v2863
      %v2903 = vunpack.c.l.b16 %v2864
      %v2904 = vunpack.c.l.b16 %v2865
      %v2905 = vunpack.c.l.b16 %v2866
      %v2906 = vunpack.c.l.b16 %v2867
      %v2907 = vunpack.c.l.b16 %v2868
      %v2908 = vunpack.c.l.b16 %v2869
      %v2909 = vunpack.c.l.b16 %v2870
      %v2910 = vunpack.c.l.b16 %v2871
      %v2911 = vunpack.c.l.b16 %v2872
      %v2912 = vunpack.c.l.b16 %v2873
      %v2913 = vunpack.c.l.b16 %v2874
      %v2914 = vunpack.c.l.b16 %v2875
      %v2915 = vpack.c.b16 %v2900, %v2899
      %v2916 = vpack.c.b16 %v2902, %v2901
      %v2917 = vpack.c.b16 %v2904, %v2903
      %v2918 = vpack.c.b16 %v2906, %v2905
      %v2919 = vpack.c.b16 %v2908, %v2907
      %v2920 = vpack.c.b16 %v2910, %v2909
      %v2921 = vpack.c.b16 %v2912, %v2911
      %v2922 = vpack.c.b16 %v2914, %v2913
      %2931 = vmatprep.subr.bf16.mxu0 0
      %2932 = vmatpush1.bf16.msra.mxu0 %v2915
      %2933 = vmatprep.subr.bf16.mxu0 0
      %2934 = vmatpush1.bf16.msra.mxu0 %v2916
      %2935 = vmatprep.subr.bf16.mxu0 0
      %2936 = vmatpush1.bf16.msra.mxu0 %v2917
      %2937 = vmatprep.subr.bf16.mxu0 0
      %2938 = vmatpush1.bf16.msra.mxu0 %v2918
      %2939 = vmatprep.subr.bf16.mxu0 0
      %2940 = vmatpush1.bf16.msra.mxu0 %v2919
      %2941 = vmatprep.subr.bf16.mxu0 0
      %2942 = vmatpush1.bf16.msra.mxu0 %v2920
      %2943 = vmatprep.subr.bf16.mxu0 0
      %2944 = vmatpush1.bf16.msra.mxu0 %v2921
      %2945 = vmatprep.subr.bf16.mxu0 0
      %2946 = vmatpush1.bf16.msra.mxu0 %v2922
      %2947 = vmatprep.subr.bf16.mxu0 0
      %2948 = vmatpush1.bf16.msra.mxu0 0
      %2949 = vmatprep.subr.bf16.mxu0 0
      %2950 = vmatpush1.bf16.msra.mxu0 0
      %2951 = vmatprep.subr.bf16.mxu0 0
      %2952 = vmatpush1.bf16.msra.mxu0 0
      %2953 = vmatprep.subr.bf16.mxu0 0
      %2954 = vmatpush1.bf16.msra.mxu0 0
      %2955 = vmatprep.subr.bf16.mxu0 0
      %2956 = vmatpush1.bf16.msra.mxu0 0
      %2957 = vmatprep.subr.bf16.mxu0 0
      %2958 = vmatpush1.bf16.msra.mxu0 0
      %2959 = vmatprep.subr.bf16.mxu0 0
      %2960 = vmatpush1.bf16.msra.mxu0 0
      %2961 = vmatprep.subr.bf16.mxu0 0
      %2962 = vmatpush1.bf16.msra.mxu0 0
      %2963 = vmatprep.mubr.bf16.mxu0 0
      %2964 = vmatmul.mubr.bf16.gmra.mrb[0].mxu0 %v2857
      %v2965 = vpop.f32.mrb[0].mxu0
      %v2966 = vadd.f32 %v2881, %v2965
      %v2967 = vpop.f32.mrb[0].mxu0
      %v2968 = vpop.f32.mrb[0].mxu0
      %v2969 = vadd.f32 %v2881, %v2968
      %v2970 = vpop.f32.mrb[0].mxu0
      %2971 = vdwg.mxu0
      %2972 = vst [vmem:[%s288] sm:$0xff] %v2966
      %2973 = vst [vmem:[%s288 + $0x8] sm:$0xff] %v2969
      %s2974 = smul.u32 2, %s17
      %p2975 = scmp.lt.s32.totalorder %s2974, 3
      %s2976 = scalar_select %p2975, %s2974, 3
      %s2977 = smul.addr %s2976, 8
      %s2978 = scalar_lea.vmem %s6, %s2977
      // Predicated region
      $region53: #{lstm_model_forward.1} parent=43 // pred_check
        %p2979 = pneg %p176
      $region54: #{lstm_model_forward.1} parent=43 // pred_check_branch
        %2981 = sbr.rel (%p2979) target = $region56
      $region55: #{lstm_model_forward.1} parent=43 // pred_region
        %s2982 = smul.u32 2, %s17
      $region56: #{lstm_model_forward.1} parent=43 // pred_fallthru
        _
    $region44: #{lstm_model_forward.1} parent=5 // pred_fallthru
      _
    %p2983 = scmp.le.s32.totalorder 2, %s12
    // Predicated region
    $region57: #{lstm_model_forward.1} parent=5 // pred_check
      %p2984 = pneg %p2983
    $region58: #{lstm_model_forward.1} parent=5 // pred_check_branch
      %2986 = sbr.rel (%p2984) target = $region60
    $region59: #{lstm_model_forward.1} parent=5 // pred_region
      %s2987 = ssub.s32 %s12, 2
      // Predicated region
      $region61: #{lstm_model_forward.1} parent=59 // pred_check
        %p2988 = pneg %p182
      $region62: #{lstm_model_forward.1} parent=59 // pred_check_branch
        %2990 = sbr.rel (%p2988) target = $region64
      $region63: #{lstm_model_forward.1} parent=59 // pred_region
        %s2991 = smul.u32 2, %s18
        %p2992 = scmp.lt.s32.totalorder %s2991, 3
        %s2993 = scalar_select %p2992, %s2991, 3
        %s2994 = smul.addr %s2993, 8
        %s2995 = scalar_lea.vmem %s6, %s2994
      $region64: #{lstm_model_forward.1} parent=59 // pred_fallthru
        _
    $region60: #{lstm_model_forward.1} parent=5 // pred_fallthru
      _
  $region6: #{lstm_model_forward.1} parent=0 // loop_footer
    %s16 = sadd.s32 1, %s12
  $region7: #{lstm_model_forward.1} parent=0 // loop_footer_branch
    %11 = sbr.rel target = $region3
  $region8: #{lstm_model_forward.1} parent=0 // loop_exit
    _

</llo_original>
